<compile_context>
chip_gen: v5e
topology: v5e:2x2
jax: 0.10.0
libtpu: 0.0.40
codegen_flags: <defaults>
</compile_context>

<pallas_src>
import jax
import jax.numpy as jnp
from jax.experimental import pallas as pl
from jax.experimental.pallas import tpu as pltpu

IN_FEATURES = 2 * 137 * 3      # 822
OUT_FEATURES = 10 * 137 * 3    # 4110
IN_PAD = 896                   # 7 * 128 (zero-padded K of first matmul)

_SELU_ALPHA = 1.6732632423543772
_SELU_SCALE = 1.0507009873554805


def _round_up(n, m):
    return ((n + m - 1) // m) * m


def _cdiv(a, b):
    return (a + b - 1) // b


def _selu(x):
    # selu in f32; exp only sees min(x, 0) so the discarded branch never hits +inf.
    neg = _SELU_ALPHA * (jnp.exp(jnp.minimum(x, 0.0)) - 1.0)
    return _SELU_SCALE * jnp.where(x > 0, x, neg)


def _mlp_kernel(x_ref, w1_ref, b1_ref, w2_ref, b2_ref, w3_ref, b3_ref, o_ref):
    # One batch tile per grid step; weights/biases are VMEM-resident across steps.
    h = jnp.dot(x_ref[...], w1_ref[...],
                preferred_element_type=jnp.float32) + b1_ref[...]       # (Tb, Hp) f32
    h = _selu(h)
    h = jnp.dot(h.astype(jnp.bfloat16), w2_ref[...],
                preferred_element_type=jnp.float32) + b2_ref[...]       # (Tb, Hp) f32
    h = _selu(h)
    y = jnp.dot(h.astype(jnp.bfloat16), w3_ref[...],
                preferred_element_type=jnp.float32) + b3_ref[...]       # (Tb, 4110) f32
    o_ref[...] = y.astype(o_ref.dtype)


def _tpu_tuning():
    """Return (tile_b_max, vmem_limit_bytes, min_grid_tiles) for this TPU generation."""
    tile_b_max, vmem_limit, min_tiles = 256, 48 * 1024 * 1024, 1   # conservative default
    try:
        vmem_cap = pltpu.get_tpu_info().vmem_capacity_bytes
        if vmem_cap >= 96 * 1024 * 1024:
            # v5e / v6e: 128 MiB VMEM, single TensorCore -> big tiles, fewer grid steps.
            tile_b_max, vmem_limit, min_tiles = 512, 96 * 1024 * 1024, 1
        else:
            # v7x: 64 MiB VMEM per TC, 2 TCs -> smaller tiles, >=2 grid steps for megacore.
            tile_b_max, vmem_limit, min_tiles = 256, 48 * 1024 * 1024, 2
    except Exception:
        pass
    return tile_b_max, vmem_limit, min_tiles


def pose_interpolator_cnn_forward(x, params, *, out_dtype=jnp.float32):
    """x: (B, 2, 137, 3) float32 -> (B, 10, 137, 3) out_dtype (f32 matches PyTorch)."""
    w1, b1, w2, b2, w3, b3 = params          # already lane-padded (see init_params)
    hidden_pad = w1.shape[1]                 # multiple of 128
    batch = x.shape[0]

    tile_b_max, vmem_limit, min_tiles = _tpu_tuning()

    # Balanced batch tiling: minimize padding, keep >=2 tiles on v7x (megacore)
    # when the batch is large enough to split into >=8-row tiles.
    n_tiles = max(_cdiv(batch, tile_b_max), min_tiles if batch >= 16 else 1)
    tile_b = _round_up(_cdiv(batch, n_tiles), 8)
    padded_b = n_tiles * tile_b

    # Flatten, zero-pad (features -> 896 lanes, batch -> grid) and cast to bf16
    # in a single wrapper pass: halves x HBM traffic and its VMEM tile.
    x2d = x.reshape(batch, IN_FEATURES)
    x2d = jnp.pad(x2d, ((0, padded_b - batch), (0, IN_PAD - IN_FEATURES)))
    x2d = x2d.astype(jnp.bfloat16)

    out_itemsize = jnp.dtype(out_dtype).itemsize
    bytes_accessed = (
        x2d.size * 2
        + (w1.size + w2.size + w3.size) * 2
        + (b1.size + b2.size + b3.size) * 4
        + padded_b * OUT_FEATURES * out_itemsize
    )
    cost = pl.CostEstimate(
        flops=2 * padded_b * (IN_PAD * hidden_pad
                              + hidden_pad * hidden_pad
                              + hidden_pad * OUT_FEATURES),
        transcendentals=2 * padded_b * hidden_pad,
        bytes_accessed=bytes_accessed,
    )

    def run(single_buffer_weights):
        def resident(shape):
            # Constant index_map => DMA'd to VMEM once, resident across grid steps.
            if single_buffer_weights:
                return pl.BlockSpec(shape, lambda i: (0, 0),
                                    pipeline_mode=pl.Buffered(1))
            return pl.BlockSpec(shape, lambda i: (0, 0))

        return pl.pallas_call(
            _mlp_kernel,
            out_shape=jax.ShapeDtypeStruct((padded_b, OUT_FEATURES), out_dtype),
            grid=(n_tiles,),
            in_specs=[
                pl.BlockSpec((tile_b, IN_PAD), lambda i: (i, 0)),   # x tile (bf16)
                resident((IN_PAD, hidden_pad)),                     # w1 (bf16)
                resident((1, hidden_pad)),                          # b1 (f32)
                resident((hidden_pad, hidden_pad)),                 # w2 (bf16)
                resident((1, hidden_pad)),                          # b2 (f32)
                resident((hidden_pad, OUT_FEATURES)),               # w3 (bf16)
                resident((1, OUT_FEATURES)),                        # b3 (f32)
            ],
            # Output written at true 4110 width: only the last 14 lanes of each
            # row are a masked store; no post-kernel slice pass over the output.
            out_specs=pl.BlockSpec((tile_b, OUT_FEATURES), lambda i: (i, 0)),
            compiler_params=pltpu.CompilerParams(
                dimension_semantics=("parallel",),
                vmem_limit_bytes=vmem_limit,
            ),
            cost_estimate=cost,
        )(x2d, w1, b1, w2, b2, w3, b3)

    try:
        y2d = run(True)       # single-buffered resident weights (VMEM headroom)
    except Exception:
        y2d = run(False)      # fallback if pipeline_mode is rejected by this jaxlib

    if padded_b != batch:
        y2d = y2d[:batch]
    return y2d.reshape(batch, 10, 137, 3)


def init_params(key, hidden_dim):
    """Deterministic synthetic parameters (LeCun-uniform-ish), lane-padded, bf16 weights."""
    hidden_pad = _round_up(hidden_dim, 128)
    k1, k2, k3, k4, k5, k6 = jax.random.split(key, 6)

    def lin(kw, kb, fan_in, fan_out):
        bound = 1.0 / jnp.sqrt(jnp.float32(fan_in))
        w = jax.random.uniform(kw, (fan_in, fan_out), jnp.float32, -bound, bound)
        b = jax.random.uniform(kb, (1, fan_out), jnp.float32, -bound, bound)
        return w, b

    w1, b1 = lin(k1, k2, IN_FEATURES, hidden_dim)
    w2, b2 = lin(k3, k4, hidden_dim, hidden_dim)
    w3, b3 = lin(k5, k6, hidden_dim, OUT_FEATURES)

    # One-time offline zero-padding to lane-aligned shapes; weights stored bf16.
    # Padded hidden columns carry zero bias -> selu(0)=0 -> contribute nothing.
    dh = hidden_pad - hidden_dim
    w1 = jnp.pad(w1, ((0, IN_PAD - IN_FEATURES), (0, dh))).astype(jnp.bfloat16)
    b1 = jnp.pad(b1, ((0, 0), (0, dh)))
    w2 = jnp.pad(w2, ((0, dh), (0, dh))).astype(jnp.bfloat16)
    b2 = jnp.pad(b2, ((0, 0), (0, dh)))
    w3 = jnp.pad(w3, ((0, dh), (0, 0))).astype(jnp.bfloat16)   # output stays at 4110
    return (w1, b1, w2, b2, w3, b3)


def _reference_forward(x, params):
    """Plain-JAX reference using the same bf16-input / f32-accumulate math."""
    w1, b1, w2, b2, w3, b3 = params
    batch = x.shape[0]
    h = x.reshape(batch, IN_FEATURES)
    h = jnp.pad(h, ((0, 0), (0, IN_PAD - IN_FEATURES)))
    h = _selu(jnp.dot(h.astype(jnp.bfloat16), w1,
                      preferred_element_type=jnp.float32) + b1)
    h = _selu(jnp.dot(h.astype(jnp.bfloat16), w2,
                      preferred_element_type=jnp.float32) + b2)
    y = jnp.dot(h.astype(jnp.bfloat16), w3,
                preferred_element_type=jnp.float32) + b3
    return y.reshape(batch, 10, 137, 3)


if __name__ == "__main__":
    key = jax.random.PRNGKey(0)
    kx, kp = jax.random.split(key)

    batch = 4
    hidden_dim = 128  # small hidden dim for the synthetic test (module default is 512)

    x = jax.random.normal(kx, (batch, 2, 137, 3), dtype=jnp.float32)
    params = init_params(kp, hidden_dim)

    out = pose_interpolator_cnn_forward(x, params)
    out = jax.block_until_ready(out)

    ref = _reference_forward(x, params)
    assert out.shape == (batch, 10, 137, 3), out.shape
    assert jnp.allclose(out, ref, atol=1e-2, rtol=1e-2), "mismatch vs reference"

    print("KERNEL_OK")
</pallas_src>

<mosaic_0001>
module attributes {stable_mosaic.version = 11 : i64} {
  func.func @_mlp_kernel(%arg0: i32, %arg1: memref<8x896xbf16, #tpu.memory_space<vmem>>, %arg2: memref<896x128xbf16, #tpu.memory_space<vmem>>, %arg3: memref<1x128xf32, #tpu.memory_space<vmem>>, %arg4: memref<128x128xbf16, #tpu.memory_space<vmem>>, %arg5: memref<1x128xf32, #tpu.memory_space<vmem>>, %arg6: memref<128x4110xbf16, #tpu.memory_space<vmem>>, %arg7: memref<1x4110xf32, #tpu.memory_space<vmem>>, %arg8: memref<8x4110xf32, #tpu.memory_space<vmem>>) attributes {dimension_semantics = [#tpu.dimension_semantics<parallel>], iteration_bounds = array<i64: 1>, scalar_prefetch = 0 : i64, scratch_operands = 0 : i64, tpu.core_type = #tpu.core_type<tc>, window_params = [{transform_indices = @transform_0, window_bounds = array<i64: 8, 896>}, {pipeline_mode = #tpu.pipeline_mode<synchronous>, transform_indices = @transform_1, window_bounds = array<i64: 896, 128>}, {pipeline_mode = #tpu.pipeline_mode<synchronous>, transform_indices = @transform_2, window_bounds = array<i64: 1, 128>}, {pipeline_mode = #tpu.pipeline_mode<synchronous>, transform_indices = @transform_3, window_bounds = array<i64: 128, 128>}, {pipeline_mode = #tpu.pipeline_mode<synchronous>, transform_indices = @transform_4, window_bounds = array<i64: 1, 128>}, {pipeline_mode = #tpu.pipeline_mode<synchronous>, transform_indices = @transform_5, window_bounds = array<i64: 128, 4110>}, {pipeline_mode = #tpu.pipeline_mode<synchronous>, transform_indices = @transform_6, window_bounds = array<i64: 1, 4110>}, {transform_indices = @transform_7, window_bounds = array<i64: 8, 4110>}]} {
    %c0 = arith.constant 0 : index
    %c0_0 = arith.constant 0 : index
    %0 = vector.load %arg1[%c0, %c0_0] : memref<8x896xbf16, #tpu.memory_space<vmem>>, vector<8x896xbf16>
    %c0_1 = arith.constant 0 : index
    %c0_2 = arith.constant 0 : index
    %1 = vector.load %arg2[%c0_1, %c0_2] : memref<896x128xbf16, #tpu.memory_space<vmem>>, vector<896x128xbf16>
    %cst = arith.constant dense<0.000000e+00> : vector<8x128xf32>
    %2 = tpu.matmul %0, %1, %cst {dimension_numbers = #tpu.dot_dimension_numbers<[1], [0], [0], [1], [0, 0, 1, 1], [], []>} : vector<8x896xbf16>, vector<896x128xbf16>, vector<8x128xf32> -> vector<8x128xf32>
    %c0_3 = arith.constant 0 : index
    %c0_4 = arith.constant 0 : index
    %3 = vector.load %arg3[%c0_3, %c0_4] : memref<1x128xf32, #tpu.memory_space<vmem>>, vector<1x128xf32>
    %4 = vector.broadcast %3 : vector<1x128xf32> to vector<8x128xf32>
    %5 = arith.addf %2, %4 : vector<8x128xf32>
    %cst_5 = arith.constant 0.000000e+00 : f32
    %6 = vector.broadcast %cst_5 : f32 to vector<8x128xf32>
    %7 = arith.minimumf %5, %6 : vector<8x128xf32>
    %8 = math.exp %7 : vector<8x128xf32>
    %cst_6 = arith.constant 1.000000e+00 : f32
    %9 = vector.broadcast %cst_6 : f32 to vector<8x128xf32>
    %10 = arith.subf %8, %9 : vector<8x128xf32>
    %cst_7 = arith.constant 1.67326319 : f32
    %11 = vector.broadcast %cst_7 : f32 to vector<8x128xf32>
    %12 = arith.mulf %11, %10 : vector<8x128xf32>
    %cst_8 = arith.constant 0.000000e+00 : f32
    %13 = vector.broadcast %cst_8 : f32 to vector<8x128xf32>
    %14 = arith.cmpf ogt, %5, %13 : vector<8x128xf32>
    %15 = arith.select %14, %5, %12 : vector<8x128xi1>, vector<8x128xf32>
    %cst_9 = arith.constant 1.05070102 : f32
    %16 = vector.broadcast %cst_9 : f32 to vector<8x128xf32>
    %17 = arith.mulf %16, %15 : vector<8x128xf32>
    %18 = arith.truncf %17 : vector<8x128xf32> to vector<8x128xbf16>
    %c0_10 = arith.constant 0 : index
    %c0_11 = arith.constant 0 : index
    %19 = vector.load %arg4[%c0_10, %c0_11] : memref<128x128xbf16, #tpu.memory_space<vmem>>, vector<128x128xbf16>
    %cst_12 = arith.constant dense<0.000000e+00> : vector<8x128xf32>
    %20 = tpu.matmul %18, %19, %cst_12 {dimension_numbers = #tpu.dot_dimension_numbers<[1], [0], [0], [1], [0, 0, 1, 1], [], []>} : vector<8x128xbf16>, vector<128x128xbf16>, vector<8x128xf32> -> vector<8x128xf32>
    %c0_13 = arith.constant 0 : index
    %c0_14 = arith.constant 0 : index
    %21 = vector.load %arg5[%c0_13, %c0_14] : memref<1x128xf32, #tpu.memory_space<vmem>>, vector<1x128xf32>
    %22 = vector.broadcast %21 : vector<1x128xf32> to vector<8x128xf32>
    %23 = arith.addf %20, %22 : vector<8x128xf32>
    %cst_15 = arith.constant 0.000000e+00 : f32
    %24 = vector.broadcast %cst_15 : f32 to vector<8x128xf32>
    %25 = arith.minimumf %23, %24 : vector<8x128xf32>
    %26 = math.exp %25 : vector<8x128xf32>
    %cst_16 = arith.constant 1.000000e+00 : f32
    %27 = vector.broadcast %cst_16 : f32 to vector<8x128xf32>
    %28 = arith.subf %26, %27 : vector<8x128xf32>
    %cst_17 = arith.constant 1.67326319 : f32
    %29 = vector.broadcast %cst_17 : f32 to vector<8x128xf32>
    %30 = arith.mulf %29, %28 : vector<8x128xf32>
    %cst_18 = arith.constant 0.000000e+00 : f32
    %31 = vector.broadcast %cst_18 : f32 to vector<8x128xf32>
    %32 = arith.cmpf ogt, %23, %31 : vector<8x128xf32>
    %33 = arith.select %32, %23, %30 : vector<8x128xi1>, vector<8x128xf32>
    %cst_19 = arith.constant 1.05070102 : f32
    %34 = vector.broadcast %cst_19 : f32 to vector<8x128xf32>
    %35 = arith.mulf %34, %33 : vector<8x128xf32>
    %36 = arith.truncf %35 : vector<8x128xf32> to vector<8x128xbf16>
    %c0_20 = arith.constant 0 : index
    %c0_21 = arith.constant 0 : index
    %37 = vector.load %arg6[%c0_20, %c0_21] : memref<128x4110xbf16, #tpu.memory_space<vmem>>, vector<128x4110xbf16>
    %cst_22 = arith.constant dense<0.000000e+00> : vector<8x4110xf32>
    %38 = tpu.matmul %36, %37, %cst_22 {dimension_numbers = #tpu.dot_dimension_numbers<[1], [0], [0], [1], [0, 0, 1, 1], [], []>} : vector<8x128xbf16>, vector<128x4110xbf16>, vector<8x4110xf32> -> vector<8x4110xf32>
    %c0_23 = arith.constant 0 : index
    %c0_24 = arith.constant 0 : index
    %39 = vector.load %arg7[%c0_23, %c0_24] : memref<1x4110xf32, #tpu.memory_space<vmem>>, vector<1x4110xf32>
    %40 = vector.broadcast %39 : vector<1x4110xf32> to vector<8x4110xf32>
    %41 = arith.addf %38, %40 : vector<8x4110xf32>
    %c0_25 = arith.constant 0 : index
    %c0_26 = arith.constant 0 : index
    %42 = vector.load %arg8[%c0_25, %c0_26] : memref<8x4110xf32, #tpu.memory_space<vmem>>, vector<8x4110xf32>
    tpu.vector_store %arg8[%c0_25, %c0_26], %41 {strides = array<i32>} : memref<8x4110xf32, #tpu.memory_space<vmem>>, vector<8x4110xf32>,
    return
  }
  func.func @transform_0(%arg0: i32) -> (i32, i32) {
    %c0_i32 = arith.constant 0 : i32
    %c0_i32_0 = arith.constant 0 : i32
    return %arg0, %c0_i32 : i32, i32
  }
  func.func @transform_1(%arg0: i32) -> (i32, i32) {
    %c0_i32 = arith.constant 0 : i32
    %c0_i32_0 = arith.constant 0 : i32
    %c0_i32_1 = arith.constant 0 : i32
    return %c0_i32, %c0_i32_0 : i32, i32
  }
  func.func @transform_2(%arg0: i32) -> (i32, i32) {
    %c0_i32 = arith.constant 0 : i32
    %c0_i32_0 = arith.constant 0 : i32
    %c0_i32_1 = arith.constant 0 : i32
    return %c0_i32, %c0_i32_0 : i32, i32
  }
  func.func @transform_3(%arg0: i32) -> (i32, i32) {
    %c0_i32 = arith.constant 0 : i32
    %c0_i32_0 = arith.constant 0 : i32
    %c0_i32_1 = arith.constant 0 : i32
    return %c0_i32, %c0_i32_0 : i32, i32
  }
  func.func @transform_4(%arg0: i32) -> (i32, i32) {
    %c0_i32 = arith.constant 0 : i32
    %c0_i32_0 = arith.constant 0 : i32
    %c0_i32_1 = arith.constant 0 : i32
    return %c0_i32, %c0_i32_0 : i32, i32
  }
  func.func @transform_5(%arg0: i32) -> (i32, i32) {
    %c0_i32 = arith.constant 0 : i32
    %c0_i32_0 = arith.constant 0 : i32
    %c0_i32_1 = arith.constant 0 : i32
    return %c0_i32, %c0_i32_0 : i32, i32
  }
  func.func @transform_6(%arg0: i32) -> (i32, i32) {
    %c0_i32 = arith.constant 0 : i32
    %c0_i32_0 = arith.constant 0 : i32
    %c0_i32_1 = arith.constant 0 : i32
    return %c0_i32, %c0_i32_0 : i32, i32
  }
  func.func @transform_7(%arg0: i32) -> (i32, i32) {
    %c0_i32 = arith.constant 0 : i32
    %c0_i32_0 = arith.constant 0 : i32
    return %arg0, %c0_i32 : i32, i32
  }
}

module attributes {stable_mosaic.version = 11 : i64} {
  func.func @_mlp_kernel(%arg0: i32, %arg1: memref<8x896xbf16, #tpu.memory_space<vmem>>, %arg2: memref<896x128xbf16, #tpu.memory_space<vmem>>, %arg3: memref<1x128xf32, #tpu.memory_space<vmem>>, %arg4: memref<128x128xbf16, #tpu.memory_space<vmem>>, %arg5: memref<1x128xf32, #tpu.memory_space<vmem>>, %arg6: memref<128x4110xbf16, #tpu.memory_space<vmem>>, %arg7: memref<1x4110xf32, #tpu.memory_space<vmem>>, %arg8: memref<8x4110xf32, #tpu.memory_space<vmem>>) attributes {dimension_semantics = [#tpu.dimension_semantics<parallel>], iteration_bounds = array<i64: 1>, scalar_prefetch = 0 : i64, scratch_operands = 0 : i64, tpu.core_type = #tpu.core_type<tc>, window_params = [{transform_indices = @transform_0, window_bounds = array<i64: 8, 896>}, {pipeline_mode = #tpu.pipeline_mode<synchronous>, transform_indices = @transform_1, window_bounds = array<i64: 896, 128>}, {pipeline_mode = #tpu.pipeline_mode<synchronous>, transform_indices = @transform_2, window_bounds = array<i64: 1, 128>}, {pipeline_mode = #tpu.pipeline_mode<synchronous>, transform_indices = @transform_3, window_bounds = array<i64: 128, 128>}, {pipeline_mode = #tpu.pipeline_mode<synchronous>, transform_indices = @transform_4, window_bounds = array<i64: 1, 128>}, {pipeline_mode = #tpu.pipeline_mode<synchronous>, transform_indices = @transform_5, window_bounds = array<i64: 128, 4110>}, {pipeline_mode = #tpu.pipeline_mode<synchronous>, transform_indices = @transform_6, window_bounds = array<i64: 1, 4110>}, {transform_indices = @transform_7, window_bounds = array<i64: 8, 4110>}]} {
    %c0 = arith.constant 0 : index
    %c0_0 = arith.constant 0 : index
    %0 = vector.load %arg1[%c0, %c0_0] : memref<8x896xbf16, #tpu.memory_space<vmem>>, vector<8x896xbf16>
    %c0_1 = arith.constant 0 : index
    %c0_2 = arith.constant 0 : index
    %1 = vector.load %arg2[%c0_1, %c0_2] : memref<896x128xbf16, #tpu.memory_space<vmem>>, vector<896x128xbf16>
    %cst = arith.constant dense<0.000000e+00> : vector<8x128xf32>
    %2 = tpu.matmul %0, %1, %cst {dimension_numbers = #tpu.dot_dimension_numbers<[1], [0], [0], [1], [0, 0, 1, 1], [], []>} : vector<8x896xbf16>, vector<896x128xbf16>, vector<8x128xf32> -> vector<8x128xf32>
    %c0_3 = arith.constant 0 : index
    %c0_4 = arith.constant 0 : index
    %3 = vector.load %arg3[%c0_3, %c0_4] : memref<1x128xf32, #tpu.memory_space<vmem>>, vector<1x128xf32>
    %4 = vector.broadcast %3 : vector<1x128xf32> to vector<8x128xf32>
    %5 = arith.addf %2, %4 : vector<8x128xf32>
    %cst_5 = arith.constant 0.000000e+00 : f32
    %6 = vector.broadcast %cst_5 : f32 to vector<8x128xf32>
    %7 = arith.minimumf %5, %6 : vector<8x128xf32>
    %8 = math.exp %7 : vector<8x128xf32>
    %cst_6 = arith.constant 1.000000e+00 : f32
    %9 = vector.broadcast %cst_6 : f32 to vector<8x128xf32>
    %10 = arith.subf %8, %9 : vector<8x128xf32>
    %cst_7 = arith.constant 1.67326319 : f32
    %11 = vector.broadcast %cst_7 : f32 to vector<8x128xf32>
    %12 = arith.mulf %11, %10 : vector<8x128xf32>
    %cst_8 = arith.constant 0.000000e+00 : f32
    %13 = vector.broadcast %cst_8 : f32 to vector<8x128xf32>
    %14 = arith.cmpf ogt, %5, %13 : vector<8x128xf32>
    %15 = arith.select %14, %5, %12 : vector<8x128xi1>, vector<8x128xf32>
    %cst_9 = arith.constant 1.05070102 : f32
    %16 = vector.broadcast %cst_9 : f32 to vector<8x128xf32>
    %17 = arith.mulf %16, %15 : vector<8x128xf32>
    %18 = arith.truncf %17 : vector<8x128xf32> to vector<8x128xbf16>
    %c0_10 = arith.constant 0 : index
    %c0_11 = arith.constant 0 : index
    %19 = vector.load %arg4[%c0_10, %c0_11] : memref<128x128xbf16, #tpu.memory_space<vmem>>, vector<128x128xbf16>
    %cst_12 = arith.constant dense<0.000000e+00> : vector<8x128xf32>
    %20 = tpu.matmul %18, %19, %cst_12 {dimension_numbers = #tpu.dot_dimension_numbers<[1], [0], [0], [1], [0, 0, 1, 1], [], []>} : vector<8x128xbf16>, vector<128x128xbf16>, vector<8x128xf32> -> vector<8x128xf32>
    %c0_13 = arith.constant 0 : index
    %c0_14 = arith.constant 0 : index
    %21 = vector.load %arg5[%c0_13, %c0_14] : memref<1x128xf32, #tpu.memory_space<vmem>>, vector<1x128xf32>
    %22 = vector.broadcast %21 : vector<1x128xf32> to vector<8x128xf32>
    %23 = arith.addf %20, %22 : vector<8x128xf32>
    %cst_15 = arith.constant 0.000000e+00 : f32
    %24 = vector.broadcast %cst_15 : f32 to vector<8x128xf32>
    %25 = arith.minimumf %23, %24 : vector<8x128xf32>
    %26 = math.exp %25 : vector<8x128xf32>
    %cst_16 = arith.constant 1.000000e+00 : f32
    %27 = vector.broadcast %cst_16 : f32 to vector<8x128xf32>
    %28 = arith.subf %26, %27 : vector<8x128xf32>
    %cst_17 = arith.constant 1.67326319 : f32
    %29 = vector.broadcast %cst_17 : f32 to vector<8x128xf32>
    %30 = arith.mulf %29, %28 : vector<8x128xf32>
    %cst_18 = arith.constant 0.000000e+00 : f32
    %31 = vector.broadcast %cst_18 : f32 to vector<8x128xf32>
    %32 = arith.cmpf ogt, %23, %31 : vector<8x128xf32>
    %33 = arith.select %32, %23, %30 : vector<8x128xi1>, vector<8x128xf32>
    %cst_19 = arith.constant 1.05070102 : f32
    %34 = vector.broadcast %cst_19 : f32 to vector<8x128xf32>
    %35 = arith.mulf %34, %33 : vector<8x128xf32>
    %36 = arith.truncf %35 : vector<8x128xf32> to vector<8x128xbf16>
    %c0_20 = arith.constant 0 : index
    %c0_21 = arith.constant 0 : index
    %37 = vector.load %arg6[%c0_20, %c0_21] : memref<128x4110xbf16, #tpu.memory_space<vmem>>, vector<128x4110xbf16>
    %cst_22 = arith.constant dense<0.000000e+00> : vector<8x4110xf32>
    %38 = tpu.matmul %36, %37, %cst_22 {dimension_numbers = #tpu.dot_dimension_numbers<[1], [0], [0], [1], [0, 0, 1, 1], [], []>} : vector<8x128xbf16>, vector<128x4110xbf16>, vector<8x4110xf32> -> vector<8x4110xf32>
    %c0_23 = arith.constant 0 : index
    %c0_24 = arith.constant 0 : index
    %39 = vector.load %arg7[%c0_23, %c0_24] : memref<1x4110xf32, #tpu.memory_space<vmem>>, vector<1x4110xf32>
    %40 = vector.broadcast %39 : vector<1x4110xf32> to vector<8x4110xf32>
    %41 = arith.addf %38, %40 : vector<8x4110xf32>
    %c0_25 = arith.constant 0 : index
    %c0_26 = arith.constant 0 : index
    %42 = vector.load %arg8[%c0_25, %c0_26] : memref<8x4110xf32, #tpu.memory_space<vmem>>, vector<8x4110xf32>
    tpu.vector_store %arg8[%c0_25, %c0_26], %41 {strides = array<i32>} : memref<8x4110xf32, #tpu.memory_space<vmem>>, vector<8x4110xf32>,
    return
  }
  func.func @transform_0(%arg0: i32) -> (i32, i32) {
    %c0_i32 = arith.constant 0 : i32
    %c0_i32_0 = arith.constant 0 : i32
    return %arg0, %c0_i32 : i32, i32
  }
  func.func @transform_1(%arg0: i32) -> (i32, i32) {
    %c0_i32 = arith.constant 0 : i32
    %c0_i32_0 = arith.constant 0 : i32
    %c0_i32_1 = arith.constant 0 : i32
    return %c0_i32, %c0_i32_0 : i32, i32
  }
  func.func @transform_2(%arg0: i32) -> (i32, i32) {
    %c0_i32 = arith.constant 0 : i32
    %c0_i32_0 = arith.constant 0 : i32
    %c0_i32_1 = arith.constant 0 : i32
    return %c0_i32, %c0_i32_0 : i32, i32
  }
  func.func @transform_3(%arg0: i32) -> (i32, i32) {
    %c0_i32 = arith.constant 0 : i32
    %c0_i32_0 = arith.constant 0 : i32
    %c0_i32_1 = arith.constant 0 : i32
    return %c0_i32, %c0_i32_0 : i32, i32
  }
  func.func @transform_4(%arg0: i32) -> (i32, i32) {
    %c0_i32 = arith.constant 0 : i32
    %c0_i32_0 = arith.constant 0 : i32
    %c0_i32_1 = arith.constant 0 : i32
    return %c0_i32, %c0_i32_0 : i32, i32
  }
  func.func @transform_5(%arg0: i32) -> (i32, i32) {
    %c0_i32 = arith.constant 0 : i32
    %c0_i32_0 = arith.constant 0 : i32
    %c0_i32_1 = arith.constant 0 : i32
    return %c0_i32, %c0_i32_0 : i32, i32
  }
  func.func @transform_6(%arg0: i32) -> (i32, i32) {
    %c0_i32 = arith.constant 0 : i32
    %c0_i32_0 = arith.constant 0 : i32
    %c0_i32_1 = arith.constant 0 : i32
    return %c0_i32, %c0_i32_0 : i32, i32
  }
  func.func @transform_7(%arg0: i32) -> (i32, i32) {
    %c0_i32 = arith.constant 0 : i32
    %c0_i32_0 = arith.constant 0 : i32
    return %arg0, %c0_i32 : i32, i32
  }
}

</mosaic_0001>

<llo_original>
// kernel: tpu_custom_call.1
$region0: #{tpu_custom_call.1}
  #allocation0 [shape = 'u32[]', space=smem, size = 0x4, offset = 0x4, fixed_abs, tag = 'smem constant byte address 0x4 - core index']
  #allocation1 [shape = 'u32[72,128]{1,0:T(1,128)}', space=vmem, size = 0x9000, scoped, tag = 'internal scratch']
  %s0 = inlined_call_operand.vmem [shape: bf16[8,896], index: 0, kind: input, shape index: {}]
  %s1 = inlined_call_operand.vmem [shape: bf16[896,128], index: 1, kind: input, shape index: {}]
  %s2 = inlined_call_operand.vmem [shape: f32[1,128], index: 2, kind: input, shape index: {}]
  %s3 = inlined_call_operand.vmem [shape: bf16[128,128], index: 3, kind: input, shape index: {}]
  %s4 = inlined_call_operand.vmem [shape: f32[1,128], index: 4, kind: input, shape index: {}]
  %s5 = inlined_call_operand.vmem [shape: bf16[128,4110], index: 5, kind: input, shape index: {}]
  %s6 = inlined_call_operand.vmem [shape: f32[1,4110], index: 6, kind: input, shape index: {}]
  %s7 = inlined_call_operand.hbm [shape: f32[8,4110], index: 7, kind: output, shape index: {}]
  %s8 = sld [smem:[#allocation0]]
  $region38: #{tpu_custom_call.1} parent=0
    _
  %s10 = ssub.s32 1, %s8
  %s11 = scalar_select 0, %s10, %s8
  $region1: #{tpu_custom_call.1} parent=0
    #allocation2 [shape = 'u8[135168]{0}', space=vmem, size = 0x21000, scoped, tag = 'output window, operand 0, single buffered']
    #allocation3 [shape = 's32[1]{0}', space=sflag, size = 0x4, scoped, tag = 'scoped memory for tpu_custom_call.1']
    %12 = vsyncpa [#allocation3], 0
    // Predicated region
    $region2: #{tpu_custom_call.1} parent=1 // pred_check
      _
    $region3: #{tpu_custom_call.1} parent=1 // pred_check_branch
      %14 = sbr.rel (0) target = $region5
    $region4: #{tpu_custom_call.1} parent=1 // pred_region
      _
    $region5: #{tpu_custom_call.1} parent=1 // pred_fallthru
      _
    // Predicated region
    $region6: #{tpu_custom_call.1} parent=1 // pred_check
      _
    $region7: #{tpu_custom_call.1} parent=1 // pred_check_branch
      %16 = sbr.rel (0) target = $region9
    $region8: #{tpu_custom_call.1} parent=1 // pred_region
      _
    $region9: #{tpu_custom_call.1} parent=1 // pred_fallthru
      _
    // Predicated region
    $region10: #{tpu_custom_call.1} parent=1 // pred_check
      _
    $region11: #{tpu_custom_call.1} parent=1 // pred_check_branch
      %18 = sbr.rel (0) target = $region13
    $region12: #{tpu_custom_call.1} parent=1 // pred_region
      _
    $region13: #{tpu_custom_call.1} parent=1 // pred_fallthru
      _
    // Predicated region
    $region14: #{tpu_custom_call.1} parent=1 // pred_check
      _
    $region15: #{tpu_custom_call.1} parent=1 // pred_check_branch
      %20 = sbr.rel (0) target = $region17
    $region16: #{tpu_custom_call.1} parent=1 // pred_region
      _
    $region17: #{tpu_custom_call.1} parent=1 // pred_fallthru
      _
    // Predicated region
    $region18: #{tpu_custom_call.1} parent=1 // pred_check
      _
    $region19: #{tpu_custom_call.1} parent=1 // pred_check_branch
      %22 = sbr.rel (0) target = $region21
    $region20: #{tpu_custom_call.1} parent=1 // pred_region
      _
    $region21: #{tpu_custom_call.1} parent=1 // pred_fallthru
      _
    // Predicated region
    $region22: #{tpu_custom_call.1} parent=1 // pred_check
      _
    $region23: #{tpu_custom_call.1} parent=1 // pred_check_branch
      %24 = sbr.rel (0) target = $region25
    $region24: #{tpu_custom_call.1} parent=1 // pred_region
      _
    $region25: #{tpu_custom_call.1} parent=1 // pred_fallthru
      _
    // Predicated region
    $region26: #{tpu_custom_call.1} parent=1 // pred_check
      _
    $region27: #{tpu_custom_call.1} parent=1 // pred_check_branch
      %26 = sbr.rel (0) target = $region29
    $region28: #{tpu_custom_call.1} parent=1 // pred_region
      _
    $region29: #{tpu_custom_call.1} parent=1 // pred_fallthru
      _
    %v27 = vld [vmem:[%s0] sm:$0xff]
    %v28 = vld [vmem:[%s0 + $0x8] sm:$0xff]
    %v29 = vld [vmem:[%s0 + $0x10] sm:$0xff]
    %v30 = vld [vmem:[%s0 + $0x18] sm:$0xf]
    %v31 = vld [vmem:[%s1] sm:$0xf]
    %v32 = vld [vmem:[%s1 + $0x4] sm:$0xf]
    %v33 = vld [vmem:[%s1 + $0x8] sm:$0xf]
    %v34 = vld [vmem:[%s1 + $0xc] sm:$0xf]
    %v35 = vld [vmem:[%s1 + $0x10] sm:$0xf]
    %v36 = vld [vmem:[%s1 + $0x14] sm:$0xf]
    %v37 = vld [vmem:[%s1 + $0x18] sm:$0xf]
    %v38 = vld [vmem:[%s1 + $0x1c] sm:$0xf]
    %v39 = vld [vmem:[%s1 + $0x20] sm:$0xf]
    %v40 = vld [vmem:[%s1 + $0x24] sm:$0xf]
    %v41 = vld [vmem:[%s1 + $0x28] sm:$0xf]
    %v42 = vld [vmem:[%s1 + $0x2c] sm:$0xf]
    %v43 = vld [vmem:[%s1 + $0x30] sm:$0xf]
    %v44 = vld [vmem:[%s1 + $0x34] sm:$0xf]
    %v45 = vld [vmem:[%s1 + $0x38] sm:$0xf]
    %v46 = vld [vmem:[%s1 + $0x3c] sm:$0xf]
    %v47 = vld [vmem:[%s1 + $0x40] sm:$0xf]
    %v48 = vld [vmem:[%s1 + $0x44] sm:$0xf]
    %v49 = vld [vmem:[%s1 + $0x48] sm:$0xf]
    %v50 = vld [vmem:[%s1 + $0x4c] sm:$0xf]
    %v51 = vld [vmem:[%s1 + $0x50] sm:$0xf]
    %v52 = vld [vmem:[%s1 + $0x54] sm:$0xf]
    %v53 = vld [vmem:[%s1 + $0x58] sm:$0xf]
    %v54 = vld [vmem:[%s1 + $0x5c] sm:$0xf]
    %v55 = vld [vmem:[%s1 + $0x60] sm:$0xf]
    %v56 = vld [vmem:[%s1 + $0x64] sm:$0xf]
    %v57 = vld [vmem:[%s1 + $0x68] sm:$0xf]
    %v58 = vld [vmem:[%s1 + $0x6c] sm:$0xf]
    %v59 = vld [vmem:[%s1 + $0x70] sm:$0xf]
    %v60 = vld [vmem:[%s1 + $0x74] sm:$0xf]
    %v61 = vld [vmem:[%s1 + $0x78] sm:$0xf]
    %v62 = vld [vmem:[%s1 + $0x7c] sm:$0xf]
    %v63 = vld [vmem:[%s1 + $0x80] sm:$0xf]
    %v64 = vld [vmem:[%s1 + $0x84] sm:$0xf]
    %v65 = vld [vmem:[%s1 + $0x88] sm:$0xf]
    %v66 = vld [vmem:[%s1 + $0x8c] sm:$0xf]
    %v67 = vld [vmem:[%s1 + $0x90] sm:$0xf]
    %v68 = vld [vmem:[%s1 + $0x94] sm:$0xf]
    %v69 = vld [vmem:[%s1 + $0x98] sm:$0xf]
    %v70 = vld [vmem:[%s1 + $0x9c] sm:$0xf]
    %v71 = vld [vmem:[%s1 + $0xa0] sm:$0xf]
    %v72 = vld [vmem:[%s1 + $0xa4] sm:$0xf]
    %v73 = vld [vmem:[%s1 + $0xa8] sm:$0xf]
    %v74 = vld [vmem:[%s1 + $0xac] sm:$0xf]
    %v75 = vld [vmem:[%s1 + $0xb0] sm:$0xf]
    %v76 = vld [vmem:[%s1 + $0xb4] sm:$0xf]
    %v77 = vld [vmem:[%s1 + $0xb8] sm:$0xf]
    %v78 = vld [vmem:[%s1 + $0xbc] sm:$0xf]
    %v79 = vld [vmem:[%s1 + $0xc0] sm:$0xf]
    %v80 = vld [vmem:[%s1 + $0xc4] sm:$0xf]
    %v81 = vld [vmem:[%s1 + $0xc8] sm:$0xf]
    %v82 = vld [vmem:[%s1 + $0xcc] sm:$0xf]
    %v83 = vld [vmem:[%s1 + $0xd0] sm:$0xf]
    %v84 = vld [vmem:[%s1 + $0xd4] sm:$0xf]
    %v85 = vld [vmem:[%s1 + $0xd8] sm:$0xf]
    %v86 = vld [vmem:[%s1 + $0xdc] sm:$0xf]
    %v87 = vld [vmem:[%s1 + $0xe0] sm:$0xf]
    %v88 = vld [vmem:[%s1 + $0xe4] sm:$0xf]
    %v89 = vld [vmem:[%s1 + $0xe8] sm:$0xf]
    %v90 = vld [vmem:[%s1 + $0xec] sm:$0xf]
    %v91 = vld [vmem:[%s1 + $0xf0] sm:$0xf]
    %v92 = vld [vmem:[%s1 + $0xf4] sm:$0xf]
    %v93 = vld [vmem:[%s1 + $0xf8] sm:$0xf]
    %v94 = vld [vmem:[%s1 + $0xfc] sm:$0xf]
    %v95 = vld [vmem:[%s1 + $0x100] sm:$0xf]
    %v96 = vld [vmem:[%s1 + $0x104] sm:$0xf]
    %v97 = vld [vmem:[%s1 + $0x108] sm:$0xf]
    %v98 = vld [vmem:[%s1 + $0x10c] sm:$0xf]
    %v99 = vld [vmem:[%s1 + $0x110] sm:$0xf]
    %v100 = vld [vmem:[%s1 + $0x114] sm:$0xf]
    %v101 = vld [vmem:[%s1 + $0x118] sm:$0xf]
    %v102 = vld [vmem:[%s1 + $0x11c] sm:$0xf]
    %v103 = vld [vmem:[%s1 + $0x120] sm:$0xf]
    %v104 = vld [vmem:[%s1 + $0x124] sm:$0xf]
    %v105 = vld [vmem:[%s1 + $0x128] sm:$0xf]
    %v106 = vld [vmem:[%s1 + $0x12c] sm:$0xf]
    %v107 = vld [vmem:[%s1 + $0x130] sm:$0xf]
    %v108 = vld [vmem:[%s1 + $0x134] sm:$0xf]
    %v109 = vld [vmem:[%s1 + $0x138] sm:$0xf]
    %v110 = vld [vmem:[%s1 + $0x13c] sm:$0xf]
    %v111 = vld [vmem:[%s1 + $0x140] sm:$0xf]
    %v112 = vld [vmem:[%s1 + $0x144] sm:$0xf]
    %v113 = vld [vmem:[%s1 + $0x148] sm:$0xf]
    %v114 = vld [vmem:[%s1 + $0x14c] sm:$0xf]
    %v115 = vld [vmem:[%s1 + $0x150] sm:$0xf]
    %v116 = vld [vmem:[%s1 + $0x154] sm:$0xf]
    %v117 = vld [vmem:[%s1 + $0x158] sm:$0xf]
    %v118 = vld [vmem:[%s1 + $0x15c] sm:$0xf]
    %v119 = vld [vmem:[%s1 + $0x160] sm:$0xf]
    %v120 = vld [vmem:[%s1 + $0x164] sm:$0xf]
    %v121 = vld [vmem:[%s1 + $0x168] sm:$0xf]
    %v122 = vld [vmem:[%s1 + $0x16c] sm:$0xf]
    %v123 = vld [vmem:[%s1 + $0x170] sm:$0xf]
    %v124 = vld [vmem:[%s1 + $0x174] sm:$0xf]
    %v125 = vld [vmem:[%s1 + $0x178] sm:$0xf]
    %v126 = vld [vmem:[%s1 + $0x17c] sm:$0xf]
    %v127 = vld [vmem:[%s1 + $0x180] sm:$0xf]
    %v128 = vld [vmem:[%s1 + $0x184] sm:$0xf]
    %v129 = vld [vmem:[%s1 + $0x188] sm:$0xf]
    %v130 = vld [vmem:[%s1 + $0x18c] sm:$0xf]
    %v131 = vld [vmem:[%s1 + $0x190] sm:$0xf]
    %v132 = vld [vmem:[%s1 + $0x194] sm:$0xf]
    %v133 = vld [vmem:[%s1 + $0x198] sm:$0xf]
    %v134 = vld [vmem:[%s1 + $0x19c] sm:$0xf]
    %v135 = vld [vmem:[%s1 + $0x1a0] sm:$0xf]
    %v136 = vld [vmem:[%s1 + $0x1a4] sm:$0xf]
    %v137 = vld [vmem:[%s1 + $0x1a8] sm:$0xf]
    %v138 = vld [vmem:[%s1 + $0x1ac] sm:$0xf]
    %v139 = vld [vmem:[%s1 + $0x1b0] sm:$0xf]
    %v140 = vld [vmem:[%s1 + $0x1b4] sm:$0xf]
    %v141 = vld [vmem:[%s1 + $0x1b8] sm:$0xf]
    %v142 = vld [vmem:[%s1 + $0x1bc] sm:$0xf]
    %v143 = vld [vmem:[%s2] sm:$0x1]
    %v145 = vperm.slane %v143, 0
    %v151 = vunpack.c.l.b16 %v27
    %v152 = vunpack.c.h.b16 %v27
    %v153 = vunpack.c.l.b16 %v28
    %v154 = vunpack.c.h.b16 %v28
    %v155 = vunpack.c.l.b16 %v29
    %v156 = vunpack.c.h.b16 %v29
    %v157 = vunpack.c.l.b16 %v30
    %v158 = vpack.c.b16 %v151, %v151
    %v159 = vpack.c.b16 %v152, %v152
    %v160 = vpack.c.b16 %v153, %v153
    %v161 = vpack.c.b16 %v154, %v154
    %v162 = vpack.c.b16 %v155, %v155
    %v163 = vpack.c.b16 %v156, %v156
    %v164 = vpack.c.b16 %v157, %v157
    %v284 = vunpack.c.l.b16 %v31
    %v285 = vunpack.c.l.b16 %v32
    %v286 = vunpack.c.l.b16 %v33
    %v287 = vunpack.c.l.b16 %v34
    %v288 = vunpack.c.l.b16 %v35
    %v289 = vunpack.c.l.b16 %v36
    %v290 = vunpack.c.l.b16 %v37
    %v291 = vunpack.c.l.b16 %v38
    %v292 = vunpack.c.l.b16 %v39
    %v293 = vunpack.c.l.b16 %v40
    %v294 = vunpack.c.l.b16 %v41
    %v295 = vunpack.c.l.b16 %v42
    %v296 = vunpack.c.l.b16 %v43
    %v297 = vunpack.c.l.b16 %v44
    %v298 = vunpack.c.l.b16 %v45
    %v299 = vunpack.c.l.b16 %v46
    %v300 = vunpack.c.l.b16 %v47
    %v301 = vunpack.c.l.b16 %v48
    %v302 = vunpack.c.l.b16 %v49
    %v303 = vunpack.c.l.b16 %v50
    %v304 = vunpack.c.l.b16 %v51
    %v305 = vunpack.c.l.b16 %v52
    %v306 = vunpack.c.l.b16 %v53
    %v307 = vunpack.c.l.b16 %v54
    %v308 = vunpack.c.l.b16 %v55
    %v309 = vunpack.c.l.b16 %v56
    %v310 = vunpack.c.l.b16 %v57
    %v311 = vunpack.c.l.b16 %v58
    %v312 = vunpack.c.l.b16 %v59
    %v313 = vunpack.c.l.b16 %v60
    %v314 = vunpack.c.l.b16 %v61
    %v315 = vunpack.c.l.b16 %v62
    %v316 = vunpack.c.l.b16 %v63
    %v317 = vunpack.c.l.b16 %v64
    %v318 = vunpack.c.l.b16 %v65
    %v319 = vunpack.c.l.b16 %v66
    %v320 = vunpack.c.l.b16 %v67
    %v321 = vunpack.c.l.b16 %v68
    %v322 = vunpack.c.l.b16 %v69
    %v323 = vunpack.c.l.b16 %v70
    %v324 = vunpack.c.l.b16 %v71
    %v325 = vunpack.c.l.b16 %v72
    %v326 = vunpack.c.l.b16 %v73
    %v327 = vunpack.c.l.b16 %v74
    %v328 = vunpack.c.l.b16 %v75
    %v329 = vunpack.c.l.b16 %v76
    %v330 = vunpack.c.l.b16 %v77
    %v331 = vunpack.c.l.b16 %v78
    %v332 = vunpack.c.l.b16 %v79
    %v333 = vunpack.c.l.b16 %v80
    %v334 = vunpack.c.l.b16 %v81
    %v335 = vunpack.c.l.b16 %v82
    %v336 = vunpack.c.l.b16 %v83
    %v337 = vunpack.c.l.b16 %v84
    %v338 = vunpack.c.l.b16 %v85
    %v339 = vunpack.c.l.b16 %v86
    %v340 = vunpack.c.l.b16 %v87
    %v341 = vunpack.c.l.b16 %v88
    %v342 = vunpack.c.l.b16 %v89
    %v343 = vunpack.c.l.b16 %v90
    %v344 = vunpack.c.l.b16 %v91
    %v345 = vunpack.c.l.b16 %v92
    %v346 = vunpack.c.l.b16 %v93
    %v347 = vunpack.c.l.b16 %v94
    %v348 = vunpack.c.l.b16 %v95
    %v349 = vunpack.c.l.b16 %v96
    %v350 = vunpack.c.l.b16 %v97
    %v351 = vunpack.c.l.b16 %v98
    %v352 = vunpack.c.l.b16 %v99
    %v353 = vunpack.c.l.b16 %v100
    %v354 = vunpack.c.l.b16 %v101
    %v355 = vunpack.c.l.b16 %v102
    %v356 = vunpack.c.l.b16 %v103
    %v357 = vunpack.c.l.b16 %v104
    %v358 = vunpack.c.l.b16 %v105
    %v359 = vunpack.c.l.b16 %v106
    %v360 = vunpack.c.l.b16 %v107
    %v361 = vunpack.c.l.b16 %v108
    %v362 = vunpack.c.l.b16 %v109
    %v363 = vunpack.c.l.b16 %v110
    %v364 = vunpack.c.l.b16 %v111
    %v365 = vunpack.c.l.b16 %v112
    %v366 = vunpack.c.l.b16 %v113
    %v367 = vunpack.c.l.b16 %v114
    %v368 = vunpack.c.l.b16 %v115
    %v369 = vunpack.c.l.b16 %v116
    %v370 = vunpack.c.l.b16 %v117
    %v371 = vunpack.c.l.b16 %v118
    %v372 = vunpack.c.l.b16 %v119
    %v373 = vunpack.c.l.b16 %v120
    %v374 = vunpack.c.l.b16 %v121
    %v375 = vunpack.c.l.b16 %v122
    %v376 = vunpack.c.l.b16 %v123
    %v377 = vunpack.c.l.b16 %v124
    %v378 = vunpack.c.l.b16 %v125
    %v379 = vunpack.c.l.b16 %v126
    %v380 = vunpack.c.l.b16 %v127
    %v381 = vunpack.c.l.b16 %v128
    %v382 = vunpack.c.l.b16 %v129
    %v383 = vunpack.c.l.b16 %v130
    %v384 = vunpack.c.l.b16 %v131
    %v385 = vunpack.c.l.b16 %v132
    %v386 = vunpack.c.l.b16 %v133
    %v387 = vunpack.c.l.b16 %v134
    %v388 = vunpack.c.l.b16 %v135
    %v389 = vunpack.c.l.b16 %v136
    %v390 = vunpack.c.l.b16 %v137
    %v391 = vunpack.c.l.b16 %v138
    %v392 = vunpack.c.l.b16 %v139
    %v393 = vunpack.c.l.b16 %v140
    %v394 = vunpack.c.l.b16 %v141
    %v395 = vunpack.c.l.b16 %v142
    %v396 = vpack.c.b16 %v285, %v284
    %v397 = vpack.c.b16 %v287, %v286
    %v398 = vpack.c.b16 %v289, %v288
    %v399 = vpack.c.b16 %v291, %v290
    %v400 = vpack.c.b16 %v293, %v292
    %v401 = vpack.c.b16 %v295, %v294
    %v402 = vpack.c.b16 %v297, %v296
    %v403 = vpack.c.b16 %v299, %v298
    %v404 = vpack.c.b16 %v301, %v300
    %v405 = vpack.c.b16 %v303, %v302
    %v406 = vpack.c.b16 %v305, %v304
    %v407 = vpack.c.b16 %v307, %v306
    %v408 = vpack.c.b16 %v309, %v308
    %v409 = vpack.c.b16 %v311, %v310
    %v410 = vpack.c.b16 %v313, %v312
    %v411 = vpack.c.b16 %v315, %v314
    %v412 = vpack.c.b16 %v317, %v316
    %v413 = vpack.c.b16 %v319, %v318
    %v414 = vpack.c.b16 %v321, %v320
    %v415 = vpack.c.b16 %v323, %v322
    %v416 = vpack.c.b16 %v325, %v324
    %v417 = vpack.c.b16 %v327, %v326
    %v418 = vpack.c.b16 %v329, %v328
    %v419 = vpack.c.b16 %v331, %v330
    %v420 = vpack.c.b16 %v333, %v332
    %v421 = vpack.c.b16 %v335, %v334
    %v422 = vpack.c.b16 %v337, %v336
    %v423 = vpack.c.b16 %v339, %v338
    %v424 = vpack.c.b16 %v341, %v340
    %v425 = vpack.c.b16 %v343, %v342
    %v426 = vpack.c.b16 %v345, %v344
    %v427 = vpack.c.b16 %v347, %v346
    %v428 = vpack.c.b16 %v349, %v348
    %v429 = vpack.c.b16 %v351, %v350
    %v430 = vpack.c.b16 %v353, %v352
    %v431 = vpack.c.b16 %v355, %v354
    %v432 = vpack.c.b16 %v357, %v356
    %v433 = vpack.c.b16 %v359, %v358
    %v434 = vpack.c.b16 %v361, %v360
    %v435 = vpack.c.b16 %v363, %v362
    %v436 = vpack.c.b16 %v365, %v364
    %v437 = vpack.c.b16 %v367, %v366
    %v438 = vpack.c.b16 %v369, %v368
    %v439 = vpack.c.b16 %v371, %v370
    %v440 = vpack.c.b16 %v373, %v372
    %v441 = vpack.c.b16 %v375, %v374
    %v442 = vpack.c.b16 %v377, %v376
    %v443 = vpack.c.b16 %v379, %v378
    %v444 = vpack.c.b16 %v381, %v380
    %v445 = vpack.c.b16 %v383, %v382
    %v446 = vpack.c.b16 %v385, %v384
    %v447 = vpack.c.b16 %v387, %v386
    %v448 = vpack.c.b16 %v389, %v388
    %v449 = vpack.c.b16 %v391, %v390
    %v450 = vpack.c.b16 %v393, %v392
    %v451 = vpack.c.b16 %v395, %v394
    %508 = vmatpush.bf16.msra.mxu0 %v403
    %509 = vmatpush.bf16.msra.mxu0 %v402
    %510 = vmatpush.bf16.msra.mxu0 %v401
    %511 = vmatpush.bf16.msra.mxu0 %v400
    %512 = vmatpush.bf16.msra.mxu0 %v399
    %513 = vmatpush.bf16.msra.mxu0 %v398
    %514 = vmatpush.bf16.msra.mxu0 %v397
    %515 = vmatpush.bf16.msra.mxu0 %v396
    %516 = vmatmul.bf16.gmra.mxu0 %v158
    %v517 = vpop.f32.mrf.mxu0
    %v518 = vadd.f32 %v145, %v517
    %v519 = vpop.f32.mrf.mxu0
    %520 = vdwg.mxu0
    %521 = vmatpush.bf16.msra.mxu0 %v411
    %522 = vmatpush.bf16.msra.mxu0 %v410
    %523 = vmatpush.bf16.msra.mxu0 %v409
    %524 = vmatpush.bf16.msra.mxu0 %v408
    %525 = vmatpush.bf16.msra.mxu0 %v407
    %526 = vmatpush.bf16.msra.mxu0 %v406
    %527 = vmatpush.bf16.msra.mxu0 %v405
    %528 = vmatpush.bf16.msra.mxu0 %v404
    %529 = vmatmul.bf16.gmra.mxu0 %v159
    %v530 = vpop.f32.mrf.mxu0
    %v531 = vadd.f32 %v518, %v530
    %v532 = vpop.f32.mrf.mxu0
    %533 = vdwg.mxu0
    %534 = vmatpush.bf16.msra.mxu0 %v419
    %535 = vmatpush.bf16.msra.mxu0 %v418
    %536 = vmatpush.bf16.msra.mxu0 %v417
    %537 = vmatpush.bf16.msra.mxu0 %v416
    %538 = vmatpush.bf16.msra.mxu0 %v415
    %539 = vmatpush.bf16.msra.mxu0 %v414
    %540 = vmatpush.bf16.msra.mxu0 %v413
    %541 = vmatpush.bf16.msra.mxu0 %v412
    %542 = vmatmul.bf16.gmra.mxu0 %v160
    %v543 = vpop.f32.mrf.mxu0
    %v544 = vadd.f32 %v531, %v543
    %v545 = vpop.f32.mrf.mxu0
    %546 = vdwg.mxu0
    %547 = vmatpush.bf16.msra.mxu0 %v427
    %548 = vmatpush.bf16.msra.mxu0 %v426
    %549 = vmatpush.bf16.msra.mxu0 %v425
    %550 = vmatpush.bf16.msra.mxu0 %v424
    %551 = vmatpush.bf16.msra.mxu0 %v423
    %552 = vmatpush.bf16.msra.mxu0 %v422
    %553 = vmatpush.bf16.msra.mxu0 %v421
    %554 = vmatpush.bf16.msra.mxu0 %v420
    %555 = vmatmul.bf16.gmra.mxu0 %v161
    %v556 = vpop.f32.mrf.mxu0
    %v557 = vadd.f32 %v544, %v556
    %v558 = vpop.f32.mrf.mxu0
    %559 = vdwg.mxu0
    %560 = vmatpush.bf16.msra.mxu0 %v435
    %561 = vmatpush.bf16.msra.mxu0 %v434
    %562 = vmatpush.bf16.msra.mxu0 %v433
    %563 = vmatpush.bf16.msra.mxu0 %v432
    %564 = vmatpush.bf16.msra.mxu0 %v431
    %565 = vmatpush.bf16.msra.mxu0 %v430
    %566 = vmatpush.bf16.msra.mxu0 %v429
    %567 = vmatpush.bf16.msra.mxu0 %v428
    %568 = vmatmul.bf16.gmra.mxu0 %v162
    %v569 = vpop.f32.mrf.mxu0
    %v570 = vadd.f32 %v557, %v569
    %v571 = vpop.f32.mrf.mxu0
    %572 = vdwg.mxu0
    %573 = vmatpush.bf16.msra.mxu0 %v443
    %574 = vmatpush.bf16.msra.mxu0 %v442
    %575 = vmatpush.bf16.msra.mxu0 %v441
    %576 = vmatpush.bf16.msra.mxu0 %v440
    %577 = vmatpush.bf16.msra.mxu0 %v439
    %578 = vmatpush.bf16.msra.mxu0 %v438
    %579 = vmatpush.bf16.msra.mxu0 %v437
    %580 = vmatpush.bf16.msra.mxu0 %v436
    %581 = vmatmul.bf16.gmra.mxu0 %v163
    %v582 = vpop.f32.mrf.mxu0
    %v583 = vadd.f32 %v570, %v582
    %v584 = vpop.f32.mrf.mxu0
    %585 = vdwg.mxu0
    %586 = vmatpush.bf16.msra.mxu0 %v451
    %587 = vmatpush.bf16.msra.mxu0 %v450
    %588 = vmatpush.bf16.msra.mxu0 %v449
    %589 = vmatpush.bf16.msra.mxu0 %v448
    %590 = vmatpush.bf16.msra.mxu0 %v447
    %591 = vmatpush.bf16.msra.mxu0 %v446
    %592 = vmatpush.bf16.msra.mxu0 %v445
    %593 = vmatpush.bf16.msra.mxu0 %v444
    %594 = vmatmul.bf16.gmra.mxu0 %v164
    %v595 = vpop.f32.mrf.mxu0
    %v596 = vadd.f32 %v583, %v595
    %v597 = vpop.f32.mrf.mxu0
    %598 = vdwg.mxu0
    %v599 = vmin.f32 %v596, 0.0
    %v600 = vmul.f32 %v599, 1.442695
    %v601 = vpow.pop %v600
    %v602 = vsub.f32 %v601, 1.0
    %v603 = vmul.f32 %v602, 1.6732632
    %vm604 = vcmp.gt.f32.partialorder %v596, 0.0
    %v605 = vsel %vm604, %v596, %v603
    %v606 = vmul.f32 %v605, 1.050701
    %v607 = vpack.c.bf16 %v606, %v606
    %v608 = vld [vmem:[%s3] sm:$0xf]
    %v609 = vld [vmem:[%s3 + $0x4] sm:$0xf]
    %v610 = vld [vmem:[%s3 + $0x8] sm:$0xf]
    %v611 = vld [vmem:[%s3 + $0xc] sm:$0xf]
    %v612 = vld [vmem:[%s3 + $0x10] sm:$0xf]
    %v613 = vld [vmem:[%s3 + $0x14] sm:$0xf]
    %v614 = vld [vmem:[%s3 + $0x18] sm:$0xf]
    %v615 = vld [vmem:[%s3 + $0x1c] sm:$0xf]
    %v616 = vld [vmem:[%s3 + $0x20] sm:$0xf]
    %v617 = vld [vmem:[%s3 + $0x24] sm:$0xf]
    %v618 = vld [vmem:[%s3 + $0x28] sm:$0xf]
    %v619 = vld [vmem:[%s3 + $0x2c] sm:$0xf]
    %v620 = vld [vmem:[%s3 + $0x30] sm:$0xf]
    %v621 = vld [vmem:[%s3 + $0x34] sm:$0xf]
    %v622 = vld [vmem:[%s3 + $0x38] sm:$0xf]
    %v623 = vld [vmem:[%s3 + $0x3c] sm:$0xf]
    %v624 = vld [vmem:[%s4] sm:$0x1]
    %v626 = vperm.slane %v624, 0
    %v644 = vunpack.c.l.b16 %v608
    %v645 = vunpack.c.l.b16 %v609
    %v646 = vunpack.c.l.b16 %v610
    %v647 = vunpack.c.l.b16 %v611
    %v648 = vunpack.c.l.b16 %v612
    %v649 = vunpack.c.l.b16 %v613
    %v650 = vunpack.c.l.b16 %v614
    %v651 = vunpack.c.l.b16 %v615
    %v652 = vunpack.c.l.b16 %v616
    %v653 = vunpack.c.l.b16 %v617
    %v654 = vunpack.c.l.b16 %v618
    %v655 = vunpack.c.l.b16 %v619
    %v656 = vunpack.c.l.b16 %v620
    %v657 = vunpack.c.l.b16 %v621
    %v658 = vunpack.c.l.b16 %v622
    %v659 = vunpack.c.l.b16 %v623
    %v660 = vpack.c.b16 %v645, %v644
    %v661 = vpack.c.b16 %v647, %v646
    %v662 = vpack.c.b16 %v649, %v648
    %v663 = vpack.c.b16 %v651, %v650
    %v664 = vpack.c.b16 %v653, %v652
    %v665 = vpack.c.b16 %v655, %v654
    %v666 = vpack.c.b16 %v657, %v656
    %v667 = vpack.c.b16 %v659, %v658
    %676 = vmatpush.bf16.msra.mxu0 %v667
    %677 = vmatpush.bf16.msra.mxu0 %v666
    %678 = vmatpush.bf16.msra.mxu0 %v665
    %679 = vmatpush.bf16.msra.mxu0 %v664
    %680 = vmatpush.bf16.msra.mxu0 %v663
    %681 = vmatpush.bf16.msra.mxu0 %v662
    %682 = vmatpush.bf16.msra.mxu0 %v661
    %683 = vmatpush.bf16.msra.mxu0 %v660
    %684 = vmatmul.bf16.gmra.mxu0 %v607
    %v685 = vpop.f32.mrf.mxu0
    %v686 = vadd.f32 %v626, %v685
    %v687 = vpop.f32.mrf.mxu0
    %688 = vdwg.mxu0
    %v689 = vmin.f32 %v686, 0.0
    %v690 = vmul.f32 %v689, 1.442695
    %v691 = vpow.pop %v690
    %v692 = vsub.f32 %v691, 1.0
    %v693 = vmul.f32 %v692, 1.6732632
    %vm694 = vcmp.gt.f32.partialorder %v686, 0.0
    %v695 = vsel %vm694, %v686, %v693
    %v696 = vmul.f32 %v695, 1.050701
    %v697 = vpack.c.bf16 %v696, %v696
    %v698 = vld [vmem:[%s5] sm:$0xff]
    %v699 = vld [vmem:[%s5 + $0x8] sm:$0xff]
    %v700 = vld [vmem:[%s5 + $0x10] sm:$0xff]
    %v701 = vld [vmem:[%s5 + $0x18] sm:$0xff]
    %v702 = vld [vmem:[%s5 + $0x20] sm:$0xff]
    %v703 = vld [vmem:[%s5 + $0x28] sm:$0xff]
    %v704 = vld [vmem:[%s5 + $0x30] sm:$0xff]
    %v705 = vld [vmem:[%s5 + $0x38] sm:$0xff]
    %v706 = vld [vmem:[%s5 + $0x40] sm:$0xff]
    %v707 = vld [vmem:[%s5 + $0x48] sm:$0xff]
    %v708 = vld [vmem:[%s5 + $0x50] sm:$0xff]
    %v709 = vld [vmem:[%s5 + $0x58] sm:$0xff]
    %v710 = vld [vmem:[%s5 + $0x60] sm:$0xff]
    %v711 = vld [vmem:[%s5 + $0x68] sm:$0xff]
    %v712 = vld [vmem:[%s5 + $0x70] sm:$0xff]
    %v713 = vld [vmem:[%s5 + $0x78] sm:$0xff]
    %v714 = vld [vmem:[%s5 + $0x80] sm:$0xf]
    %v715 = vld [vmem:[%s5 + $0x84] sm:$0xff]
    %v716 = vld [vmem:[%s5 + $0x8c] sm:$0xff]
    %v717 = vld [vmem:[%s5 + $0x94] sm:$0xff]
    %v718 = vld [vmem:[%s5 + $0x9c] sm:$0xff]
    %v719 = vld [vmem:[%s5 + $0xa4] sm:$0xff]
    %v720 = vld [vmem:[%s5 + $0xac] sm:$0xff]
    %v721 = vld [vmem:[%s5 + $0xb4] sm:$0xff]
    %v722 = vld [vmem:[%s5 + $0xbc] sm:$0xff]
    %v723 = vld [vmem:[%s5 + $0xc4] sm:$0xff]
    %v724 = vld [vmem:[%s5 + $0xcc] sm:$0xff]
    %v725 = vld [vmem:[%s5 + $0xd4] sm:$0xff]
    %v726 = vld [vmem:[%s5 + $0xdc] sm:$0xff]
    %v727 = vld [vmem:[%s5 + $0xe4] sm:$0xff]
    %v728 = vld [vmem:[%s5 + $0xec] sm:$0xff]
    %v729 = vld [vmem:[%s5 + $0xf4] sm:$0xff]
    %v730 = vld [vmem:[%s5 + $0xfc] sm:$0xff]
    %v731 = vld [vmem:[%s5 + $0x104] sm:$0xf]
    %v732 = vld [vmem:[%s5 + $0x108] sm:$0xff]
    %v733 = vld [vmem:[%s5 + $0x110] sm:$0xff]
    %v734 = vld [vmem:[%s5 + $0x118] sm:$0xff]
    %v735 = vld [vmem:[%s5 + $0x120] sm:$0xff]
    %v736 = vld [vmem:[%s5 + $0x128] sm:$0xff]
    %v737 = vld [vmem:[%s5 + $0x130] sm:$0xff]
    %v738 = vld [vmem:[%s5 + $0x138] sm:$0xff]
    %v739 = vld [vmem:[%s5 + $0x140] sm:$0xff]
    %v740 = vld [vmem:[%s5 + $0x148] sm:$0xff]
    %v741 = vld [vmem:[%s5 + $0x150] sm:$0xff]
    %v742 = vld [vmem:[%s5 + $0x158] sm:$0xff]
    %v743 = vld [vmem:[%s5 + $0x160] sm:$0xff]
    %v744 = vld [vmem:[%s5 + $0x168] sm:$0xff]
    %v745 = vld [vmem:[%s5 + $0x170] sm:$0xff]
    %v746 = vld [vmem:[%s5 + $0x178] sm:$0xff]
    %v747 = vld [vmem:[%s5 + $0x180] sm:$0xff]
    %v748 = vld [vmem:[%s5 + $0x188] sm:$0xf]
    %v749 = vld [vmem:[%s5 + $0x18c] sm:$0xff]
    %v750 = vld [vmem:[%s5 + $0x194] sm:$0xff]
    %v751 = vld [vmem:[%s5 + $0x19c] sm:$0xff]
    %v752 = vld [vmem:[%s5 + $0x1a4] sm:$0xff]
    %v753 = vld [vmem:[%s5 + $0x1ac] sm:$0xff]
    %v754 = vld [vmem:[%s5 + $0x1b4] sm:$0xff]
    %v755 = vld [vmem:[%s5 + $0x1bc] sm:$0xff]
    %v756 = vld [vmem:[%s5 + $0x1c4] sm:$0xff]
    %v757 = vld [vmem:[%s5 + $0x1cc] sm:$0xff]
    %v758 = vld [vmem:[%s5 + $0x1d4] sm:$0xff]
    %v759 = vld [vmem:[%s5 + $0x1dc] sm:$0xff]
    %v760 = vld [vmem:[%s5 + $0x1e4] sm:$0xff]
    %v761 = vld [vmem:[%s5 + $0x1ec] sm:$0xff]
    %v762 = vld [vmem:[%s5 + $0x1f4] sm:$0xff]
    %v763 = vld [vmem:[%s5 + $0x1fc] sm:$0xff]
    %v764 = vld [vmem:[%s5 + $0x204] sm:$0xff]
    %v765 = vld [vmem:[%s5 + $0x20c] sm:$0xf]
    %v766 = vld [vmem:[%s5 + $0x210] sm:$0xff]
    %v767 = vld [vmem:[%s5 + $0x218] sm:$0xff]
    %v768 = vld [vmem:[%s5 + $0x220] sm:$0xff]
    %v769 = vld [vmem:[%s5 + $0x228] sm:$0xff]
    %v770 = vld [vmem:[%s5 + $0x230] sm:$0xff]
    %v771 = vld [vmem:[%s5 + $0x238] sm:$0xff]
    %v772 = vld [vmem:[%s5 + $0x240] sm:$0xff]
    %v773 = vld [vmem:[%s5 + $0x248] sm:$0xff]
    %v774 = vld [vmem:[%s5 + $0x250] sm:$0xff]
    %v775 = vld [vmem:[%s5 + $0x258] sm:$0xff]
    %v776 = vld [vmem:[%s5 + $0x260] sm:$0xff]
    %v777 = vld [vmem:[%s5 + $0x268] sm:$0xff]
    %v778 = vld [vmem:[%s5 + $0x270] sm:$0xff]
    %v779 = vld [vmem:[%s5 + $0x278] sm:$0xff]
    %v780 = vld [vmem:[%s5 + $0x280] sm:$0xff]
    %v781 = vld [vmem:[%s5 + $0x288] sm:$0xff]
    %v782 = vld [vmem:[%s5 + $0x290] sm:$0xf]
    %v783 = vld [vmem:[%s5 + $0x294] sm:$0xff]
    %v784 = vld [vmem:[%s5 + $0x29c] sm:$0xff]
    %v785 = vld [vmem:[%s5 + $0x2a4] sm:$0xff]
    %v786 = vld [vmem:[%s5 + $0x2ac] sm:$0xff]
    %v787 = vld [vmem:[%s5 + $0x2b4] sm:$0xff]
    %v788 = vld [vmem:[%s5 + $0x2bc] sm:$0xff]
    %v789 = vld [vmem:[%s5 + $0x2c4] sm:$0xff]
    %v790 = vld [vmem:[%s5 + $0x2cc] sm:$0xff]
    %v791 = vld [vmem:[%s5 + $0x2d4] sm:$0xff]
    %v792 = vld [vmem:[%s5 + $0x2dc] sm:$0xff]
    %v793 = vld [vmem:[%s5 + $0x2e4] sm:$0xff]
    %v794 = vld [vmem:[%s5 + $0x2ec] sm:$0xff]
    %v795 = vld [vmem:[%s5 + $0x2f4] sm:$0xff]
    %v796 = vld [vmem:[%s5 + $0x2fc] sm:$0xff]
    %v797 = vld [vmem:[%s5 + $0x304] sm:$0xff]
    %v798 = vld [vmem:[%s5 + $0x30c] sm:$0xff]
    %v799 = vld [vmem:[%s5 + $0x314] sm:$0xf]
    %v800 = vld [vmem:[%s5 + $0x318] sm:$0xff]
    %v801 = vld [vmem:[%s5 + $0x320] sm:$0xff]
    %v802 = vld [vmem:[%s5 + $0x328] sm:$0xff]
    %v803 = vld [vmem:[%s5 + $0x330] sm:$0xff]
    %v804 = vld [vmem:[%s5 + $0x338] sm:$0xff]
    %v805 = vld [vmem:[%s5 + $0x340] sm:$0xff]
    %v806 = vld [vmem:[%s5 + $0x348] sm:$0xff]
    %v807 = vld [vmem:[%s5 + $0x350] sm:$0xff]
    %v808 = vld [vmem:[%s5 + $0x358] sm:$0xff]
    %v809 = vld [vmem:[%s5 + $0x360] sm:$0xff]
    %v810 = vld [vmem:[%s5 + $0x368] sm:$0xff]
    %v811 = vld [vmem:[%s5 + $0x370] sm:$0xff]
    %v812 = vld [vmem:[%s5 + $0x378] sm:$0xff]
    %v813 = vld [vmem:[%s5 + $0x380] sm:$0xff]
    %v814 = vld [vmem:[%s5 + $0x388] sm:$0xff]
    %v815 = vld [vmem:[%s5 + $0x390] sm:$0xff]
    %v816 = vld [vmem:[%s5 + $0x398] sm:$0xf]
    %v817 = vld [vmem:[%s5 + $0x39c] sm:$0xff]
    %v818 = vld [vmem:[%s5 + $0x3a4] sm:$0xff]
    %v819 = vld [vmem:[%s5 + $0x3ac] sm:$0xff]
    %v820 = vld [vmem:[%s5 + $0x3b4] sm:$0xff]
    %v821 = vld [vmem:[%s5 + $0x3bc] sm:$0xff]
    %v822 = vld [vmem:[%s5 + $0x3c4] sm:$0xff]
    %v823 = vld [vmem:[%s5 + $0x3cc] sm:$0xff]
    %v824 = vld [vmem:[%s5 + $0x3d4] sm:$0xff]
    %v825 = vld [vmem:[%s5 + $0x3dc] sm:$0xff]
    %v826 = vld [vmem:[%s5 + $0x3e4] sm:$0xff]
    %v827 = vld [vmem:[%s5 + $0x3ec] sm:$0xff]
    %v828 = vld [vmem:[%s5 + $0x3f4] sm:$0xff]
    %v829 = vld [vmem:[%s5 + $0x3fc] sm:$0xff]
    %v830 = vld [vmem:[%s5 + $0x404] sm:$0xff]
    %v831 = vld [vmem:[%s5 + $0x40c] sm:$0xff]
    %v832 = vld [vmem:[%s5 + $0x414] sm:$0xff]
    %v833 = vld [vmem:[%s5 + $0x41c] sm:$0xf]
    %v834 = vld [vmem:[%s5 + $0x420] sm:$0xff]
    %v835 = vld [vmem:[%s5 + $0x428] sm:$0xff]
    %v836 = vld [vmem:[%s5 + $0x430] sm:$0xff]
    %v837 = vld [vmem:[%s5 + $0x438] sm:$0xff]
    %v838 = vld [vmem:[%s5 + $0x440] sm:$0xff]
    %v839 = vld [vmem:[%s5 + $0x448] sm:$0xff]
    %v840 = vld [vmem:[%s5 + $0x450] sm:$0xff]
    %v841 = vld [vmem:[%s5 + $0x458] sm:$0xff]
    %v842 = vld [vmem:[%s5 + $0x460] sm:$0xff]
    %v843 = vld [vmem:[%s5 + $0x468] sm:$0xff]
    %v844 = vld [vmem:[%s5 + $0x470] sm:$0xff]
    %v845 = vld [vmem:[%s5 + $0x478] sm:$0xff]
    %v846 = vld [vmem:[%s5 + $0x480] sm:$0xff]
    %v847 = vld [vmem:[%s5 + $0x488] sm:$0xff]
    %v848 = vld [vmem:[%s5 + $0x490] sm:$0xff]
    %v849 = vld [vmem:[%s5 + $0x498] sm:$0xff]
    %v850 = vld [vmem:[%s5 + $0x4a0] sm:$0xf]
    %v851 = vld [vmem:[%s5 + $0x4a4] sm:$0xff]
    %v852 = vld [vmem:[%s5 + $0x4ac] sm:$0xff]
    %v853 = vld [vmem:[%s5 + $0x4b4] sm:$0xff]
    %v854 = vld [vmem:[%s5 + $0x4bc] sm:$0xff]
    %v855 = vld [vmem:[%s5 + $0x4c4] sm:$0xff]
    %v856 = vld [vmem:[%s5 + $0x4cc] sm:$0xff]
    %v857 = vld [vmem:[%s5 + $0x4d4] sm:$0xff]
    %v858 = vld [vmem:[%s5 + $0x4dc] sm:$0xff]
    %v859 = vld [vmem:[%s5 + $0x4e4] sm:$0xff]
    %v860 = vld [vmem:[%s5 + $0x4ec] sm:$0xff]
    %v861 = vld [vmem:[%s5 + $0x4f4] sm:$0xff]
    %v862 = vld [vmem:[%s5 + $0x4fc] sm:$0xff]
    %v863 = vld [vmem:[%s5 + $0x504] sm:$0xff]
    %v864 = vld [vmem:[%s5 + $0x50c] sm:$0xff]
    %v865 = vld [vmem:[%s5 + $0x514] sm:$0xff]
    %v866 = vld [vmem:[%s5 + $0x51c] sm:$0xff]
    %v867 = vld [vmem:[%s5 + $0x524] sm:$0xf]
    %v868 = vld [vmem:[%s5 + $0x528] sm:$0xff]
    %v869 = vld [vmem:[%s5 + $0x530] sm:$0xff]
    %v870 = vld [vmem:[%s5 + $0x538] sm:$0xff]
    %v871 = vld [vmem:[%s5 + $0x540] sm:$0xff]
    %v872 = vld [vmem:[%s5 + $0x548] sm:$0xff]
    %v873 = vld [vmem:[%s5 + $0x550] sm:$0xff]
    %v874 = vld [vmem:[%s5 + $0x558] sm:$0xff]
    %v875 = vld [vmem:[%s5 + $0x560] sm:$0xff]
    %v876 = vld [vmem:[%s5 + $0x568] sm:$0xff]
    %v877 = vld [vmem:[%s5 + $0x570] sm:$0xff]
    %v878 = vld [vmem:[%s5 + $0x578] sm:$0xff]
    %v879 = vld [vmem:[%s5 + $0x580] sm:$0xff]
    %v880 = vld [vmem:[%s5 + $0x588] sm:$0xff]
    %v881 = vld [vmem:[%s5 + $0x590] sm:$0xff]
    %v882 = vld [vmem:[%s5 + $0x598] sm:$0xff]
    %v883 = vld [vmem:[%s5 + $0x5a0] sm:$0xff]
    %v884 = vld [vmem:[%s5 + $0x5a8] sm:$0xf]
    %v885 = vld [vmem:[%s5 + $0x5ac] sm:$0xff]
    %v886 = vld [vmem:[%s5 + $0x5b4] sm:$0xff]
    %v887 = vld [vmem:[%s5 + $0x5bc] sm:$0xff]
    %v888 = vld [vmem:[%s5 + $0x5c4] sm:$0xff]
    %v889 = vld [vmem:[%s5 + $0x5cc] sm:$0xff]
    %v890 = vld [vmem:[%s5 + $0x5d4] sm:$0xff]
    %v891 = vld [vmem:[%s5 + $0x5dc] sm:$0xff]
    %v892 = vld [vmem:[%s5 + $0x5e4] sm:$0xff]
    %v893 = vld [vmem:[%s5 + $0x5ec] sm:$0xff]
    %v894 = vld [vmem:[%s5 + $0x5f4] sm:$0xff]
    %v895 = vld [vmem:[%s5 + $0x5fc] sm:$0xff]
    %v896 = vld [vmem:[%s5 + $0x604] sm:$0xff]
    %v897 = vld [vmem:[%s5 + $0x60c] sm:$0xff]
    %v898 = vld [vmem:[%s5 + $0x614] sm:$0xff]
    %v899 = vld [vmem:[%s5 + $0x61c] sm:$0xff]
    %v900 = vld [vmem:[%s5 + $0x624] sm:$0xff]
    %v901 = vld [vmem:[%s5 + $0x62c] sm:$0xf]
    %v902 = vld [vmem:[%s5 + $0x630] sm:$0xff]
    %v903 = vld [vmem:[%s5 + $0x638] sm:$0xff]
    %v904 = vld [vmem:[%s5 + $0x640] sm:$0xff]
    %v905 = vld [vmem:[%s5 + $0x648] sm:$0xff]
    %v906 = vld [vmem:[%s5 + $0x650] sm:$0xff]
    %v907 = vld [vmem:[%s5 + $0x658] sm:$0xff]
    %v908 = vld [vmem:[%s5 + $0x660] sm:$0xff]
    %v909 = vld [vmem:[%s5 + $0x668] sm:$0xff]
    %v910 = vld [vmem:[%s5 + $0x670] sm:$0xff]
    %v911 = vld [vmem:[%s5 + $0x678] sm:$0xff]
    %v912 = vld [vmem:[%s5 + $0x680] sm:$0xff]
    %v913 = vld [vmem:[%s5 + $0x688] sm:$0xff]
    %v914 = vld [vmem:[%s5 + $0x690] sm:$0xff]
    %v915 = vld [vmem:[%s5 + $0x698] sm:$0xff]
    %v916 = vld [vmem:[%s5 + $0x6a0] sm:$0xff]
    %v917 = vld [vmem:[%s5 + $0x6a8] sm:$0xff]
    %v918 = vld [vmem:[%s5 + $0x6b0] sm:$0xf]
    %v919 = vld [vmem:[%s5 + $0x6b4] sm:$0xff]
    %v920 = vld [vmem:[%s5 + $0x6bc] sm:$0xff]
    %v921 = vld [vmem:[%s5 + $0x6c4] sm:$0xff]
    %v922 = vld [vmem:[%s5 + $0x6cc] sm:$0xff]
    %v923 = vld [vmem:[%s5 + $0x6d4] sm:$0xff]
    %v924 = vld [vmem:[%s5 + $0x6dc] sm:$0xff]
    %v925 = vld [vmem:[%s5 + $0x6e4] sm:$0xff]
    %v926 = vld [vmem:[%s5 + $0x6ec] sm:$0xff]
    %v927 = vld [vmem:[%s5 + $0x6f4] sm:$0xff]
    %v928 = vld [vmem:[%s5 + $0x6fc] sm:$0xff]
    %v929 = vld [vmem:[%s5 + $0x704] sm:$0xff]
    %v930 = vld [vmem:[%s5 + $0x70c] sm:$0xff]
    %v931 = vld [vmem:[%s5 + $0x714] sm:$0xff]
    %v932 = vld [vmem:[%s5 + $0x71c] sm:$0xff]
    %v933 = vld [vmem:[%s5 + $0x724] sm:$0xff]
    %v934 = vld [vmem:[%s5 + $0x72c] sm:$0xff]
    %v935 = vld [vmem:[%s5 + $0x734] sm:$0xf]
    %v936 = vld [vmem:[%s5 + $0x738] sm:$0xff]
    %v937 = vld [vmem:[%s5 + $0x740] sm:$0xff]
    %v938 = vld [vmem:[%s5 + $0x748] sm:$0xff]
    %v939 = vld [vmem:[%s5 + $0x750] sm:$0xff]
    %v940 = vld [vmem:[%s5 + $0x758] sm:$0xff]
    %v941 = vld [vmem:[%s5 + $0x760] sm:$0xff]
    %v942 = vld [vmem:[%s5 + $0x768] sm:$0xff]
    %v943 = vld [vmem:[%s5 + $0x770] sm:$0xff]
    %v944 = vld [vmem:[%s5 + $0x778] sm:$0xff]
    %v945 = vld [vmem:[%s5 + $0x780] sm:$0xff]
    %v946 = vld [vmem:[%s5 + $0x788] sm:$0xff]
    %v947 = vld [vmem:[%s5 + $0x790] sm:$0xff]
    %v948 = vld [vmem:[%s5 + $0x798] sm:$0xff]
    %v949 = vld [vmem:[%s5 + $0x7a0] sm:$0xff]
    %v950 = vld [vmem:[%s5 + $0x7a8] sm:$0xff]
    %v951 = vld [vmem:[%s5 + $0x7b0] sm:$0xff]
    %v952 = vld [vmem:[%s5 + $0x7b8] sm:$0xf]
    %v953 = vld [vmem:[%s5 + $0x7bc] sm:$0xff]
    %v954 = vld [vmem:[%s5 + $0x7c4] sm:$0xff]
    %v955 = vld [vmem:[%s5 + $0x7cc] sm:$0xff]
    %v956 = vld [vmem:[%s5 + $0x7d4] sm:$0xff]
    %v957 = vld [vmem:[%s5 + $0x7dc] sm:$0xff]
    %v958 = vld [vmem:[%s5 + $0x7e4] sm:$0xff]
    %v959 = vld [vmem:[%s5 + $0x7ec] sm:$0xff]
    %v960 = vld [vmem:[%s5 + $0x7f4] sm:$0xff]
    %v961 = vld [vmem:[%s5 + $0x7fc] sm:$0xff]
    %v962 = vld [vmem:[%s5 + $0x804] sm:$0xff]
    %v963 = vld [vmem:[%s5 + $0x80c] sm:$0xff]
    %v964 = vld [vmem:[%s5 + $0x814] sm:$0xff]
    %v965 = vld [vmem:[%s5 + $0x81c] sm:$0xff]
    %v966 = vld [vmem:[%s5 + $0x824] sm:$0xff]
    %v967 = vld [vmem:[%s5 + $0x82c] sm:$0xff]
    %v968 = vld [vmem:[%s5 + $0x834] sm:$0xff]
    %v969 = vld [vmem:[%s5 + $0x83c] sm:$0xf]
    %v970 = vld [vmem:[%s6] sm:$0xff]
    %v971 = vld [vmem:[%s6 + $0x8] sm:$0xff]
    %v972 = vld [vmem:[%s6 + $0x10] sm:$0xff]
    %v973 = vld [vmem:[%s6 + $0x18] sm:$0xff]
    %v974 = vld [vmem:[%s6 + $0x20] sm:$0x1]
    %v980 = vperm.slane %v970, 0
    %v981 = vperm.slane %v970, 1
    %v982 = vperm.slane %v970, 2
    %v983 = vperm.slane %v970, 3
    %v984 = vperm.slane %v970, 4
    %v985 = vperm.slane %v970, 5
    %v986 = vperm.slane %v970, 6
    %v987 = vperm.slane %v970, 7
    %v988 = vperm.slane %v971, 0
    %v989 = vperm.slane %v971, 1
    %v990 = vperm.slane %v971, 2
    %v991 = vperm.slane %v971, 3
    %v992 = vperm.slane %v971, 4
    %v993 = vperm.slane %v971, 5
    %v994 = vperm.slane %v971, 6
    %v995 = vperm.slane %v971, 7
    %v996 = vperm.slane %v972, 0
    %v997 = vperm.slane %v972, 1
    %v998 = vperm.slane %v972, 2
    %v999 = vperm.slane %v972, 3
    %v1000 = vperm.slane %v972, 4
    %v1001 = vperm.slane %v972, 5
    %v1002 = vperm.slane %v972, 6
    %v1003 = vperm.slane %v972, 7
    %v1004 = vperm.slane %v973, 0
    %v1005 = vperm.slane %v973, 1
    %v1006 = vperm.slane %v973, 2
    %v1007 = vperm.slane %v973, 3
    %v1008 = vperm.slane %v973, 4
    %v1009 = vperm.slane %v973, 5
    %v1010 = vperm.slane %v973, 6
    %v1011 = vperm.slane %v973, 7
    %v1012 = vperm.slane %v974, 0
    %v1318 = vunpack.c.l.b16 %v698
    %v1319 = vunpack.c.h.b16 %v698
    %v1320 = vunpack.c.l.b16 %v699
    %v1321 = vunpack.c.h.b16 %v699
    %v1322 = vunpack.c.l.b16 %v700
    %v1323 = vunpack.c.h.b16 %v700
    %v1324 = vunpack.c.l.b16 %v701
    %v1325 = vunpack.c.h.b16 %v701
    %v1326 = vunpack.c.l.b16 %v702
    %v1327 = vunpack.c.h.b16 %v702
    %v1328 = vunpack.c.l.b16 %v703
    %v1329 = vunpack.c.h.b16 %v703
    %v1330 = vunpack.c.l.b16 %v704
    %v1331 = vunpack.c.h.b16 %v704
    %v1332 = vunpack.c.l.b16 %v705
    %v1333 = vunpack.c.h.b16 %v705
    %v1334 = vunpack.c.l.b16 %v706
    %v1335 = vunpack.c.h.b16 %v706
    %v1336 = vunpack.c.l.b16 %v707
    %v1337 = vunpack.c.h.b16 %v707
    %v1338 = vunpack.c.l.b16 %v708
    %v1339 = vunpack.c.h.b16 %v708
    %v1340 = vunpack.c.l.b16 %v709
    %v1341 = vunpack.c.h.b16 %v709
    %v1342 = vunpack.c.l.b16 %v710
    %v1343 = vunpack.c.h.b16 %v710
    %v1344 = vunpack.c.l.b16 %v711
    %v1345 = vunpack.c.h.b16 %v711
    %v1346 = vunpack.c.l.b16 %v712
    %v1347 = vunpack.c.h.b16 %v712
    %v1348 = vunpack.c.l.b16 %v713
    %v1349 = vunpack.c.h.b16 %v713
    %v1350 = vunpack.c.l.b16 %v714
    %v1351 = vunpack.c.l.b16 %v715
    %v1352 = vunpack.c.h.b16 %v715
    %v1353 = vunpack.c.l.b16 %v716
    %v1354 = vunpack.c.h.b16 %v716
    %v1355 = vunpack.c.l.b16 %v717
    %v1356 = vunpack.c.h.b16 %v717
    %v1357 = vunpack.c.l.b16 %v718
    %v1358 = vunpack.c.h.b16 %v718
    %v1359 = vunpack.c.l.b16 %v719
    %v1360 = vunpack.c.h.b16 %v719
    %v1361 = vunpack.c.l.b16 %v720
    %v1362 = vunpack.c.h.b16 %v720
    %v1363 = vunpack.c.l.b16 %v721
    %v1364 = vunpack.c.h.b16 %v721
    %v1365 = vunpack.c.l.b16 %v722
    %v1366 = vunpack.c.h.b16 %v722
    %v1367 = vunpack.c.l.b16 %v723
    %v1368 = vunpack.c.h.b16 %v723
    %v1369 = vunpack.c.l.b16 %v724
    %v1370 = vunpack.c.h.b16 %v724
    %v1371 = vunpack.c.l.b16 %v725
    %v1372 = vunpack.c.h.b16 %v725
    %v1373 = vunpack.c.l.b16 %v726
    %v1374 = vunpack.c.h.b16 %v726
    %v1375 = vunpack.c.l.b16 %v727
    %v1376 = vunpack.c.h.b16 %v727
    %v1377 = vunpack.c.l.b16 %v728
    %v1378 = vunpack.c.h.b16 %v728
    %v1379 = vunpack.c.l.b16 %v729
    %v1380 = vunpack.c.h.b16 %v729
    %v1381 = vunpack.c.l.b16 %v730
    %v1382 = vunpack.c.h.b16 %v730
    %v1383 = vunpack.c.l.b16 %v731
    %v1384 = vunpack.c.l.b16 %v732
    %v1385 = vunpack.c.h.b16 %v732
    %v1386 = vunpack.c.l.b16 %v733
    %v1387 = vunpack.c.h.b16 %v733
    %v1388 = vunpack.c.l.b16 %v734
    %v1389 = vunpack.c.h.b16 %v734
    %v1390 = vunpack.c.l.b16 %v735
    %v1391 = vunpack.c.h.b16 %v735
    %v1392 = vunpack.c.l.b16 %v736
    %v1393 = vunpack.c.h.b16 %v736
    %v1394 = vunpack.c.l.b16 %v737
    %v1395 = vunpack.c.h.b16 %v737
    %v1396 = vunpack.c.l.b16 %v738
    %v1397 = vunpack.c.h.b16 %v738
    %v1398 = vunpack.c.l.b16 %v739
    %v1399 = vunpack.c.h.b16 %v739
    %v1400 = vunpack.c.l.b16 %v740
    %v1401 = vunpack.c.h.b16 %v740
    %v1402 = vunpack.c.l.b16 %v741
    %v1403 = vunpack.c.h.b16 %v741
    %v1404 = vunpack.c.l.b16 %v742
    %v1405 = vunpack.c.h.b16 %v742
    %v1406 = vunpack.c.l.b16 %v743
    %v1407 = vunpack.c.h.b16 %v743
    %v1408 = vunpack.c.l.b16 %v744
    %v1409 = vunpack.c.h.b16 %v744
    %v1410 = vunpack.c.l.b16 %v745
    %v1411 = vunpack.c.h.b16 %v745
    %v1412 = vunpack.c.l.b16 %v746
    %v1413 = vunpack.c.h.b16 %v746
    %v1414 = vunpack.c.l.b16 %v747
    %v1415 = vunpack.c.h.b16 %v747
    %v1416 = vunpack.c.l.b16 %v748
    %v1417 = vunpack.c.l.b16 %v749
    %v1418 = vunpack.c.h.b16 %v749
    %v1419 = vunpack.c.l.b16 %v750
    %v1420 = vunpack.c.h.b16 %v750
    %v1421 = vunpack.c.l.b16 %v751
    %v1422 = vunpack.c.h.b16 %v751
    %v1423 = vunpack.c.l.b16 %v752
    %v1424 = vunpack.c.h.b16 %v752
    %v1425 = vunpack.c.l.b16 %v753
    %v1426 = vunpack.c.h.b16 %v753
    %v1427 = vunpack.c.l.b16 %v754
    %v1428 = vunpack.c.h.b16 %v754
    %v1429 = vunpack.c.l.b16 %v755
    %v1430 = vunpack.c.h.b16 %v755
    %v1431 = vunpack.c.l.b16 %v756
    %v1432 = vunpack.c.h.b16 %v756
    %v1433 = vunpack.c.l.b16 %v757
    %v1434 = vunpack.c.h.b16 %v757
    %v1435 = vunpack.c.l.b16 %v758
    %v1436 = vunpack.c.h.b16 %v758
    %v1437 = vunpack.c.l.b16 %v759
    %v1438 = vunpack.c.h.b16 %v759
    %v1439 = vunpack.c.l.b16 %v760
    %v1440 = vunpack.c.h.b16 %v760
    %v1441 = vunpack.c.l.b16 %v761
    %v1442 = vunpack.c.h.b16 %v761
    %v1443 = vunpack.c.l.b16 %v762
    %v1444 = vunpack.c.h.b16 %v762
    %v1445 = vunpack.c.l.b16 %v763
    %v1446 = vunpack.c.h.b16 %v763
    %v1447 = vunpack.c.l.b16 %v764
    %v1448 = vunpack.c.h.b16 %v764
    %v1449 = vunpack.c.l.b16 %v765
    %v1450 = vunpack.c.l.b16 %v766
    %v1451 = vunpack.c.h.b16 %v766
    %v1452 = vunpack.c.l.b16 %v767
    %v1453 = vunpack.c.h.b16 %v767
    %v1454 = vunpack.c.l.b16 %v768
    %v1455 = vunpack.c.h.b16 %v768
    %v1456 = vunpack.c.l.b16 %v769
    %v1457 = vunpack.c.h.b16 %v769
    %v1458 = vunpack.c.l.b16 %v770
    %v1459 = vunpack.c.h.b16 %v770
    %v1460 = vunpack.c.l.b16 %v771
    %v1461 = vunpack.c.h.b16 %v771
    %v1462 = vunpack.c.l.b16 %v772
    %v1463 = vunpack.c.h.b16 %v772
    %v1464 = vunpack.c.l.b16 %v773
    %v1465 = vunpack.c.h.b16 %v773
    %v1466 = vunpack.c.l.b16 %v774
    %v1467 = vunpack.c.h.b16 %v774
    %v1468 = vunpack.c.l.b16 %v775
    %v1469 = vunpack.c.h.b16 %v775
    %v1470 = vunpack.c.l.b16 %v776
    %v1471 = vunpack.c.h.b16 %v776
    %v1472 = vunpack.c.l.b16 %v777
    %v1473 = vunpack.c.h.b16 %v777
    %v1474 = vunpack.c.l.b16 %v778
    %v1475 = vunpack.c.h.b16 %v778
    %v1476 = vunpack.c.l.b16 %v779
    %v1477 = vunpack.c.h.b16 %v779
    %v1478 = vunpack.c.l.b16 %v780
    %v1479 = vunpack.c.h.b16 %v780
    %v1480 = vunpack.c.l.b16 %v781
    %v1481 = vunpack.c.h.b16 %v781
    %v1482 = vunpack.c.l.b16 %v782
    %v1483 = vunpack.c.l.b16 %v783
    %v1484 = vunpack.c.h.b16 %v783
    %v1485 = vunpack.c.l.b16 %v784
    %v1486 = vunpack.c.h.b16 %v784
    %v1487 = vunpack.c.l.b16 %v785
    %v1488 = vunpack.c.h.b16 %v785
    %v1489 = vunpack.c.l.b16 %v786
    %v1490 = vunpack.c.h.b16 %v786
    %v1491 = vunpack.c.l.b16 %v787
    %v1492 = vunpack.c.h.b16 %v787
    %v1493 = vunpack.c.l.b16 %v788
    %v1494 = vunpack.c.h.b16 %v788
    %v1495 = vunpack.c.l.b16 %v789
    %v1496 = vunpack.c.h.b16 %v789
    %v1497 = vunpack.c.l.b16 %v790
    %v1498 = vunpack.c.h.b16 %v790
    %v1499 = vunpack.c.l.b16 %v791
    %v1500 = vunpack.c.h.b16 %v791
    %v1501 = vunpack.c.l.b16 %v792
    %v1502 = vunpack.c.h.b16 %v792
    %v1503 = vunpack.c.l.b16 %v793
    %v1504 = vunpack.c.h.b16 %v793
    %v1505 = vunpack.c.l.b16 %v794
    %v1506 = vunpack.c.h.b16 %v794
    %v1507 = vunpack.c.l.b16 %v795
    %v1508 = vunpack.c.h.b16 %v795
    %v1509 = vunpack.c.l.b16 %v796
    %v1510 = vunpack.c.h.b16 %v796
    %v1511 = vunpack.c.l.b16 %v797
    %v1512 = vunpack.c.h.b16 %v797
    %v1513 = vunpack.c.l.b16 %v798
    %v1514 = vunpack.c.h.b16 %v798
    %v1515 = vunpack.c.l.b16 %v799
    %v1516 = vunpack.c.l.b16 %v800
    %v1517 = vunpack.c.h.b16 %v800
    %v1518 = vunpack.c.l.b16 %v801
    %v1519 = vunpack.c.h.b16 %v801
    %v1520 = vunpack.c.l.b16 %v802
    %v1521 = vunpack.c.h.b16 %v802
    %v1522 = vunpack.c.l.b16 %v803
    %v1523 = vunpack.c.h.b16 %v803
    %v1524 = vunpack.c.l.b16 %v804
    %v1525 = vunpack.c.h.b16 %v804
    %v1526 = vunpack.c.l.b16 %v805
    %v1527 = vunpack.c.h.b16 %v805
    %v1528 = vunpack.c.l.b16 %v806
    %v1529 = vunpack.c.h.b16 %v806
    %v1530 = vunpack.c.l.b16 %v807
    %v1531 = vunpack.c.h.b16 %v807
    %v1532 = vunpack.c.l.b16 %v808
    %v1533 = vunpack.c.h.b16 %v808
    %v1534 = vunpack.c.l.b16 %v809
    %v1535 = vunpack.c.h.b16 %v809
    %v1536 = vunpack.c.l.b16 %v810
    %v1537 = vunpack.c.h.b16 %v810
    %v1538 = vunpack.c.l.b16 %v811
    %v1539 = vunpack.c.h.b16 %v811
    %v1540 = vunpack.c.l.b16 %v812
    %v1541 = vunpack.c.h.b16 %v812
    %v1542 = vunpack.c.l.b16 %v813
    %v1543 = vunpack.c.h.b16 %v813
    %v1544 = vunpack.c.l.b16 %v814
    %v1545 = vunpack.c.h.b16 %v814
    %v1546 = vunpack.c.l.b16 %v815
    %v1547 = vunpack.c.h.b16 %v815
    %v1548 = vunpack.c.l.b16 %v816
    %v1549 = vunpack.c.l.b16 %v817
    %v1550 = vunpack.c.h.b16 %v817
    %v1551 = vunpack.c.l.b16 %v818
    %v1552 = vunpack.c.h.b16 %v818
    %v1553 = vunpack.c.l.b16 %v819
    %v1554 = vunpack.c.h.b16 %v819
    %v1555 = vunpack.c.l.b16 %v820
    %v1556 = vunpack.c.h.b16 %v820
    %v1557 = vunpack.c.l.b16 %v821
    %v1558 = vunpack.c.h.b16 %v821
    %v1559 = vunpack.c.l.b16 %v822
    %v1560 = vunpack.c.h.b16 %v822
    %v1561 = vunpack.c.l.b16 %v823
    %v1562 = vunpack.c.h.b16 %v823
    %v1563 = vunpack.c.l.b16 %v824
    %v1564 = vunpack.c.h.b16 %v824
    %v1565 = vunpack.c.l.b16 %v825
    %v1566 = vunpack.c.h.b16 %v825
    %v1567 = vunpack.c.l.b16 %v826
    %v1568 = vunpack.c.h.b16 %v826
    %v1569 = vunpack.c.l.b16 %v827
    %v1570 = vunpack.c.h.b16 %v827
    %v1571 = vunpack.c.l.b16 %v828
    %v1572 = vunpack.c.h.b16 %v828
    %v1573 = vunpack.c.l.b16 %v829
    %v1574 = vunpack.c.h.b16 %v829
    %v1575 = vunpack.c.l.b16 %v830
    %v1576 = vunpack.c.h.b16 %v830
    %v1577 = vunpack.c.l.b16 %v831
    %v1578 = vunpack.c.h.b16 %v831
    %v1579 = vunpack.c.l.b16 %v832
    %v1580 = vunpack.c.h.b16 %v832
    %v1581 = vunpack.c.l.b16 %v833
    %v1582 = vunpack.c.l.b16 %v834
    %v1583 = vunpack.c.h.b16 %v834
    %v1584 = vunpack.c.l.b16 %v835
    %v1585 = vunpack.c.h.b16 %v835
    %v1586 = vunpack.c.l.b16 %v836
    %v1587 = vunpack.c.h.b16 %v836
    %v1588 = vunpack.c.l.b16 %v837
    %v1589 = vunpack.c.h.b16 %v837
    %v1590 = vunpack.c.l.b16 %v838
    %v1591 = vunpack.c.h.b16 %v838
    %v1592 = vunpack.c.l.b16 %v839
    %v1593 = vunpack.c.h.b16 %v839
    %v1594 = vunpack.c.l.b16 %v840
    %v1595 = vunpack.c.h.b16 %v840
    %v1596 = vunpack.c.l.b16 %v841
    %v1597 = vunpack.c.h.b16 %v841
    %v1598 = vunpack.c.l.b16 %v842
    %v1599 = vunpack.c.h.b16 %v842
    %v1600 = vunpack.c.l.b16 %v843
    %v1601 = vunpack.c.h.b16 %v843
    %v1602 = vunpack.c.l.b16 %v844
    %v1603 = vunpack.c.h.b16 %v844
    %v1604 = vunpack.c.l.b16 %v845
    %v1605 = vunpack.c.h.b16 %v845
    %v1606 = vunpack.c.l.b16 %v846
    %v1607 = vunpack.c.h.b16 %v846
    %v1608 = vunpack.c.l.b16 %v847
    %v1609 = vunpack.c.h.b16 %v847
    %v1610 = vunpack.c.l.b16 %v848
    %v1611 = vunpack.c.h.b16 %v848
    %v1612 = vunpack.c.l.b16 %v849
    %v1613 = vunpack.c.h.b16 %v849
    %v1614 = vunpack.c.l.b16 %v850
    %v1615 = vunpack.c.l.b16 %v851
    %v1616 = vunpack.c.h.b16 %v851
    %v1617 = vunpack.c.l.b16 %v852
    %v1618 = vunpack.c.h.b16 %v852
    %v1619 = vunpack.c.l.b16 %v853
    %v1620 = vunpack.c.h.b16 %v853
    %v1621 = vunpack.c.l.b16 %v854
    %v1622 = vunpack.c.h.b16 %v854
    %v1623 = vunpack.c.l.b16 %v855
    %v1624 = vunpack.c.h.b16 %v855
    %v1625 = vunpack.c.l.b16 %v856
    %v1626 = vunpack.c.h.b16 %v856
    %v1627 = vunpack.c.l.b16 %v857
    %v1628 = vunpack.c.h.b16 %v857
    %v1629 = vunpack.c.l.b16 %v858
    %v1630 = vunpack.c.h.b16 %v858
    %v1631 = vunpack.c.l.b16 %v859
    %v1632 = vunpack.c.h.b16 %v859
    %v1633 = vunpack.c.l.b16 %v860
    %v1634 = vunpack.c.h.b16 %v860
    %v1635 = vunpack.c.l.b16 %v861
    %v1636 = vunpack.c.h.b16 %v861
    %v1637 = vunpack.c.l.b16 %v862
    %v1638 = vunpack.c.h.b16 %v862
    %v1639 = vunpack.c.l.b16 %v863
    %v1640 = vunpack.c.h.b16 %v863
    %v1641 = vunpack.c.l.b16 %v864
    %v1642 = vunpack.c.h.b16 %v864
    %v1643 = vunpack.c.l.b16 %v865
    %v1644 = vunpack.c.h.b16 %v865
    %v1645 = vunpack.c.l.b16 %v866
    %v1646 = vunpack.c.h.b16 %v866
    %v1647 = vunpack.c.l.b16 %v867
    %v1648 = vunpack.c.l.b16 %v868
    %v1649 = vunpack.c.h.b16 %v868
    %v1650 = vunpack.c.l.b16 %v869
    %v1651 = vunpack.c.h.b16 %v869
    %v1652 = vunpack.c.l.b16 %v870
    %v1653 = vunpack.c.h.b16 %v870
    %v1654 = vunpack.c.l.b16 %v871
    %v1655 = vunpack.c.h.b16 %v871
    %v1656 = vunpack.c.l.b16 %v872
    %v1657 = vunpack.c.h.b16 %v872
    %v1658 = vunpack.c.l.b16 %v873
    %v1659 = vunpack.c.h.b16 %v873
    %v1660 = vunpack.c.l.b16 %v874
    %v1661 = vunpack.c.h.b16 %v874
    %v1662 = vunpack.c.l.b16 %v875
    %v1663 = vunpack.c.h.b16 %v875
    %v1664 = vunpack.c.l.b16 %v876
    %v1665 = vunpack.c.h.b16 %v876
    %v1666 = vunpack.c.l.b16 %v877
    %v1667 = vunpack.c.h.b16 %v877
    %v1668 = vunpack.c.l.b16 %v878
    %v1669 = vunpack.c.h.b16 %v878
    %v1670 = vunpack.c.l.b16 %v879
    %v1671 = vunpack.c.h.b16 %v879
    %v1672 = vunpack.c.l.b16 %v880
    %v1673 = vunpack.c.h.b16 %v880
    %v1674 = vunpack.c.l.b16 %v881
    %v1675 = vunpack.c.h.b16 %v881
    %v1676 = vunpack.c.l.b16 %v882
    %v1677 = vunpack.c.h.b16 %v882
    %v1678 = vunpack.c.l.b16 %v883
    %v1679 = vunpack.c.h.b16 %v883
    %v1680 = vunpack.c.l.b16 %v884
    %v1681 = vunpack.c.l.b16 %v885
    %v1682 = vunpack.c.h.b16 %v885
    %v1683 = vunpack.c.l.b16 %v886
    %v1684 = vunpack.c.h.b16 %v886
    %v1685 = vunpack.c.l.b16 %v887
    %v1686 = vunpack.c.h.b16 %v887
    %v1687 = vunpack.c.l.b16 %v888
    %v1688 = vunpack.c.h.b16 %v888
    %v1689 = vunpack.c.l.b16 %v889
    %v1690 = vunpack.c.h.b16 %v889
    %v1691 = vunpack.c.l.b16 %v890
    %v1692 = vunpack.c.h.b16 %v890
    %v1693 = vunpack.c.l.b16 %v891
    %v1694 = vunpack.c.h.b16 %v891
    %v1695 = vunpack.c.l.b16 %v892
    %v1696 = vunpack.c.h.b16 %v892
    %v1697 = vunpack.c.l.b16 %v893
    %v1698 = vunpack.c.h.b16 %v893
    %v1699 = vunpack.c.l.b16 %v894
    %v1700 = vunpack.c.h.b16 %v894
    %v1701 = vunpack.c.l.b16 %v895
    %v1702 = vunpack.c.h.b16 %v895
    %v1703 = vunpack.c.l.b16 %v896
    %v1704 = vunpack.c.h.b16 %v896
    %v1705 = vunpack.c.l.b16 %v897
    %v1706 = vunpack.c.h.b16 %v897
    %v1707 = vunpack.c.l.b16 %v898
    %v1708 = vunpack.c.h.b16 %v898
    %v1709 = vunpack.c.l.b16 %v899
    %v1710 = vunpack.c.h.b16 %v899
    %v1711 = vunpack.c.l.b16 %v900
    %v1712 = vunpack.c.h.b16 %v900
    %v1713 = vunpack.c.l.b16 %v901
    %v1714 = vunpack.c.l.b16 %v902
    %v1715 = vunpack.c.h.b16 %v902
    %v1716 = vunpack.c.l.b16 %v903
    %v1717 = vunpack.c.h.b16 %v903
    %v1718 = vunpack.c.l.b16 %v904
    %v1719 = vunpack.c.h.b16 %v904
    %v1720 = vunpack.c.l.b16 %v905
    %v1721 = vunpack.c.h.b16 %v905
    %v1722 = vunpack.c.l.b16 %v906
    %v1723 = vunpack.c.h.b16 %v906
    %v1724 = vunpack.c.l.b16 %v907
    %v1725 = vunpack.c.h.b16 %v907
    %v1726 = vunpack.c.l.b16 %v908
    %v1727 = vunpack.c.h.b16 %v908
    %v1728 = vunpack.c.l.b16 %v909
    %v1729 = vunpack.c.h.b16 %v909
    %v1730 = vunpack.c.l.b16 %v910
    %v1731 = vunpack.c.h.b16 %v910
    %v1732 = vunpack.c.l.b16 %v911
    %v1733 = vunpack.c.h.b16 %v911
    %v1734 = vunpack.c.l.b16 %v912
    %v1735 = vunpack.c.h.b16 %v912
    %v1736 = vunpack.c.l.b16 %v913
    %v1737 = vunpack.c.h.b16 %v913
    %v1738 = vunpack.c.l.b16 %v914
    %v1739 = vunpack.c.h.b16 %v914
    %v1740 = vunpack.c.l.b16 %v915
    %v1741 = vunpack.c.h.b16 %v915
    %v1742 = vunpack.c.l.b16 %v916
    %v1743 = vunpack.c.h.b16 %v916
    %v1744 = vunpack.c.l.b16 %v917
    %v1745 = vunpack.c.h.b16 %v917
    %v1746 = vunpack.c.l.b16 %v918
    %v1747 = vunpack.c.l.b16 %v919
    %v1748 = vunpack.c.h.b16 %v919
    %v1749 = vunpack.c.l.b16 %v920
    %v1750 = vunpack.c.h.b16 %v920
    %v1751 = vunpack.c.l.b16 %v921
    %v1752 = vunpack.c.h.b16 %v921
    %v1753 = vunpack.c.l.b16 %v922
    %v1754 = vunpack.c.h.b16 %v922
    %v1755 = vunpack.c.l.b16 %v923
    %v1756 = vunpack.c.h.b16 %v923
    %v1757 = vunpack.c.l.b16 %v924
    %v1758 = vunpack.c.h.b16 %v924
    %v1759 = vunpack.c.l.b16 %v925
    %v1760 = vunpack.c.h.b16 %v925
    %v1761 = vunpack.c.l.b16 %v926
    %v1762 = vunpack.c.h.b16 %v926
    %v1763 = vunpack.c.l.b16 %v927
    %v1764 = vunpack.c.h.b16 %v927
    %v1765 = vunpack.c.l.b16 %v928
    %v1766 = vunpack.c.h.b16 %v928
    %v1767 = vunpack.c.l.b16 %v929
    %v1768 = vunpack.c.h.b16 %v929
    %v1769 = vunpack.c.l.b16 %v930
    %v1770 = vunpack.c.h.b16 %v930
    %v1771 = vunpack.c.l.b16 %v931
    %v1772 = vunpack.c.h.b16 %v931
    %v1773 = vunpack.c.l.b16 %v932
    %v1774 = vunpack.c.h.b16 %v932
    %v1775 = vunpack.c.l.b16 %v933
    %v1776 = vunpack.c.h.b16 %v933
    %v1777 = vunpack.c.l.b16 %v934
    %v1778 = vunpack.c.h.b16 %v934
    %v1779 = vunpack.c.l.b16 %v935
    %v1780 = vunpack.c.l.b16 %v936
    %v1781 = vunpack.c.h.b16 %v936
    %v1782 = vunpack.c.l.b16 %v937
    %v1783 = vunpack.c.h.b16 %v937
    %v1784 = vunpack.c.l.b16 %v938
    %v1785 = vunpack.c.h.b16 %v938
    %v1786 = vunpack.c.l.b16 %v939
    %v1787 = vunpack.c.h.b16 %v939
    %v1788 = vunpack.c.l.b16 %v940
    %v1789 = vunpack.c.h.b16 %v940
    %v1790 = vunpack.c.l.b16 %v941
    %v1791 = vunpack.c.h.b16 %v941
    %v1792 = vunpack.c.l.b16 %v942
    %v1793 = vunpack.c.h.b16 %v942
    %v1794 = vunpack.c.l.b16 %v943
    %v1795 = vunpack.c.h.b16 %v943
    %v1796 = vunpack.c.l.b16 %v944
    %v1797 = vunpack.c.h.b16 %v944
    %v1798 = vunpack.c.l.b16 %v945
    %v1799 = vunpack.c.h.b16 %v945
    %v1800 = vunpack.c.l.b16 %v946
    %v1801 = vunpack.c.h.b16 %v946
    %v1802 = vunpack.c.l.b16 %v947
    %v1803 = vunpack.c.h.b16 %v947
    %v1804 = vunpack.c.l.b16 %v948
    %v1805 = vunpack.c.h.b16 %v948
    %v1806 = vunpack.c.l.b16 %v949
    %v1807 = vunpack.c.h.b16 %v949
    %v1808 = vunpack.c.l.b16 %v950
    %v1809 = vunpack.c.h.b16 %v950
    %v1810 = vunpack.c.l.b16 %v951
    %v1811 = vunpack.c.h.b16 %v951
    %v1812 = vunpack.c.l.b16 %v952
    %v1813 = vunpack.c.l.b16 %v953
    %v1814 = vunpack.c.h.b16 %v953
    %v1815 = vunpack.c.l.b16 %v954
    %v1816 = vunpack.c.h.b16 %v954
    %v1817 = vunpack.c.l.b16 %v955
    %v1818 = vunpack.c.h.b16 %v955
    %v1819 = vunpack.c.l.b16 %v956
    %v1820 = vunpack.c.h.b16 %v956
    %v1821 = vunpack.c.l.b16 %v957
    %v1822 = vunpack.c.h.b16 %v957
    %v1823 = vunpack.c.l.b16 %v958
    %v1824 = vunpack.c.h.b16 %v958
    %v1825 = vunpack.c.l.b16 %v959
    %v1826 = vunpack.c.h.b16 %v959
    %v1827 = vunpack.c.l.b16 %v960
    %v1828 = vunpack.c.h.b16 %v960
    %v1829 = vunpack.c.l.b16 %v961
    %v1830 = vunpack.c.h.b16 %v961
    %v1831 = vunpack.c.l.b16 %v962
    %v1832 = vunpack.c.h.b16 %v962
    %v1833 = vunpack.c.l.b16 %v963
    %v1834 = vunpack.c.h.b16 %v963
    %v1835 = vunpack.c.l.b16 %v964
    %v1836 = vunpack.c.h.b16 %v964
    %v1837 = vunpack.c.l.b16 %v965
    %v1838 = vunpack.c.h.b16 %v965
    %v1839 = vunpack.c.l.b16 %v966
    %v1840 = vunpack.c.h.b16 %v966
    %v1841 = vunpack.c.l.b16 %v967
    %v1842 = vunpack.c.h.b16 %v967
    %v1843 = vunpack.c.l.b16 %v968
    %v1844 = vunpack.c.h.b16 %v968
    %v1845 = vunpack.c.l.b16 %v969
    %v1846 = vpack.c.b16 %v1351, %v1318
    %v1847 = vpack.c.b16 %v1352, %v1319
    %v1848 = vpack.c.b16 %v1353, %v1320
    %v1849 = vpack.c.b16 %v1354, %v1321
    %v1850 = vpack.c.b16 %v1355, %v1322
    %v1851 = vpack.c.b16 %v1356, %v1323
    %v1852 = vpack.c.b16 %v1357, %v1324
    %v1853 = vpack.c.b16 %v1358, %v1325
    %v1854 = vpack.c.b16 %v1359, %v1326
    %v1855 = vpack.c.b16 %v1360, %v1327
    %v1856 = vpack.c.b16 %v1361, %v1328
    %v1857 = vpack.c.b16 %v1362, %v1329
    %v1858 = vpack.c.b16 %v1363, %v1330
    %v1859 = vpack.c.b16 %v1364, %v1331
    %v1860 = vpack.c.b16 %v1365, %v1332
    %v1861 = vpack.c.b16 %v1366, %v1333
    %v1862 = vpack.c.b16 %v1367, %v1334
    %v1863 = vpack.c.b16 %v1368, %v1335
    %v1864 = vpack.c.b16 %v1369, %v1336
    %v1865 = vpack.c.b16 %v1370, %v1337
    %v1866 = vpack.c.b16 %v1371, %v1338
    %v1867 = vpack.c.b16 %v1372, %v1339
    %v1868 = vpack.c.b16 %v1373, %v1340
    %v1869 = vpack.c.b16 %v1374, %v1341
    %v1870 = vpack.c.b16 %v1375, %v1342
    %v1871 = vpack.c.b16 %v1376, %v1343
    %v1872 = vpack.c.b16 %v1377, %v1344
    %v1873 = vpack.c.b16 %v1378, %v1345
    %v1874 = vpack.c.b16 %v1379, %v1346
    %v1875 = vpack.c.b16 %v1380, %v1347
    %v1876 = vpack.c.b16 %v1381, %v1348
    %v1877 = vpack.c.b16 %v1382, %v1349
    %v1878 = vpack.c.b16 %v1383, %v1350
    %v1879 = vpack.c.b16 %v1417, %v1384
    %v1880 = vpack.c.b16 %v1418, %v1385
    %v1881 = vpack.c.b16 %v1419, %v1386
    %v1882 = vpack.c.b16 %v1420, %v1387
    %v1883 = vpack.c.b16 %v1421, %v1388
    %v1884 = vpack.c.b16 %v1422, %v1389
    %v1885 = vpack.c.b16 %v1423, %v1390
    %v1886 = vpack.c.b16 %v1424, %v1391
    %v1887 = vpack.c.b16 %v1425, %v1392
    %v1888 = vpack.c.b16 %v1426, %v1393
    %v1889 = vpack.c.b16 %v1427, %v1394
    %v1890 = vpack.c.b16 %v1428, %v1395
    %v1891 = vpack.c.b16 %v1429, %v1396
    %v1892 = vpack.c.b16 %v1430, %v1397
    %v1893 = vpack.c.b16 %v1431, %v1398
    %v1894 = vpack.c.b16 %v1432, %v1399
    %v1895 = vpack.c.b16 %v1433, %v1400
    %v1896 = vpack.c.b16 %v1434, %v1401
    %v1897 = vpack.c.b16 %v1435, %v1402
    %v1898 = vpack.c.b16 %v1436, %v1403
    %v1899 = vpack.c.b16 %v1437, %v1404
    %v1900 = vpack.c.b16 %v1438, %v1405
    %v1901 = vpack.c.b16 %v1439, %v1406
    %v1902 = vpack.c.b16 %v1440, %v1407
    %v1903 = vpack.c.b16 %v1441, %v1408
    %v1904 = vpack.c.b16 %v1442, %v1409
    %v1905 = vpack.c.b16 %v1443, %v1410
    %v1906 = vpack.c.b16 %v1444, %v1411
    %v1907 = vpack.c.b16 %v1445, %v1412
    %v1908 = vpack.c.b16 %v1446, %v1413
    %v1909 = vpack.c.b16 %v1447, %v1414
    %v1910 = vpack.c.b16 %v1448, %v1415
    %v1911 = vpack.c.b16 %v1449, %v1416
    %v1912 = vpack.c.b16 %v1483, %v1450
    %v1913 = vpack.c.b16 %v1484, %v1451
    %v1914 = vpack.c.b16 %v1485, %v1452
    %v1915 = vpack.c.b16 %v1486, %v1453
    %v1916 = vpack.c.b16 %v1487, %v1454
    %v1917 = vpack.c.b16 %v1488, %v1455
    %v1918 = vpack.c.b16 %v1489, %v1456
    %v1919 = vpack.c.b16 %v1490, %v1457
    %v1920 = vpack.c.b16 %v1491, %v1458
    %v1921 = vpack.c.b16 %v1492, %v1459
    %v1922 = vpack.c.b16 %v1493, %v1460
    %v1923 = vpack.c.b16 %v1494, %v1461
    %v1924 = vpack.c.b16 %v1495, %v1462
    %v1925 = vpack.c.b16 %v1496, %v1463
    %v1926 = vpack.c.b16 %v1497, %v1464
    %v1927 = vpack.c.b16 %v1498, %v1465
    %v1928 = vpack.c.b16 %v1499, %v1466
    %v1929 = vpack.c.b16 %v1500, %v1467
    %v1930 = vpack.c.b16 %v1501, %v1468
    %v1931 = vpack.c.b16 %v1502, %v1469
    %v1932 = vpack.c.b16 %v1503, %v1470
    %v1933 = vpack.c.b16 %v1504, %v1471
    %v1934 = vpack.c.b16 %v1505, %v1472
    %v1935 = vpack.c.b16 %v1506, %v1473
    %v1936 = vpack.c.b16 %v1507, %v1474
    %v1937 = vpack.c.b16 %v1508, %v1475
    %v1938 = vpack.c.b16 %v1509, %v1476
    %v1939 = vpack.c.b16 %v1510, %v1477
    %v1940 = vpack.c.b16 %v1511, %v1478
    %v1941 = vpack.c.b16 %v1512, %v1479
    %v1942 = vpack.c.b16 %v1513, %v1480
    %v1943 = vpack.c.b16 %v1514, %v1481
    %v1944 = vpack.c.b16 %v1515, %v1482
    %v1945 = vpack.c.b16 %v1549, %v1516
    %v1946 = vpack.c.b16 %v1550, %v1517
    %v1947 = vpack.c.b16 %v1551, %v1518
    %v1948 = vpack.c.b16 %v1552, %v1519
    %v1949 = vpack.c.b16 %v1553, %v1520
    %v1950 = vpack.c.b16 %v1554, %v1521
    %v1951 = vpack.c.b16 %v1555, %v1522
    %v1952 = vpack.c.b16 %v1556, %v1523
    %v1953 = vpack.c.b16 %v1557, %v1524
    %v1954 = vpack.c.b16 %v1558, %v1525
    %v1955 = vpack.c.b16 %v1559, %v1526
    %v1956 = vpack.c.b16 %v1560, %v1527
    %v1957 = vpack.c.b16 %v1561, %v1528
    %v1958 = vpack.c.b16 %v1562, %v1529
    %v1959 = vpack.c.b16 %v1563, %v1530
    %v1960 = vpack.c.b16 %v1564, %v1531
    %v1961 = vpack.c.b16 %v1565, %v1532
    %v1962 = vpack.c.b16 %v1566, %v1533
    %v1963 = vpack.c.b16 %v1567, %v1534
    %v1964 = vpack.c.b16 %v1568, %v1535
    %v1965 = vpack.c.b16 %v1569, %v1536
    %v1966 = vpack.c.b16 %v1570, %v1537
    %v1967 = vpack.c.b16 %v1571, %v1538
    %v1968 = vpack.c.b16 %v1572, %v1539
    %v1969 = vpack.c.b16 %v1573, %v1540
    %v1970 = vpack.c.b16 %v1574, %v1541
    %v1971 = vpack.c.b16 %v1575, %v1542
    %v1972 = vpack.c.b16 %v1576, %v1543
    %v1973 = vpack.c.b16 %v1577, %v1544
    %v1974 = vpack.c.b16 %v1578, %v1545
    %v1975 = vpack.c.b16 %v1579, %v1546
    %v1976 = vpack.c.b16 %v1580, %v1547
    %v1977 = vpack.c.b16 %v1581, %v1548
    %v1978 = vpack.c.b16 %v1615, %v1582
    %v1979 = vpack.c.b16 %v1616, %v1583
    %v1980 = vpack.c.b16 %v1617, %v1584
    %v1981 = vpack.c.b16 %v1618, %v1585
    %v1982 = vpack.c.b16 %v1619, %v1586
    %v1983 = vpack.c.b16 %v1620, %v1587
    %v1984 = vpack.c.b16 %v1621, %v1588
    %v1985 = vpack.c.b16 %v1622, %v1589
    %v1986 = vpack.c.b16 %v1623, %v1590
    %v1987 = vpack.c.b16 %v1624, %v1591
    %v1988 = vpack.c.b16 %v1625, %v1592
    %v1989 = vpack.c.b16 %v1626, %v1593
    %v1990 = vpack.c.b16 %v1627, %v1594
    %v1991 = vpack.c.b16 %v1628, %v1595
    %v1992 = vpack.c.b16 %v1629, %v1596
    %v1993 = vpack.c.b16 %v1630, %v1597
    %v1994 = vpack.c.b16 %v1631, %v1598
    %v1995 = vpack.c.b16 %v1632, %v1599
    %v1996 = vpack.c.b16 %v1633, %v1600
    %v1997 = vpack.c.b16 %v1634, %v1601
    %v1998 = vpack.c.b16 %v1635, %v1602
    %v1999 = vpack.c.b16 %v1636, %v1603
    %v2000 = vpack.c.b16 %v1637, %v1604
    %v2001 = vpack.c.b16 %v1638, %v1605
    %v2002 = vpack.c.b16 %v1639, %v1606
    %v2003 = vpack.c.b16 %v1640, %v1607
    %v2004 = vpack.c.b16 %v1641, %v1608
    %v2005 = vpack.c.b16 %v1642, %v1609
    %v2006 = vpack.c.b16 %v1643, %v1610
    %v2007 = vpack.c.b16 %v1644, %v1611
    %v2008 = vpack.c.b16 %v1645, %v1612
    %v2009 = vpack.c.b16 %v1646, %v1613
    %v2010 = vpack.c.b16 %v1647, %v1614
    %v2011 = vpack.c.b16 %v1681, %v1648
    %v2012 = vpack.c.b16 %v1682, %v1649
    %v2013 = vpack.c.b16 %v1683, %v1650
    %v2014 = vpack.c.b16 %v1684, %v1651
    %v2015 = vpack.c.b16 %v1685, %v1652
    %v2016 = vpack.c.b16 %v1686, %v1653
    %v2017 = vpack.c.b16 %v1687, %v1654
    %v2018 = vpack.c.b16 %v1688, %v1655
    %v2019 = vpack.c.b16 %v1689, %v1656
    %v2020 = vpack.c.b16 %v1690, %v1657
    %v2021 = vpack.c.b16 %v1691, %v1658
    %v2022 = vpack.c.b16 %v1692, %v1659
    %v2023 = vpack.c.b16 %v1693, %v1660
    %v2024 = vpack.c.b16 %v1694, %v1661
    %v2025 = vpack.c.b16 %v1695, %v1662
    %v2026 = vpack.c.b16 %v1696, %v1663
    %v2027 = vpack.c.b16 %v1697, %v1664
    %v2028 = vpack.c.b16 %v1698, %v1665
    %v2029 = vpack.c.b16 %v1699, %v1666
    %v2030 = vpack.c.b16 %v1700, %v1667
    %v2031 = vpack.c.b16 %v1701, %v1668
    %v2032 = vpack.c.b16 %v1702, %v1669
    %v2033 = vpack.c.b16 %v1703, %v1670
    %v2034 = vpack.c.b16 %v1704, %v1671
    %v2035 = vpack.c.b16 %v1705, %v1672
    %v2036 = vpack.c.b16 %v1706, %v1673
    %v2037 = vpack.c.b16 %v1707, %v1674
    %v2038 = vpack.c.b16 %v1708, %v1675
    %v2039 = vpack.c.b16 %v1709, %v1676
    %v2040 = vpack.c.b16 %v1710, %v1677
    %v2041 = vpack.c.b16 %v1711, %v1678
    %v2042 = vpack.c.b16 %v1712, %v1679
    %v2043 = vpack.c.b16 %v1713, %v1680
    %v2044 = vpack.c.b16 %v1747, %v1714
    %v2045 = vpack.c.b16 %v1748, %v1715
    %v2046 = vpack.c.b16 %v1749, %v1716
    %v2047 = vpack.c.b16 %v1750, %v1717
    %v2048 = vpack.c.b16 %v1751, %v1718
    %v2049 = vpack.c.b16 %v1752, %v1719
    %v2050 = vpack.c.b16 %v1753, %v1720
    %v2051 = vpack.c.b16 %v1754, %v1721
    %v2052 = vpack.c.b16 %v1755, %v1722
    %v2053 = vpack.c.b16 %v1756, %v1723
    %v2054 = vpack.c.b16 %v1757, %v1724
    %v2055 = vpack.c.b16 %v1758, %v1725
    %v2056 = vpack.c.b16 %v1759, %v1726
    %v2057 = vpack.c.b16 %v1760, %v1727
    %v2058 = vpack.c.b16 %v1761, %v1728
    %v2059 = vpack.c.b16 %v1762, %v1729
    %v2060 = vpack.c.b16 %v1763, %v1730
    %v2061 = vpack.c.b16 %v1764, %v1731
    %v2062 = vpack.c.b16 %v1765, %v1732
    %v2063 = vpack.c.b16 %v1766, %v1733
    %v2064 = vpack.c.b16 %v1767, %v1734
    %v2065 = vpack.c.b16 %v1768, %v1735
    %v2066 = vpack.c.b16 %v1769, %v1736
    %v2067 = vpack.c.b16 %v1770, %v1737
    %v2068 = vpack.c.b16 %v1771, %v1738
    %v2069 = vpack.c.b16 %v1772, %v1739
    %v2070 = vpack.c.b16 %v1773, %v1740
    %v2071 = vpack.c.b16 %v1774, %v1741
    %v2072 = vpack.c.b16 %v1775, %v1742
    %v2073 = vpack.c.b16 %v1776, %v1743
    %v2074 = vpack.c.b16 %v1777, %v1744
    %v2075 = vpack.c.b16 %v1778, %v1745
    %v2076 = vpack.c.b16 %v1779, %v1746
    %v2077 = vpack.c.b16 %v1813, %v1780
    %v2078 = vpack.c.b16 %v1814, %v1781
    %v2079 = vpack.c.b16 %v1815, %v1782
    %v2080 = vpack.c.b16 %v1816, %v1783
    %v2081 = vpack.c.b16 %v1817, %v1784
    %v2082 = vpack.c.b16 %v1818, %v1785
    %v2083 = vpack.c.b16 %v1819, %v1786
    %v2084 = vpack.c.b16 %v1820, %v1787
    %v2085 = vpack.c.b16 %v1821, %v1788
    %v2086 = vpack.c.b16 %v1822, %v1789
    %v2087 = vpack.c.b16 %v1823, %v1790
    %v2088 = vpack.c.b16 %v1824, %v1791
    %v2089 = vpack.c.b16 %v1825, %v1792
    %v2090 = vpack.c.b16 %v1826, %v1793
    %v2091 = vpack.c.b16 %v1827, %v1794
    %v2092 = vpack.c.b16 %v1828, %v1795
    %v2093 = vpack.c.b16 %v1829, %v1796
    %v2094 = vpack.c.b16 %v1830, %v1797
    %v2095 = vpack.c.b16 %v1831, %v1798
    %v2096 = vpack.c.b16 %v1832, %v1799
    %v2097 = vpack.c.b16 %v1833, %v1800
    %v2098 = vpack.c.b16 %v1834, %v1801
    %v2099 = vpack.c.b16 %v1835, %v1802
    %v2100 = vpack.c.b16 %v1836, %v1803
    %v2101 = vpack.c.b16 %v1837, %v1804
    %v2102 = vpack.c.b16 %v1838, %v1805
    %v2103 = vpack.c.b16 %v1839, %v1806
    %v2104 = vpack.c.b16 %v1840, %v1807
    %v2105 = vpack.c.b16 %v1841, %v1808
    %v2106 = vpack.c.b16 %v1842, %v1809
    %v2107 = vpack.c.b16 %v1843, %v1810
    %v2108 = vpack.c.b16 %v1844, %v1811
    %v2109 = vpack.c.b16 %v1845, %v1812
    %2374 = vmatpush.bf16.msra.mxu0 %v2077
    %2375 = vmatpush.bf16.msra.mxu0 %v2044
    %2376 = vmatpush.bf16.msra.mxu0 %v2011
    %2377 = vmatpush.bf16.msra.mxu0 %v1978
    %2378 = vmatpush.bf16.msra.mxu0 %v1945
    %2379 = vmatpush.bf16.msra.mxu0 %v1912
    %2380 = vmatpush.bf16.msra.mxu0 %v1879
    %2381 = vmatpush.bf16.msra.mxu0 %v1846
    %2382 = vmatmul.bf16.gmra.mxu0 %v697
    %v2383 = vpop.f32.mrf.mxu0
    %v2384 = vadd.f32 %v980, %v2383
    %v2385 = vpop.f32.mrf.mxu0
    %2386 = vdwg.mxu0
    %2387 = vmatpush.bf16.msra.mxu0 %v2078
    %2388 = vmatpush.bf16.msra.mxu0 %v2045
    %2389 = vmatpush.bf16.msra.mxu0 %v2012
    %2390 = vmatpush.bf16.msra.mxu0 %v1979
    %2391 = vmatpush.bf16.msra.mxu0 %v1946
    %2392 = vmatpush.bf16.msra.mxu0 %v1913
    %2393 = vmatpush.bf16.msra.mxu0 %v1880
    %2394 = vmatpush.bf16.msra.mxu0 %v1847
    %2395 = vmatmul.bf16.gmra.mxu0 %v697
    %v2396 = vpop.f32.mrf.mxu0
    %v2397 = vadd.f32 %v981, %v2396
    %v2398 = vpop.f32.mrf.mxu0
    %2399 = vdwg.mxu0
    %2400 = vmatpush.bf16.msra.mxu0 %v2079
    %2401 = vmatpush.bf16.msra.mxu0 %v2046
    %2402 = vmatpush.bf16.msra.mxu0 %v2013
    %2403 = vmatpush.bf16.msra.mxu0 %v1980
    %2404 = vmatpush.bf16.msra.mxu0 %v1947
    %2405 = vmatpush.bf16.msra.mxu0 %v1914
    %2406 = vmatpush.bf16.msra.mxu0 %v1881
    %2407 = vmatpush.bf16.msra.mxu0 %v1848
    %2408 = vmatmul.bf16.gmra.mxu0 %v697
    %v2409 = vpop.f32.mrf.mxu0
    %v2410 = vadd.f32 %v982, %v2409
    %v2411 = vpop.f32.mrf.mxu0
    %2412 = vdwg.mxu0
    %2413 = vmatpush.bf16.msra.mxu0 %v2080
    %2414 = vmatpush.bf16.msra.mxu0 %v2047
    %2415 = vmatpush.bf16.msra.mxu0 %v2014
    %2416 = vmatpush.bf16.msra.mxu0 %v1981
    %2417 = vmatpush.bf16.msra.mxu0 %v1948
    %2418 = vmatpush.bf16.msra.mxu0 %v1915
    %2419 = vmatpush.bf16.msra.mxu0 %v1882
    %2420 = vmatpush.bf16.msra.mxu0 %v1849
    %2421 = vmatmul.bf16.gmra.mxu0 %v697
    %v2422 = vpop.f32.mrf.mxu0
    %v2423 = vadd.f32 %v983, %v2422
    %v2424 = vpop.f32.mrf.mxu0
    %2425 = vdwg.mxu0
    %2426 = vmatpush.bf16.msra.mxu0 %v2081
    %2427 = vmatpush.bf16.msra.mxu0 %v2048
    %2428 = vmatpush.bf16.msra.mxu0 %v2015
    %2429 = vmatpush.bf16.msra.mxu0 %v1982
    %2430 = vmatpush.bf16.msra.mxu0 %v1949
    %2431 = vmatpush.bf16.msra.mxu0 %v1916
    %2432 = vmatpush.bf16.msra.mxu0 %v1883
    %2433 = vmatpush.bf16.msra.mxu0 %v1850
    %2434 = vmatmul.bf16.gmra.mxu0 %v697
    %v2435 = vpop.f32.mrf.mxu0
    %v2436 = vadd.f32 %v984, %v2435
    %v2437 = vpop.f32.mrf.mxu0
    %2438 = vdwg.mxu0
    %2439 = vmatpush.bf16.msra.mxu0 %v2082
    %2440 = vmatpush.bf16.msra.mxu0 %v2049
    %2441 = vmatpush.bf16.msra.mxu0 %v2016
    %2442 = vmatpush.bf16.msra.mxu0 %v1983
    %2443 = vmatpush.bf16.msra.mxu0 %v1950
    %2444 = vmatpush.bf16.msra.mxu0 %v1917
    %2445 = vmatpush.bf16.msra.mxu0 %v1884
    %2446 = vmatpush.bf16.msra.mxu0 %v1851
    %2447 = vmatmul.bf16.gmra.mxu0 %v697
    %v2448 = vpop.f32.mrf.mxu0
    %v2449 = vadd.f32 %v985, %v2448
    %v2450 = vpop.f32.mrf.mxu0
    %2451 = vdwg.mxu0
    %2452 = vmatpush.bf16.msra.mxu0 %v2083
    %2453 = vmatpush.bf16.msra.mxu0 %v2050
    %2454 = vmatpush.bf16.msra.mxu0 %v2017
    %2455 = vmatpush.bf16.msra.mxu0 %v1984
    %2456 = vmatpush.bf16.msra.mxu0 %v1951
    %2457 = vmatpush.bf16.msra.mxu0 %v1918
    %2458 = vmatpush.bf16.msra.mxu0 %v1885
    %2459 = vmatpush.bf16.msra.mxu0 %v1852
    %2460 = vmatmul.bf16.gmra.mxu0 %v697
    %v2461 = vpop.f32.mrf.mxu0
    %v2462 = vadd.f32 %v986, %v2461
    %v2463 = vpop.f32.mrf.mxu0
    %2464 = vdwg.mxu0
    %2465 = vmatpush.bf16.msra.mxu0 %v2084
    %2466 = vmatpush.bf16.msra.mxu0 %v2051
    %2467 = vmatpush.bf16.msra.mxu0 %v2018
    %2468 = vmatpush.bf16.msra.mxu0 %v1985
    %2469 = vmatpush.bf16.msra.mxu0 %v1952
    %2470 = vmatpush.bf16.msra.mxu0 %v1919
    %2471 = vmatpush.bf16.msra.mxu0 %v1886
    %2472 = vmatpush.bf16.msra.mxu0 %v1853
    %2473 = vmatmul.bf16.gmra.mxu0 %v697
    %v2474 = vpop.f32.mrf.mxu0
    %v2475 = vadd.f32 %v987, %v2474
    %v2476 = vpop.f32.mrf.mxu0
    %2477 = vdwg.mxu0
    %2478 = vmatpush.bf16.msra.mxu0 %v2085
    %2479 = vmatpush.bf16.msra.mxu0 %v2052
    %2480 = vmatpush.bf16.msra.mxu0 %v2019
    %2481 = vmatpush.bf16.msra.mxu0 %v1986
    %2482 = vmatpush.bf16.msra.mxu0 %v1953
    %2483 = vmatpush.bf16.msra.mxu0 %v1920
    %2484 = vmatpush.bf16.msra.mxu0 %v1887
    %2485 = vmatpush.bf16.msra.mxu0 %v1854
    %2486 = vmatmul.bf16.gmra.mxu0 %v697
    %v2487 = vpop.f32.mrf.mxu0
    %v2488 = vadd.f32 %v988, %v2487
    %v2489 = vpop.f32.mrf.mxu0
    %2490 = vdwg.mxu0
    %2491 = vmatpush.bf16.msra.mxu0 %v2086
    %2492 = vmatpush.bf16.msra.mxu0 %v2053
    %2493 = vmatpush.bf16.msra.mxu0 %v2020
    %2494 = vmatpush.bf16.msra.mxu0 %v1987
    %2495 = vmatpush.bf16.msra.mxu0 %v1954
    %2496 = vmatpush.bf16.msra.mxu0 %v1921
    %2497 = vmatpush.bf16.msra.mxu0 %v1888
    %2498 = vmatpush.bf16.msra.mxu0 %v1855
    %2499 = vmatmul.bf16.gmra.mxu0 %v697
    %v2500 = vpop.f32.mrf.mxu0
    %v2501 = vadd.f32 %v989, %v2500
    %v2502 = vpop.f32.mrf.mxu0
    %2503 = vdwg.mxu0
    %2504 = vmatpush.bf16.msra.mxu0 %v2087
    %2505 = vmatpush.bf16.msra.mxu0 %v2054
    %2506 = vmatpush.bf16.msra.mxu0 %v2021
    %2507 = vmatpush.bf16.msra.mxu0 %v1988
    %2508 = vmatpush.bf16.msra.mxu0 %v1955
    %2509 = vmatpush.bf16.msra.mxu0 %v1922
    %2510 = vmatpush.bf16.msra.mxu0 %v1889
    %2511 = vmatpush.bf16.msra.mxu0 %v1856
    %2512 = vmatmul.bf16.gmra.mxu0 %v697
    %v2513 = vpop.f32.mrf.mxu0
    %v2514 = vadd.f32 %v990, %v2513
    %v2515 = vpop.f32.mrf.mxu0
    %2516 = vdwg.mxu0
    %2517 = vmatpush.bf16.msra.mxu0 %v2088
    %2518 = vmatpush.bf16.msra.mxu0 %v2055
    %2519 = vmatpush.bf16.msra.mxu0 %v2022
    %2520 = vmatpush.bf16.msra.mxu0 %v1989
    %2521 = vmatpush.bf16.msra.mxu0 %v1956
    %2522 = vmatpush.bf16.msra.mxu0 %v1923
    %2523 = vmatpush.bf16.msra.mxu0 %v1890
    %2524 = vmatpush.bf16.msra.mxu0 %v1857
    %2525 = vmatmul.bf16.gmra.mxu0 %v697
    %v2526 = vpop.f32.mrf.mxu0
    %v2527 = vadd.f32 %v991, %v2526
    %v2528 = vpop.f32.mrf.mxu0
    %2529 = vdwg.mxu0
    %2530 = vmatpush.bf16.msra.mxu0 %v2089
    %2531 = vmatpush.bf16.msra.mxu0 %v2056
    %2532 = vmatpush.bf16.msra.mxu0 %v2023
    %2533 = vmatpush.bf16.msra.mxu0 %v1990
    %2534 = vmatpush.bf16.msra.mxu0 %v1957
    %2535 = vmatpush.bf16.msra.mxu0 %v1924
    %2536 = vmatpush.bf16.msra.mxu0 %v1891
    %2537 = vmatpush.bf16.msra.mxu0 %v1858
    %2538 = vmatmul.bf16.gmra.mxu0 %v697
    %v2539 = vpop.f32.mrf.mxu0
    %v2540 = vadd.f32 %v992, %v2539
    %v2541 = vpop.f32.mrf.mxu0
    %2542 = vdwg.mxu0
    %2543 = vmatpush.bf16.msra.mxu0 %v2090
    %2544 = vmatpush.bf16.msra.mxu0 %v2057
    %2545 = vmatpush.bf16.msra.mxu0 %v2024
    %2546 = vmatpush.bf16.msra.mxu0 %v1991
    %2547 = vmatpush.bf16.msra.mxu0 %v1958
    %2548 = vmatpush.bf16.msra.mxu0 %v1925
    %2549 = vmatpush.bf16.msra.mxu0 %v1892
    %2550 = vmatpush.bf16.msra.mxu0 %v1859
    %2551 = vmatmul.bf16.gmra.mxu0 %v697
    %v2552 = vpop.f32.mrf.mxu0
    %v2553 = vadd.f32 %v993, %v2552
    %v2554 = vpop.f32.mrf.mxu0
    %2555 = vdwg.mxu0
    %2556 = vmatpush.bf16.msra.mxu0 %v2091
    %2557 = vmatpush.bf16.msra.mxu0 %v2058
    %2558 = vmatpush.bf16.msra.mxu0 %v2025
    %2559 = vmatpush.bf16.msra.mxu0 %v1992
    %2560 = vmatpush.bf16.msra.mxu0 %v1959
    %2561 = vmatpush.bf16.msra.mxu0 %v1926
    %2562 = vmatpush.bf16.msra.mxu0 %v1893
    %2563 = vmatpush.bf16.msra.mxu0 %v1860
    %2564 = vmatmul.bf16.gmra.mxu0 %v697
    %v2565 = vpop.f32.mrf.mxu0
    %v2566 = vadd.f32 %v994, %v2565
    %v2567 = vpop.f32.mrf.mxu0
    %2568 = vdwg.mxu0
    %2569 = vmatpush.bf16.msra.mxu0 %v2092
    %2570 = vmatpush.bf16.msra.mxu0 %v2059
    %2571 = vmatpush.bf16.msra.mxu0 %v2026
    %2572 = vmatpush.bf16.msra.mxu0 %v1993
    %2573 = vmatpush.bf16.msra.mxu0 %v1960
    %2574 = vmatpush.bf16.msra.mxu0 %v1927
    %2575 = vmatpush.bf16.msra.mxu0 %v1894
    %2576 = vmatpush.bf16.msra.mxu0 %v1861
    %2577 = vmatmul.bf16.gmra.mxu0 %v697
    %v2578 = vpop.f32.mrf.mxu0
    %v2579 = vadd.f32 %v995, %v2578
    %v2580 = vpop.f32.mrf.mxu0
    %2581 = vdwg.mxu0
    %2582 = vmatpush.bf16.msra.mxu0 %v2093
    %2583 = vmatpush.bf16.msra.mxu0 %v2060
    %2584 = vmatpush.bf16.msra.mxu0 %v2027
    %2585 = vmatpush.bf16.msra.mxu0 %v1994
    %2586 = vmatpush.bf16.msra.mxu0 %v1961
    %2587 = vmatpush.bf16.msra.mxu0 %v1928
    %2588 = vmatpush.bf16.msra.mxu0 %v1895
    %2589 = vmatpush.bf16.msra.mxu0 %v1862
    %2590 = vmatmul.bf16.gmra.mxu0 %v697
    %v2591 = vpop.f32.mrf.mxu0
    %v2592 = vadd.f32 %v996, %v2591
    %v2593 = vpop.f32.mrf.mxu0
    %2594 = vdwg.mxu0
    %2595 = vmatpush.bf16.msra.mxu0 %v2094
    %2596 = vmatpush.bf16.msra.mxu0 %v2061
    %2597 = vmatpush.bf16.msra.mxu0 %v2028
    %2598 = vmatpush.bf16.msra.mxu0 %v1995
    %2599 = vmatpush.bf16.msra.mxu0 %v1962
    %2600 = vmatpush.bf16.msra.mxu0 %v1929
    %2601 = vmatpush.bf16.msra.mxu0 %v1896
    %2602 = vmatpush.bf16.msra.mxu0 %v1863
    %2603 = vmatmul.bf16.gmra.mxu0 %v697
    %v2604 = vpop.f32.mrf.mxu0
    %v2605 = vadd.f32 %v997, %v2604
    %v2606 = vpop.f32.mrf.mxu0
    %2607 = vdwg.mxu0
    %2608 = vmatpush.bf16.msra.mxu0 %v2095
    %2609 = vmatpush.bf16.msra.mxu0 %v2062
    %2610 = vmatpush.bf16.msra.mxu0 %v2029
    %2611 = vmatpush.bf16.msra.mxu0 %v1996
    %2612 = vmatpush.bf16.msra.mxu0 %v1963
    %2613 = vmatpush.bf16.msra.mxu0 %v1930
    %2614 = vmatpush.bf16.msra.mxu0 %v1897
    %2615 = vmatpush.bf16.msra.mxu0 %v1864
    %2616 = vmatmul.bf16.gmra.mxu0 %v697
    %v2617 = vpop.f32.mrf.mxu0
    %v2618 = vadd.f32 %v998, %v2617
    %v2619 = vpop.f32.mrf.mxu0
    %2620 = vdwg.mxu0
    %2621 = vmatpush.bf16.msra.mxu0 %v2096
    %2622 = vmatpush.bf16.msra.mxu0 %v2063
    %2623 = vmatpush.bf16.msra.mxu0 %v2030
    %2624 = vmatpush.bf16.msra.mxu0 %v1997
    %2625 = vmatpush.bf16.msra.mxu0 %v1964
    %2626 = vmatpush.bf16.msra.mxu0 %v1931
    %2627 = vmatpush.bf16.msra.mxu0 %v1898
    %2628 = vmatpush.bf16.msra.mxu0 %v1865
    %2629 = vmatmul.bf16.gmra.mxu0 %v697
    %v2630 = vpop.f32.mrf.mxu0
    %v2631 = vadd.f32 %v999, %v2630
    %v2632 = vpop.f32.mrf.mxu0
    %2633 = vdwg.mxu0
    %2634 = vmatpush.bf16.msra.mxu0 %v2097
    %2635 = vmatpush.bf16.msra.mxu0 %v2064
    %2636 = vmatpush.bf16.msra.mxu0 %v2031
    %2637 = vmatpush.bf16.msra.mxu0 %v1998
    %2638 = vmatpush.bf16.msra.mxu0 %v1965
    %2639 = vmatpush.bf16.msra.mxu0 %v1932
    %2640 = vmatpush.bf16.msra.mxu0 %v1899
    %2641 = vmatpush.bf16.msra.mxu0 %v1866
    %2642 = vmatmul.bf16.gmra.mxu0 %v697
    %v2643 = vpop.f32.mrf.mxu0
    %v2644 = vadd.f32 %v1000, %v2643
    %v2645 = vpop.f32.mrf.mxu0
    %2646 = vdwg.mxu0
    %2647 = vmatpush.bf16.msra.mxu0 %v2098
    %2648 = vmatpush.bf16.msra.mxu0 %v2065
    %2649 = vmatpush.bf16.msra.mxu0 %v2032
    %2650 = vmatpush.bf16.msra.mxu0 %v1999
    %2651 = vmatpush.bf16.msra.mxu0 %v1966
    %2652 = vmatpush.bf16.msra.mxu0 %v1933
    %2653 = vmatpush.bf16.msra.mxu0 %v1900
    %2654 = vmatpush.bf16.msra.mxu0 %v1867
    %2655 = vmatmul.bf16.gmra.mxu0 %v697
    %v2656 = vpop.f32.mrf.mxu0
    %v2657 = vadd.f32 %v1001, %v2656
    %v2658 = vpop.f32.mrf.mxu0
    %2659 = vdwg.mxu0
    %2660 = vmatpush.bf16.msra.mxu0 %v2099
    %2661 = vmatpush.bf16.msra.mxu0 %v2066
    %2662 = vmatpush.bf16.msra.mxu0 %v2033
    %2663 = vmatpush.bf16.msra.mxu0 %v2000
    %2664 = vmatpush.bf16.msra.mxu0 %v1967
    %2665 = vmatpush.bf16.msra.mxu0 %v1934
    %2666 = vmatpush.bf16.msra.mxu0 %v1901
    %2667 = vmatpush.bf16.msra.mxu0 %v1868
    %2668 = vmatmul.bf16.gmra.mxu0 %v697
    %v2669 = vpop.f32.mrf.mxu0
    %v2670 = vadd.f32 %v1002, %v2669
    %v2671 = vpop.f32.mrf.mxu0
    %2672 = vdwg.mxu0
    %2673 = vmatpush.bf16.msra.mxu0 %v2100
    %2674 = vmatpush.bf16.msra.mxu0 %v2067
    %2675 = vmatpush.bf16.msra.mxu0 %v2034
    %2676 = vmatpush.bf16.msra.mxu0 %v2001
    %2677 = vmatpush.bf16.msra.mxu0 %v1968
    %2678 = vmatpush.bf16.msra.mxu0 %v1935
    %2679 = vmatpush.bf16.msra.mxu0 %v1902
    %2680 = vmatpush.bf16.msra.mxu0 %v1869
    %2681 = vmatmul.bf16.gmra.mxu0 %v697
    %v2682 = vpop.f32.mrf.mxu0
    %v2683 = vadd.f32 %v1003, %v2682
    %v2684 = vpop.f32.mrf.mxu0
    %2685 = vdwg.mxu0
    %2686 = vmatpush.bf16.msra.mxu0 %v2101
    %2687 = vmatpush.bf16.msra.mxu0 %v2068
    %2688 = vmatpush.bf16.msra.mxu0 %v2035
    %2689 = vmatpush.bf16.msra.mxu0 %v2002
    %2690 = vmatpush.bf16.msra.mxu0 %v1969
    %2691 = vmatpush.bf16.msra.mxu0 %v1936
    %2692 = vmatpush.bf16.msra.mxu0 %v1903
    %2693 = vmatpush.bf16.msra.mxu0 %v1870
    %2694 = vmatmul.bf16.gmra.mxu0 %v697
    %v2695 = vpop.f32.mrf.mxu0
    %v2696 = vadd.f32 %v1004, %v2695
    %v2697 = vpop.f32.mrf.mxu0
    %2698 = vdwg.mxu0
    %2699 = vmatpush.bf16.msra.mxu0 %v2102
    %2700 = vmatpush.bf16.msra.mxu0 %v2069
    %2701 = vmatpush.bf16.msra.mxu0 %v2036
    %2702 = vmatpush.bf16.msra.mxu0 %v2003
    %2703 = vmatpush.bf16.msra.mxu0 %v1970
    %2704 = vmatpush.bf16.msra.mxu0 %v1937
    %2705 = vmatpush.bf16.msra.mxu0 %v1904
    %2706 = vmatpush.bf16.msra.mxu0 %v1871
    %2707 = vmatmul.bf16.gmra.mxu0 %v697
    %v2708 = vpop.f32.mrf.mxu0
    %v2709 = vadd.f32 %v1005, %v2708
    %v2710 = vpop.f32.mrf.mxu0
    %2711 = vdwg.mxu0
    %2712 = vmatpush.bf16.msra.mxu0 %v2103
    %2713 = vmatpush.bf16.msra.mxu0 %v2070
    %2714 = vmatpush.bf16.msra.mxu0 %v2037
    %2715 = vmatpush.bf16.msra.mxu0 %v2004
    %2716 = vmatpush.bf16.msra.mxu0 %v1971
    %2717 = vmatpush.bf16.msra.mxu0 %v1938
    %2718 = vmatpush.bf16.msra.mxu0 %v1905
    %2719 = vmatpush.bf16.msra.mxu0 %v1872
    %2720 = vmatmul.bf16.gmra.mxu0 %v697
    %v2721 = vpop.f32.mrf.mxu0
    %v2722 = vadd.f32 %v1006, %v2721
    %v2723 = vpop.f32.mrf.mxu0
    %2724 = vdwg.mxu0
    %2725 = vmatpush.bf16.msra.mxu0 %v2104
    %2726 = vmatpush.bf16.msra.mxu0 %v2071
    %2727 = vmatpush.bf16.msra.mxu0 %v2038
    %2728 = vmatpush.bf16.msra.mxu0 %v2005
    %2729 = vmatpush.bf16.msra.mxu0 %v1972
    %2730 = vmatpush.bf16.msra.mxu0 %v1939
    %2731 = vmatpush.bf16.msra.mxu0 %v1906
    %2732 = vmatpush.bf16.msra.mxu0 %v1873
    %2733 = vmatmul.bf16.gmra.mxu0 %v697
    %v2734 = vpop.f32.mrf.mxu0
    %v2735 = vadd.f32 %v1007, %v2734
    %v2736 = vpop.f32.mrf.mxu0
    %2737 = vdwg.mxu0
    %2738 = vmatpush.bf16.msra.mxu0 %v2105
    %2739 = vmatpush.bf16.msra.mxu0 %v2072
    %2740 = vmatpush.bf16.msra.mxu0 %v2039
    %2741 = vmatpush.bf16.msra.mxu0 %v2006
    %2742 = vmatpush.bf16.msra.mxu0 %v1973
    %2743 = vmatpush.bf16.msra.mxu0 %v1940
    %2744 = vmatpush.bf16.msra.mxu0 %v1907
    %2745 = vmatpush.bf16.msra.mxu0 %v1874
    %2746 = vmatmul.bf16.gmra.mxu0 %v697
    %v2747 = vpop.f32.mrf.mxu0
    %v2748 = vadd.f32 %v1008, %v2747
    %v2749 = vpop.f32.mrf.mxu0
    %2750 = vdwg.mxu0
    %2751 = vmatpush.bf16.msra.mxu0 %v2106
    %2752 = vmatpush.bf16.msra.mxu0 %v2073
    %2753 = vmatpush.bf16.msra.mxu0 %v2040
    %2754 = vmatpush.bf16.msra.mxu0 %v2007
    %2755 = vmatpush.bf16.msra.mxu0 %v1974
    %2756 = vmatpush.bf16.msra.mxu0 %v1941
    %2757 = vmatpush.bf16.msra.mxu0 %v1908
    %2758 = vmatpush.bf16.msra.mxu0 %v1875
    %2759 = vmatmul.bf16.gmra.mxu0 %v697
    %v2760 = vpop.f32.mrf.mxu0
    %v2761 = vadd.f32 %v1009, %v2760
    %v2762 = vpop.f32.mrf.mxu0
    %2763 = vdwg.mxu0
    %2764 = vmatpush.bf16.msra.mxu0 %v2107
    %2765 = vmatpush.bf16.msra.mxu0 %v2074
    %2766 = vmatpush.bf16.msra.mxu0 %v2041
    %2767 = vmatpush.bf16.msra.mxu0 %v2008
    %2768 = vmatpush.bf16.msra.mxu0 %v1975
    %2769 = vmatpush.bf16.msra.mxu0 %v1942
    %2770 = vmatpush.bf16.msra.mxu0 %v1909
    %2771 = vmatpush.bf16.msra.mxu0 %v1876
    %2772 = vmatmul.bf16.gmra.mxu0 %v697
    %v2773 = vpop.f32.mrf.mxu0
    %v2774 = vadd.f32 %v1010, %v2773
    %v2775 = vpop.f32.mrf.mxu0
    %2776 = vdwg.mxu0
    %2777 = vmatpush.bf16.msra.mxu0 %v2108
    %2778 = vmatpush.bf16.msra.mxu0 %v2075
    %2779 = vmatpush.bf16.msra.mxu0 %v2042
    %2780 = vmatpush.bf16.msra.mxu0 %v2009
    %2781 = vmatpush.bf16.msra.mxu0 %v1976
    %2782 = vmatpush.bf16.msra.mxu0 %v1943
    %2783 = vmatpush.bf16.msra.mxu0 %v1910
    %2784 = vmatpush.bf16.msra.mxu0 %v1877
    %2785 = vmatmul.bf16.gmra.mxu0 %v697
    %v2786 = vpop.f32.mrf.mxu0
    %v2787 = vadd.f32 %v1011, %v2786
    %v2788 = vpop.f32.mrf.mxu0
    %2789 = vdwg.mxu0
    %2790 = vmatpush.bf16.msra.mxu0 %v2109
    %2791 = vmatpush.bf16.msra.mxu0 %v2076
    %2792 = vmatpush.bf16.msra.mxu0 %v2043
    %2793 = vmatpush.bf16.msra.mxu0 %v2010
    %2794 = vmatpush.bf16.msra.mxu0 %v1977
    %2795 = vmatpush.bf16.msra.mxu0 %v1944
    %2796 = vmatpush.bf16.msra.mxu0 %v1911
    %2797 = vmatpush.bf16.msra.mxu0 %v1878
    %2798 = vmatmul.bf16.gmra.mxu0 %v697
    %v2799 = vpop.f32.mrf.mxu0
    %v2800 = vadd.f32 %v1012, %v2799
    %v2801 = vpop.f32.mrf.mxu0
    %2802 = vdwg.mxu0
    %2803 = vst [vmem:[#allocation2] sm:$0xff] %v2384
    %2804 = vst [vmem:[#allocation2 + $0x8] sm:$0xff] %v2397
    %2805 = vst [vmem:[#allocation2 + $0x10] sm:$0xff] %v2410
    %2806 = vst [vmem:[#allocation2 + $0x18] sm:$0xff] %v2423
    %2807 = vst [vmem:[#allocation2 + $0x20] sm:$0xff] %v2436
    %2808 = vst [vmem:[#allocation2 + $0x28] sm:$0xff] %v2449
    %2809 = vst [vmem:[#allocation2 + $0x30] sm:$0xff] %v2462
    %2810 = vst [vmem:[#allocation2 + $0x38] sm:$0xff] %v2475
    %2811 = vst [vmem:[#allocation2 + $0x40] sm:$0xff] %v2488
    %2812 = vst [vmem:[#allocation2 + $0x48] sm:$0xff] %v2501
    %2813 = vst [vmem:[#allocation2 + $0x50] sm:$0xff] %v2514
    %2814 = vst [vmem:[#allocation2 + $0x58] sm:$0xff] %v2527
    %2815 = vst [vmem:[#allocation2 + $0x60] sm:$0xff] %v2540
    %2816 = vst [vmem:[#allocation2 + $0x68] sm:$0xff] %v2553
    %2817 = vst [vmem:[#allocation2 + $0x70] sm:$0xff] %v2566
    %2818 = vst [vmem:[#allocation2 + $0x78] sm:$0xff] %v2579
    %2819 = vst [vmem:[#allocation2 + $0x80] sm:$0xff] %v2592
    %2820 = vst [vmem:[#allocation2 + $0x88] sm:$0xff] %v2605
    %2821 = vst [vmem:[#allocation2 + $0x90] sm:$0xff] %v2618
    %2822 = vst [vmem:[#allocation2 + $0x98] sm:$0xff] %v2631
    %2823 = vst [vmem:[#allocation2 + $0xa0] sm:$0xff] %v2644
    %2824 = vst [vmem:[#allocation2 + $0xa8] sm:$0xff] %v2657
    %2825 = vst [vmem:[#allocation2 + $0xb0] sm:$0xff] %v2670
    %2826 = vst [vmem:[#allocation2 + $0xb8] sm:$0xff] %v2683
    %2827 = vst [vmem:[#allocation2 + $0xc0] sm:$0xff] %v2696
    %2828 = vst [vmem:[#allocation2 + $0xc8] sm:$0xff] %v2709
    %2829 = vst [vmem:[#allocation2 + $0xd0] sm:$0xff] %v2722
    %2830 = vst [vmem:[#allocation2 + $0xd8] sm:$0xff] %v2735
    %2831 = vst [vmem:[#allocation2 + $0xe0] sm:$0xff] %v2748
    %2832 = vst [vmem:[#allocation2 + $0xe8] sm:$0xff] %v2761
    %2833 = vst [vmem:[#allocation2 + $0xf0] sm:$0xff] %v2774
    %2834 = vst [vmem:[#allocation2 + $0xf8] sm:$0xff] %v2787
    %vm2835 = vcmask 113664
    %2836 = vst.msk [vmem:[#allocation2 + $0x100] sm:$0xff] %vm2835, %v2800
    // Predicated region
    $region30: #{tpu_custom_call.1} parent=1 // pred_check
      _
    $region31: #{tpu_custom_call.1} parent=1 // pred_check_branch
      %2838 = sbr.rel (0) target = $region33
    $region32: #{tpu_custom_call.1} parent=1 // pred_region
      %2840 = vsyncadd [#allocation3], 0
      %s2842 = sshll.u32 [#allocation2], 4
      %s2843 = int_to_ptr.vmem [resolvable:$true] %s2842
      %s2844 = sshll.u32 %s7, 4
      %s2845 = int_to_ptr.hbm [resolvable:$true] %s2844
      %2847 = dma.vmem_to_hbm [thread:$0]  %s2843, 4224, %s2845, [#allocation3]
    $region33: #{tpu_custom_call.1} parent=1 // pred_fallthru
      _
    // Predicated region
    $region34: #{tpu_custom_call.1} parent=1 // pred_check
      _
    $region35: #{tpu_custom_call.1} parent=1 // pred_check_branch
      %2849 = sbr.rel (0) target = $region37
    $region36: #{tpu_custom_call.1} parent=1 // pred_region
      %2851 = dma.done [#allocation3], 4224
    $region37: #{tpu_custom_call.1} parent=1 // pred_fallthru
      _
    %2852 = vsyncpa [#allocation3], 1

// kernel: tpu_custom_call.1
$region0: #{tpu_custom_call.1}
  #allocation0 [shape = 'u32[]', space=smem, size = 0x4, offset = 0x4, fixed_abs, tag = 'smem constant byte address 0x4 - core index']
  #allocation1 [shape = 'u32[72,128]{1,0:T(1,128)}', space=vmem, size = 0x9000, scoped, tag = 'internal scratch']
  %s0 = inlined_call_operand.vmem [shape: bf16[8,896], index: 0, kind: input, shape index: {}]
  %s1 = inlined_call_operand.vmem [shape: bf16[896,128], index: 1, kind: input, shape index: {}]
  %s2 = inlined_call_operand.vmem [shape: f32[1,128], index: 2, kind: input, shape index: {}]
  %s3 = inlined_call_operand.vmem [shape: bf16[128,128], index: 3, kind: input, shape index: {}]
  %s4 = inlined_call_operand.vmem [shape: f32[1,128], index: 4, kind: input, shape index: {}]
  %s5 = inlined_call_operand.vmem [shape: bf16[128,4110], index: 5, kind: input, shape index: {}]
  %s6 = inlined_call_operand.vmem [shape: f32[1,4110], index: 6, kind: input, shape index: {}]
  %s7 = inlined_call_operand.hbm [shape: f32[8,4110], index: 7, kind: output, shape index: {}]
  %s8 = sld [smem:[#allocation0]]
  $region38: #{tpu_custom_call.1} parent=0
    _
  %s10 = ssub.s32 1, %s8
  %s11 = scalar_select 0, %s10, %s8
  $region1: #{tpu_custom_call.1} parent=0
    #allocation2 [shape = 'u8[135168]{0}', space=vmem, size = 0x21000, scoped, tag = 'output window, operand 0, single buffered']
    #allocation3 [shape = 's32[1]{0}', space=sflag, size = 0x4, scoped, tag = 'scoped memory for tpu_custom_call.1']
    %12 = vsyncpa [#allocation3], 0
    // Predicated region
    $region2: #{tpu_custom_call.1} parent=1 // pred_check
      _
    $region3: #{tpu_custom_call.1} parent=1 // pred_check_branch
      %14 = sbr.rel (0) target = $region5
    $region4: #{tpu_custom_call.1} parent=1 // pred_region
      _
    $region5: #{tpu_custom_call.1} parent=1 // pred_fallthru
      _
    // Predicated region
    $region6: #{tpu_custom_call.1} parent=1 // pred_check
      _
    $region7: #{tpu_custom_call.1} parent=1 // pred_check_branch
      %16 = sbr.rel (0) target = $region9
    $region8: #{tpu_custom_call.1} parent=1 // pred_region
      _
    $region9: #{tpu_custom_call.1} parent=1 // pred_fallthru
      _
    // Predicated region
    $region10: #{tpu_custom_call.1} parent=1 // pred_check
      _
    $region11: #{tpu_custom_call.1} parent=1 // pred_check_branch
      %18 = sbr.rel (0) target = $region13
    $region12: #{tpu_custom_call.1} parent=1 // pred_region
      _
    $region13: #{tpu_custom_call.1} parent=1 // pred_fallthru
      _
    // Predicated region
    $region14: #{tpu_custom_call.1} parent=1 // pred_check
      _
    $region15: #{tpu_custom_call.1} parent=1 // pred_check_branch
      %20 = sbr.rel (0) target = $region17
    $region16: #{tpu_custom_call.1} parent=1 // pred_region
      _
    $region17: #{tpu_custom_call.1} parent=1 // pred_fallthru
      _
    // Predicated region
    $region18: #{tpu_custom_call.1} parent=1 // pred_check
      _
    $region19: #{tpu_custom_call.1} parent=1 // pred_check_branch
      %22 = sbr.rel (0) target = $region21
    $region20: #{tpu_custom_call.1} parent=1 // pred_region
      _
    $region21: #{tpu_custom_call.1} parent=1 // pred_fallthru
      _
    // Predicated region
    $region22: #{tpu_custom_call.1} parent=1 // pred_check
      _
    $region23: #{tpu_custom_call.1} parent=1 // pred_check_branch
      %24 = sbr.rel (0) target = $region25
    $region24: #{tpu_custom_call.1} parent=1 // pred_region
      _
    $region25: #{tpu_custom_call.1} parent=1 // pred_fallthru
      _
    // Predicated region
    $region26: #{tpu_custom_call.1} parent=1 // pred_check
      _
    $region27: #{tpu_custom_call.1} parent=1 // pred_check_branch
      %26 = sbr.rel (0) target = $region29
    $region28: #{tpu_custom_call.1} parent=1 // pred_region
      _
    $region29: #{tpu_custom_call.1} parent=1 // pred_fallthru
      _
    %v27 = vld [vmem:[%s0] sm:$0xff]
    %v28 = vld [vmem:[%s0 + $0x8] sm:$0xff]
    %v29 = vld [vmem:[%s0 + $0x10] sm:$0xff]
    %v30 = vld [vmem:[%s0 + $0x18] sm:$0xf]
    %v31 = vld [vmem:[%s1] sm:$0xf]
    %v32 = vld [vmem:[%s1 + $0x4] sm:$0xf]
    %v33 = vld [vmem:[%s1 + $0x8] sm:$0xf]
    %v34 = vld [vmem:[%s1 + $0xc] sm:$0xf]
    %v35 = vld [vmem:[%s1 + $0x10] sm:$0xf]
    %v36 = vld [vmem:[%s1 + $0x14] sm:$0xf]
    %v37 = vld [vmem:[%s1 + $0x18] sm:$0xf]
    %v38 = vld [vmem:[%s1 + $0x1c] sm:$0xf]
    %v39 = vld [vmem:[%s1 + $0x20] sm:$0xf]
    %v40 = vld [vmem:[%s1 + $0x24] sm:$0xf]
    %v41 = vld [vmem:[%s1 + $0x28] sm:$0xf]
    %v42 = vld [vmem:[%s1 + $0x2c] sm:$0xf]
    %v43 = vld [vmem:[%s1 + $0x30] sm:$0xf]
    %v44 = vld [vmem:[%s1 + $0x34] sm:$0xf]
    %v45 = vld [vmem:[%s1 + $0x38] sm:$0xf]
    %v46 = vld [vmem:[%s1 + $0x3c] sm:$0xf]
    %v47 = vld [vmem:[%s1 + $0x40] sm:$0xf]
    %v48 = vld [vmem:[%s1 + $0x44] sm:$0xf]
    %v49 = vld [vmem:[%s1 + $0x48] sm:$0xf]
    %v50 = vld [vmem:[%s1 + $0x4c] sm:$0xf]
    %v51 = vld [vmem:[%s1 + $0x50] sm:$0xf]
    %v52 = vld [vmem:[%s1 + $0x54] sm:$0xf]
    %v53 = vld [vmem:[%s1 + $0x58] sm:$0xf]
    %v54 = vld [vmem:[%s1 + $0x5c] sm:$0xf]
    %v55 = vld [vmem:[%s1 + $0x60] sm:$0xf]
    %v56 = vld [vmem:[%s1 + $0x64] sm:$0xf]
    %v57 = vld [vmem:[%s1 + $0x68] sm:$0xf]
    %v58 = vld [vmem:[%s1 + $0x6c] sm:$0xf]
    %v59 = vld [vmem:[%s1 + $0x70] sm:$0xf]
    %v60 = vld [vmem:[%s1 + $0x74] sm:$0xf]
    %v61 = vld [vmem:[%s1 + $0x78] sm:$0xf]
    %v62 = vld [vmem:[%s1 + $0x7c] sm:$0xf]
    %v63 = vld [vmem:[%s1 + $0x80] sm:$0xf]
    %v64 = vld [vmem:[%s1 + $0x84] sm:$0xf]
    %v65 = vld [vmem:[%s1 + $0x88] sm:$0xf]
    %v66 = vld [vmem:[%s1 + $0x8c] sm:$0xf]
    %v67 = vld [vmem:[%s1 + $0x90] sm:$0xf]
    %v68 = vld [vmem:[%s1 + $0x94] sm:$0xf]
    %v69 = vld [vmem:[%s1 + $0x98] sm:$0xf]
    %v70 = vld [vmem:[%s1 + $0x9c] sm:$0xf]
    %v71 = vld [vmem:[%s1 + $0xa0] sm:$0xf]
    %v72 = vld [vmem:[%s1 + $0xa4] sm:$0xf]
    %v73 = vld [vmem:[%s1 + $0xa8] sm:$0xf]
    %v74 = vld [vmem:[%s1 + $0xac] sm:$0xf]
    %v75 = vld [vmem:[%s1 + $0xb0] sm:$0xf]
    %v76 = vld [vmem:[%s1 + $0xb4] sm:$0xf]
    %v77 = vld [vmem:[%s1 + $0xb8] sm:$0xf]
    %v78 = vld [vmem:[%s1 + $0xbc] sm:$0xf]
    %v79 = vld [vmem:[%s1 + $0xc0] sm:$0xf]
    %v80 = vld [vmem:[%s1 + $0xc4] sm:$0xf]
    %v81 = vld [vmem:[%s1 + $0xc8] sm:$0xf]
    %v82 = vld [vmem:[%s1 + $0xcc] sm:$0xf]
    %v83 = vld [vmem:[%s1 + $0xd0] sm:$0xf]
    %v84 = vld [vmem:[%s1 + $0xd4] sm:$0xf]
    %v85 = vld [vmem:[%s1 + $0xd8] sm:$0xf]
    %v86 = vld [vmem:[%s1 + $0xdc] sm:$0xf]
    %v87 = vld [vmem:[%s1 + $0xe0] sm:$0xf]
    %v88 = vld [vmem:[%s1 + $0xe4] sm:$0xf]
    %v89 = vld [vmem:[%s1 + $0xe8] sm:$0xf]
    %v90 = vld [vmem:[%s1 + $0xec] sm:$0xf]
    %v91 = vld [vmem:[%s1 + $0xf0] sm:$0xf]
    %v92 = vld [vmem:[%s1 + $0xf4] sm:$0xf]
    %v93 = vld [vmem:[%s1 + $0xf8] sm:$0xf]
    %v94 = vld [vmem:[%s1 + $0xfc] sm:$0xf]
    %v95 = vld [vmem:[%s1 + $0x100] sm:$0xf]
    %v96 = vld [vmem:[%s1 + $0x104] sm:$0xf]
    %v97 = vld [vmem:[%s1 + $0x108] sm:$0xf]
    %v98 = vld [vmem:[%s1 + $0x10c] sm:$0xf]
    %v99 = vld [vmem:[%s1 + $0x110] sm:$0xf]
    %v100 = vld [vmem:[%s1 + $0x114] sm:$0xf]
    %v101 = vld [vmem:[%s1 + $0x118] sm:$0xf]
    %v102 = vld [vmem:[%s1 + $0x11c] sm:$0xf]
    %v103 = vld [vmem:[%s1 + $0x120] sm:$0xf]
    %v104 = vld [vmem:[%s1 + $0x124] sm:$0xf]
    %v105 = vld [vmem:[%s1 + $0x128] sm:$0xf]
    %v106 = vld [vmem:[%s1 + $0x12c] sm:$0xf]
    %v107 = vld [vmem:[%s1 + $0x130] sm:$0xf]
    %v108 = vld [vmem:[%s1 + $0x134] sm:$0xf]
    %v109 = vld [vmem:[%s1 + $0x138] sm:$0xf]
    %v110 = vld [vmem:[%s1 + $0x13c] sm:$0xf]
    %v111 = vld [vmem:[%s1 + $0x140] sm:$0xf]
    %v112 = vld [vmem:[%s1 + $0x144] sm:$0xf]
    %v113 = vld [vmem:[%s1 + $0x148] sm:$0xf]
    %v114 = vld [vmem:[%s1 + $0x14c] sm:$0xf]
    %v115 = vld [vmem:[%s1 + $0x150] sm:$0xf]
    %v116 = vld [vmem:[%s1 + $0x154] sm:$0xf]
    %v117 = vld [vmem:[%s1 + $0x158] sm:$0xf]
    %v118 = vld [vmem:[%s1 + $0x15c] sm:$0xf]
    %v119 = vld [vmem:[%s1 + $0x160] sm:$0xf]
    %v120 = vld [vmem:[%s1 + $0x164] sm:$0xf]
    %v121 = vld [vmem:[%s1 + $0x168] sm:$0xf]
    %v122 = vld [vmem:[%s1 + $0x16c] sm:$0xf]
    %v123 = vld [vmem:[%s1 + $0x170] sm:$0xf]
    %v124 = vld [vmem:[%s1 + $0x174] sm:$0xf]
    %v125 = vld [vmem:[%s1 + $0x178] sm:$0xf]
    %v126 = vld [vmem:[%s1 + $0x17c] sm:$0xf]
    %v127 = vld [vmem:[%s1 + $0x180] sm:$0xf]
    %v128 = vld [vmem:[%s1 + $0x184] sm:$0xf]
    %v129 = vld [vmem:[%s1 + $0x188] sm:$0xf]
    %v130 = vld [vmem:[%s1 + $0x18c] sm:$0xf]
    %v131 = vld [vmem:[%s1 + $0x190] sm:$0xf]
    %v132 = vld [vmem:[%s1 + $0x194] sm:$0xf]
    %v133 = vld [vmem:[%s1 + $0x198] sm:$0xf]
    %v134 = vld [vmem:[%s1 + $0x19c] sm:$0xf]
    %v135 = vld [vmem:[%s1 + $0x1a0] sm:$0xf]
    %v136 = vld [vmem:[%s1 + $0x1a4] sm:$0xf]
    %v137 = vld [vmem:[%s1 + $0x1a8] sm:$0xf]
    %v138 = vld [vmem:[%s1 + $0x1ac] sm:$0xf]
    %v139 = vld [vmem:[%s1 + $0x1b0] sm:$0xf]
    %v140 = vld [vmem:[%s1 + $0x1b4] sm:$0xf]
    %v141 = vld [vmem:[%s1 + $0x1b8] sm:$0xf]
    %v142 = vld [vmem:[%s1 + $0x1bc] sm:$0xf]
    %v143 = vld [vmem:[%s2] sm:$0x1]
    %v145 = vperm.slane %v143, 0
    %v151 = vunpack.c.l.b16 %v27
    %v152 = vunpack.c.h.b16 %v27
    %v153 = vunpack.c.l.b16 %v28
    %v154 = vunpack.c.h.b16 %v28
    %v155 = vunpack.c.l.b16 %v29
    %v156 = vunpack.c.h.b16 %v29
    %v157 = vunpack.c.l.b16 %v30
    %v158 = vpack.c.b16 %v151, %v151
    %v159 = vpack.c.b16 %v152, %v152
    %v160 = vpack.c.b16 %v153, %v153
    %v161 = vpack.c.b16 %v154, %v154
    %v162 = vpack.c.b16 %v155, %v155
    %v163 = vpack.c.b16 %v156, %v156
    %v164 = vpack.c.b16 %v157, %v157
    %v284 = vunpack.c.l.b16 %v31
    %v285 = vunpack.c.l.b16 %v32
    %v286 = vunpack.c.l.b16 %v33
    %v287 = vunpack.c.l.b16 %v34
    %v288 = vunpack.c.l.b16 %v35
    %v289 = vunpack.c.l.b16 %v36
    %v290 = vunpack.c.l.b16 %v37
    %v291 = vunpack.c.l.b16 %v38
    %v292 = vunpack.c.l.b16 %v39
    %v293 = vunpack.c.l.b16 %v40
    %v294 = vunpack.c.l.b16 %v41
    %v295 = vunpack.c.l.b16 %v42
    %v296 = vunpack.c.l.b16 %v43
    %v297 = vunpack.c.l.b16 %v44
    %v298 = vunpack.c.l.b16 %v45
    %v299 = vunpack.c.l.b16 %v46
    %v300 = vunpack.c.l.b16 %v47
    %v301 = vunpack.c.l.b16 %v48
    %v302 = vunpack.c.l.b16 %v49
    %v303 = vunpack.c.l.b16 %v50
    %v304 = vunpack.c.l.b16 %v51
    %v305 = vunpack.c.l.b16 %v52
    %v306 = vunpack.c.l.b16 %v53
    %v307 = vunpack.c.l.b16 %v54
    %v308 = vunpack.c.l.b16 %v55
    %v309 = vunpack.c.l.b16 %v56
    %v310 = vunpack.c.l.b16 %v57
    %v311 = vunpack.c.l.b16 %v58
    %v312 = vunpack.c.l.b16 %v59
    %v313 = vunpack.c.l.b16 %v60
    %v314 = vunpack.c.l.b16 %v61
    %v315 = vunpack.c.l.b16 %v62
    %v316 = vunpack.c.l.b16 %v63
    %v317 = vunpack.c.l.b16 %v64
    %v318 = vunpack.c.l.b16 %v65
    %v319 = vunpack.c.l.b16 %v66
    %v320 = vunpack.c.l.b16 %v67
    %v321 = vunpack.c.l.b16 %v68
    %v322 = vunpack.c.l.b16 %v69
    %v323 = vunpack.c.l.b16 %v70
    %v324 = vunpack.c.l.b16 %v71
    %v325 = vunpack.c.l.b16 %v72
    %v326 = vunpack.c.l.b16 %v73
    %v327 = vunpack.c.l.b16 %v74
    %v328 = vunpack.c.l.b16 %v75
    %v329 = vunpack.c.l.b16 %v76
    %v330 = vunpack.c.l.b16 %v77
    %v331 = vunpack.c.l.b16 %v78
    %v332 = vunpack.c.l.b16 %v79
    %v333 = vunpack.c.l.b16 %v80
    %v334 = vunpack.c.l.b16 %v81
    %v335 = vunpack.c.l.b16 %v82
    %v336 = vunpack.c.l.b16 %v83
    %v337 = vunpack.c.l.b16 %v84
    %v338 = vunpack.c.l.b16 %v85
    %v339 = vunpack.c.l.b16 %v86
    %v340 = vunpack.c.l.b16 %v87
    %v341 = vunpack.c.l.b16 %v88
    %v342 = vunpack.c.l.b16 %v89
    %v343 = vunpack.c.l.b16 %v90
    %v344 = vunpack.c.l.b16 %v91
    %v345 = vunpack.c.l.b16 %v92
    %v346 = vunpack.c.l.b16 %v93
    %v347 = vunpack.c.l.b16 %v94
    %v348 = vunpack.c.l.b16 %v95
    %v349 = vunpack.c.l.b16 %v96
    %v350 = vunpack.c.l.b16 %v97
    %v351 = vunpack.c.l.b16 %v98
    %v352 = vunpack.c.l.b16 %v99
    %v353 = vunpack.c.l.b16 %v100
    %v354 = vunpack.c.l.b16 %v101
    %v355 = vunpack.c.l.b16 %v102
    %v356 = vunpack.c.l.b16 %v103
    %v357 = vunpack.c.l.b16 %v104
    %v358 = vunpack.c.l.b16 %v105
    %v359 = vunpack.c.l.b16 %v106
    %v360 = vunpack.c.l.b16 %v107
    %v361 = vunpack.c.l.b16 %v108
    %v362 = vunpack.c.l.b16 %v109
    %v363 = vunpack.c.l.b16 %v110
    %v364 = vunpack.c.l.b16 %v111
    %v365 = vunpack.c.l.b16 %v112
    %v366 = vunpack.c.l.b16 %v113
    %v367 = vunpack.c.l.b16 %v114
    %v368 = vunpack.c.l.b16 %v115
    %v369 = vunpack.c.l.b16 %v116
    %v370 = vunpack.c.l.b16 %v117
    %v371 = vunpack.c.l.b16 %v118
    %v372 = vunpack.c.l.b16 %v119
    %v373 = vunpack.c.l.b16 %v120
    %v374 = vunpack.c.l.b16 %v121
    %v375 = vunpack.c.l.b16 %v122
    %v376 = vunpack.c.l.b16 %v123
    %v377 = vunpack.c.l.b16 %v124
    %v378 = vunpack.c.l.b16 %v125
    %v379 = vunpack.c.l.b16 %v126
    %v380 = vunpack.c.l.b16 %v127
    %v381 = vunpack.c.l.b16 %v128
    %v382 = vunpack.c.l.b16 %v129
    %v383 = vunpack.c.l.b16 %v130
    %v384 = vunpack.c.l.b16 %v131
    %v385 = vunpack.c.l.b16 %v132
    %v386 = vunpack.c.l.b16 %v133
    %v387 = vunpack.c.l.b16 %v134
    %v388 = vunpack.c.l.b16 %v135
    %v389 = vunpack.c.l.b16 %v136
    %v390 = vunpack.c.l.b16 %v137
    %v391 = vunpack.c.l.b16 %v138
    %v392 = vunpack.c.l.b16 %v139
    %v393 = vunpack.c.l.b16 %v140
    %v394 = vunpack.c.l.b16 %v141
    %v395 = vunpack.c.l.b16 %v142
    %v396 = vpack.c.b16 %v285, %v284
    %v397 = vpack.c.b16 %v287, %v286
    %v398 = vpack.c.b16 %v289, %v288
    %v399 = vpack.c.b16 %v291, %v290
    %v400 = vpack.c.b16 %v293, %v292
    %v401 = vpack.c.b16 %v295, %v294
    %v402 = vpack.c.b16 %v297, %v296
    %v403 = vpack.c.b16 %v299, %v298
    %v404 = vpack.c.b16 %v301, %v300
    %v405 = vpack.c.b16 %v303, %v302
    %v406 = vpack.c.b16 %v305, %v304
    %v407 = vpack.c.b16 %v307, %v306
    %v408 = vpack.c.b16 %v309, %v308
    %v409 = vpack.c.b16 %v311, %v310
    %v410 = vpack.c.b16 %v313, %v312
    %v411 = vpack.c.b16 %v315, %v314
    %v412 = vpack.c.b16 %v317, %v316
    %v413 = vpack.c.b16 %v319, %v318
    %v414 = vpack.c.b16 %v321, %v320
    %v415 = vpack.c.b16 %v323, %v322
    %v416 = vpack.c.b16 %v325, %v324
    %v417 = vpack.c.b16 %v327, %v326
    %v418 = vpack.c.b16 %v329, %v328
    %v419 = vpack.c.b16 %v331, %v330
    %v420 = vpack.c.b16 %v333, %v332
    %v421 = vpack.c.b16 %v335, %v334
    %v422 = vpack.c.b16 %v337, %v336
    %v423 = vpack.c.b16 %v339, %v338
    %v424 = vpack.c.b16 %v341, %v340
    %v425 = vpack.c.b16 %v343, %v342
    %v426 = vpack.c.b16 %v345, %v344
    %v427 = vpack.c.b16 %v347, %v346
    %v428 = vpack.c.b16 %v349, %v348
    %v429 = vpack.c.b16 %v351, %v350
    %v430 = vpack.c.b16 %v353, %v352
    %v431 = vpack.c.b16 %v355, %v354
    %v432 = vpack.c.b16 %v357, %v356
    %v433 = vpack.c.b16 %v359, %v358
    %v434 = vpack.c.b16 %v361, %v360
    %v435 = vpack.c.b16 %v363, %v362
    %v436 = vpack.c.b16 %v365, %v364
    %v437 = vpack.c.b16 %v367, %v366
    %v438 = vpack.c.b16 %v369, %v368
    %v439 = vpack.c.b16 %v371, %v370
    %v440 = vpack.c.b16 %v373, %v372
    %v441 = vpack.c.b16 %v375, %v374
    %v442 = vpack.c.b16 %v377, %v376
    %v443 = vpack.c.b16 %v379, %v378
    %v444 = vpack.c.b16 %v381, %v380
    %v445 = vpack.c.b16 %v383, %v382
    %v446 = vpack.c.b16 %v385, %v384
    %v447 = vpack.c.b16 %v387, %v386
    %v448 = vpack.c.b16 %v389, %v388
    %v449 = vpack.c.b16 %v391, %v390
    %v450 = vpack.c.b16 %v393, %v392
    %v451 = vpack.c.b16 %v395, %v394
    %508 = vmatpush.bf16.msra.mxu0 %v403
    %509 = vmatpush.bf16.msra.mxu0 %v402
    %510 = vmatpush.bf16.msra.mxu0 %v401
    %511 = vmatpush.bf16.msra.mxu0 %v400
    %512 = vmatpush.bf16.msra.mxu0 %v399
    %513 = vmatpush.bf16.msra.mxu0 %v398
    %514 = vmatpush.bf16.msra.mxu0 %v397
    %515 = vmatpush.bf16.msra.mxu0 %v396
    %516 = vmatmul.bf16.gmra.mxu0 %v158
    %v517 = vpop.f32.mrf.mxu0
    %v518 = vadd.f32 %v145, %v517
    %v519 = vpop.f32.mrf.mxu0
    %520 = vdwg.mxu0
    %521 = vmatpush.bf16.msra.mxu0 %v411
    %522 = vmatpush.bf16.msra.mxu0 %v410
    %523 = vmatpush.bf16.msra.mxu0 %v409
    %524 = vmatpush.bf16.msra.mxu0 %v408
    %525 = vmatpush.bf16.msra.mxu0 %v407
    %526 = vmatpush.bf16.msra.mxu0 %v406
    %527 = vmatpush.bf16.msra.mxu0 %v405
    %528 = vmatpush.bf16.msra.mxu0 %v404
    %529 = vmatmul.bf16.gmra.mxu0 %v159
    %v530 = vpop.f32.mrf.mxu0
    %v531 = vadd.f32 %v518, %v530
    %v532 = vpop.f32.mrf.mxu0
    %533 = vdwg.mxu0
    %534 = vmatpush.bf16.msra.mxu0 %v419
    %535 = vmatpush.bf16.msra.mxu0 %v418
    %536 = vmatpush.bf16.msra.mxu0 %v417
    %537 = vmatpush.bf16.msra.mxu0 %v416
    %538 = vmatpush.bf16.msra.mxu0 %v415
    %539 = vmatpush.bf16.msra.mxu0 %v414
    %540 = vmatpush.bf16.msra.mxu0 %v413
    %541 = vmatpush.bf16.msra.mxu0 %v412
    %542 = vmatmul.bf16.gmra.mxu0 %v160
    %v543 = vpop.f32.mrf.mxu0
    %v544 = vadd.f32 %v531, %v543
    %v545 = vpop.f32.mrf.mxu0
    %546 = vdwg.mxu0
    %547 = vmatpush.bf16.msra.mxu0 %v427
    %548 = vmatpush.bf16.msra.mxu0 %v426
    %549 = vmatpush.bf16.msra.mxu0 %v425
    %550 = vmatpush.bf16.msra.mxu0 %v424
    %551 = vmatpush.bf16.msra.mxu0 %v423
    %552 = vmatpush.bf16.msra.mxu0 %v422
    %553 = vmatpush.bf16.msra.mxu0 %v421
    %554 = vmatpush.bf16.msra.mxu0 %v420
    %555 = vmatmul.bf16.gmra.mxu0 %v161
    %v556 = vpop.f32.mrf.mxu0
    %v557 = vadd.f32 %v544, %v556
    %v558 = vpop.f32.mrf.mxu0
    %559 = vdwg.mxu0
    %560 = vmatpush.bf16.msra.mxu0 %v435
    %561 = vmatpush.bf16.msra.mxu0 %v434
    %562 = vmatpush.bf16.msra.mxu0 %v433
    %563 = vmatpush.bf16.msra.mxu0 %v432
    %564 = vmatpush.bf16.msra.mxu0 %v431
    %565 = vmatpush.bf16.msra.mxu0 %v430
    %566 = vmatpush.bf16.msra.mxu0 %v429
    %567 = vmatpush.bf16.msra.mxu0 %v428
    %568 = vmatmul.bf16.gmra.mxu0 %v162
    %v569 = vpop.f32.mrf.mxu0
    %v570 = vadd.f32 %v557, %v569
    %v571 = vpop.f32.mrf.mxu0
    %572 = vdwg.mxu0
    %573 = vmatpush.bf16.msra.mxu0 %v443
    %574 = vmatpush.bf16.msra.mxu0 %v442
    %575 = vmatpush.bf16.msra.mxu0 %v441
    %576 = vmatpush.bf16.msra.mxu0 %v440
    %577 = vmatpush.bf16.msra.mxu0 %v439
    %578 = vmatpush.bf16.msra.mxu0 %v438
    %579 = vmatpush.bf16.msra.mxu0 %v437
    %580 = vmatpush.bf16.msra.mxu0 %v436
    %581 = vmatmul.bf16.gmra.mxu0 %v163
    %v582 = vpop.f32.mrf.mxu0
    %v583 = vadd.f32 %v570, %v582
    %v584 = vpop.f32.mrf.mxu0
    %585 = vdwg.mxu0
    %586 = vmatpush.bf16.msra.mxu0 %v451
    %587 = vmatpush.bf16.msra.mxu0 %v450
    %588 = vmatpush.bf16.msra.mxu0 %v449
    %589 = vmatpush.bf16.msra.mxu0 %v448
    %590 = vmatpush.bf16.msra.mxu0 %v447
    %591 = vmatpush.bf16.msra.mxu0 %v446
    %592 = vmatpush.bf16.msra.mxu0 %v445
    %593 = vmatpush.bf16.msra.mxu0 %v444
    %594 = vmatmul.bf16.gmra.mxu0 %v164
    %v595 = vpop.f32.mrf.mxu0
    %v596 = vadd.f32 %v583, %v595
    %v597 = vpop.f32.mrf.mxu0
    %598 = vdwg.mxu0
    %v599 = vmin.f32 %v596, 0.0
    %v600 = vmul.f32 %v599, 1.442695
    %v601 = vpow.pop %v600
    %v602 = vsub.f32 %v601, 1.0
    %v603 = vmul.f32 %v602, 1.6732632
    %vm604 = vcmp.gt.f32.partialorder %v596, 0.0
    %v605 = vsel %vm604, %v596, %v603
    %v606 = vmul.f32 %v605, 1.050701
    %v607 = vpack.c.bf16 %v606, %v606
    %v608 = vld [vmem:[%s3] sm:$0xf]
    %v609 = vld [vmem:[%s3 + $0x4] sm:$0xf]
    %v610 = vld [vmem:[%s3 + $0x8] sm:$0xf]
    %v611 = vld [vmem:[%s3 + $0xc] sm:$0xf]
    %v612 = vld [vmem:[%s3 + $0x10] sm:$0xf]
    %v613 = vld [vmem:[%s3 + $0x14] sm:$0xf]
    %v614 = vld [vmem:[%s3 + $0x18] sm:$0xf]
    %v615 = vld [vmem:[%s3 + $0x1c] sm:$0xf]
    %v616 = vld [vmem:[%s3 + $0x20] sm:$0xf]
    %v617 = vld [vmem:[%s3 + $0x24] sm:$0xf]
    %v618 = vld [vmem:[%s3 + $0x28] sm:$0xf]
    %v619 = vld [vmem:[%s3 + $0x2c] sm:$0xf]
    %v620 = vld [vmem:[%s3 + $0x30] sm:$0xf]
    %v621 = vld [vmem:[%s3 + $0x34] sm:$0xf]
    %v622 = vld [vmem:[%s3 + $0x38] sm:$0xf]
    %v623 = vld [vmem:[%s3 + $0x3c] sm:$0xf]
    %v624 = vld [vmem:[%s4] sm:$0x1]
    %v626 = vperm.slane %v624, 0
    %v644 = vunpack.c.l.b16 %v608
    %v645 = vunpack.c.l.b16 %v609
    %v646 = vunpack.c.l.b16 %v610
    %v647 = vunpack.c.l.b16 %v611
    %v648 = vunpack.c.l.b16 %v612
    %v649 = vunpack.c.l.b16 %v613
    %v650 = vunpack.c.l.b16 %v614
    %v651 = vunpack.c.l.b16 %v615
    %v652 = vunpack.c.l.b16 %v616
    %v653 = vunpack.c.l.b16 %v617
    %v654 = vunpack.c.l.b16 %v618
    %v655 = vunpack.c.l.b16 %v619
    %v656 = vunpack.c.l.b16 %v620
    %v657 = vunpack.c.l.b16 %v621
    %v658 = vunpack.c.l.b16 %v622
    %v659 = vunpack.c.l.b16 %v623
    %v660 = vpack.c.b16 %v645, %v644
    %v661 = vpack.c.b16 %v647, %v646
    %v662 = vpack.c.b16 %v649, %v648
    %v663 = vpack.c.b16 %v651, %v650
    %v664 = vpack.c.b16 %v653, %v652
    %v665 = vpack.c.b16 %v655, %v654
    %v666 = vpack.c.b16 %v657, %v656
    %v667 = vpack.c.b16 %v659, %v658
    %676 = vmatpush.bf16.msra.mxu0 %v667
    %677 = vmatpush.bf16.msra.mxu0 %v666
    %678 = vmatpush.bf16.msra.mxu0 %v665
    %679 = vmatpush.bf16.msra.mxu0 %v664
    %680 = vmatpush.bf16.msra.mxu0 %v663
    %681 = vmatpush.bf16.msra.mxu0 %v662
    %682 = vmatpush.bf16.msra.mxu0 %v661
    %683 = vmatpush.bf16.msra.mxu0 %v660
    %684 = vmatmul.bf16.gmra.mxu0 %v607
    %v685 = vpop.f32.mrf.mxu0
    %v686 = vadd.f32 %v626, %v685
    %v687 = vpop.f32.mrf.mxu0
    %688 = vdwg.mxu0
    %v689 = vmin.f32 %v686, 0.0
    %v690 = vmul.f32 %v689, 1.442695
    %v691 = vpow.pop %v690
    %v692 = vsub.f32 %v691, 1.0
    %v693 = vmul.f32 %v692, 1.6732632
    %vm694 = vcmp.gt.f32.partialorder %v686, 0.0
    %v695 = vsel %vm694, %v686, %v693
    %v696 = vmul.f32 %v695, 1.050701
    %v697 = vpack.c.bf16 %v696, %v696
    %v698 = vld [vmem:[%s5] sm:$0xff]
    %v699 = vld [vmem:[%s5 + $0x8] sm:$0xff]
    %v700 = vld [vmem:[%s5 + $0x10] sm:$0xff]
    %v701 = vld [vmem:[%s5 + $0x18] sm:$0xff]
    %v702 = vld [vmem:[%s5 + $0x20] sm:$0xff]
    %v703 = vld [vmem:[%s5 + $0x28] sm:$0xff]
    %v704 = vld [vmem:[%s5 + $0x30] sm:$0xff]
    %v705 = vld [vmem:[%s5 + $0x38] sm:$0xff]
    %v706 = vld [vmem:[%s5 + $0x40] sm:$0xff]
    %v707 = vld [vmem:[%s5 + $0x48] sm:$0xff]
    %v708 = vld [vmem:[%s5 + $0x50] sm:$0xff]
    %v709 = vld [vmem:[%s5 + $0x58] sm:$0xff]
    %v710 = vld [vmem:[%s5 + $0x60] sm:$0xff]
    %v711 = vld [vmem:[%s5 + $0x68] sm:$0xff]
    %v712 = vld [vmem:[%s5 + $0x70] sm:$0xff]
    %v713 = vld [vmem:[%s5 + $0x78] sm:$0xff]
    %v714 = vld [vmem:[%s5 + $0x80] sm:$0xf]
    %v715 = vld [vmem:[%s5 + $0x84] sm:$0xff]
    %v716 = vld [vmem:[%s5 + $0x8c] sm:$0xff]
    %v717 = vld [vmem:[%s5 + $0x94] sm:$0xff]
    %v718 = vld [vmem:[%s5 + $0x9c] sm:$0xff]
    %v719 = vld [vmem:[%s5 + $0xa4] sm:$0xff]
    %v720 = vld [vmem:[%s5 + $0xac] sm:$0xff]
    %v721 = vld [vmem:[%s5 + $0xb4] sm:$0xff]
    %v722 = vld [vmem:[%s5 + $0xbc] sm:$0xff]
    %v723 = vld [vmem:[%s5 + $0xc4] sm:$0xff]
    %v724 = vld [vmem:[%s5 + $0xcc] sm:$0xff]
    %v725 = vld [vmem:[%s5 + $0xd4] sm:$0xff]
    %v726 = vld [vmem:[%s5 + $0xdc] sm:$0xff]
    %v727 = vld [vmem:[%s5 + $0xe4] sm:$0xff]
    %v728 = vld [vmem:[%s5 + $0xec] sm:$0xff]
    %v729 = vld [vmem:[%s5 + $0xf4] sm:$0xff]
    %v730 = vld [vmem:[%s5 + $0xfc] sm:$0xff]
    %v731 = vld [vmem:[%s5 + $0x104] sm:$0xf]
    %v732 = vld [vmem:[%s5 + $0x108] sm:$0xff]
    %v733 = vld [vmem:[%s5 + $0x110] sm:$0xff]
    %v734 = vld [vmem:[%s5 + $0x118] sm:$0xff]
    %v735 = vld [vmem:[%s5 + $0x120] sm:$0xff]
    %v736 = vld [vmem:[%s5 + $0x128] sm:$0xff]
    %v737 = vld [vmem:[%s5 + $0x130] sm:$0xff]
    %v738 = vld [vmem:[%s5 + $0x138] sm:$0xff]
    %v739 = vld [vmem:[%s5 + $0x140] sm:$0xff]
    %v740 = vld [vmem:[%s5 + $0x148] sm:$0xff]
    %v741 = vld [vmem:[%s5 + $0x150] sm:$0xff]
    %v742 = vld [vmem:[%s5 + $0x158] sm:$0xff]
    %v743 = vld [vmem:[%s5 + $0x160] sm:$0xff]
    %v744 = vld [vmem:[%s5 + $0x168] sm:$0xff]
    %v745 = vld [vmem:[%s5 + $0x170] sm:$0xff]
    %v746 = vld [vmem:[%s5 + $0x178] sm:$0xff]
    %v747 = vld [vmem:[%s5 + $0x180] sm:$0xff]
    %v748 = vld [vmem:[%s5 + $0x188] sm:$0xf]
    %v749 = vld [vmem:[%s5 + $0x18c] sm:$0xff]
    %v750 = vld [vmem:[%s5 + $0x194] sm:$0xff]
    %v751 = vld [vmem:[%s5 + $0x19c] sm:$0xff]
    %v752 = vld [vmem:[%s5 + $0x1a4] sm:$0xff]
    %v753 = vld [vmem:[%s5 + $0x1ac] sm:$0xff]
    %v754 = vld [vmem:[%s5 + $0x1b4] sm:$0xff]
    %v755 = vld [vmem:[%s5 + $0x1bc] sm:$0xff]
    %v756 = vld [vmem:[%s5 + $0x1c4] sm:$0xff]
    %v757 = vld [vmem:[%s5 + $0x1cc] sm:$0xff]
    %v758 = vld [vmem:[%s5 + $0x1d4] sm:$0xff]
    %v759 = vld [vmem:[%s5 + $0x1dc] sm:$0xff]
    %v760 = vld [vmem:[%s5 + $0x1e4] sm:$0xff]
    %v761 = vld [vmem:[%s5 + $0x1ec] sm:$0xff]
    %v762 = vld [vmem:[%s5 + $0x1f4] sm:$0xff]
    %v763 = vld [vmem:[%s5 + $0x1fc] sm:$0xff]
    %v764 = vld [vmem:[%s5 + $0x204] sm:$0xff]
    %v765 = vld [vmem:[%s5 + $0x20c] sm:$0xf]
    %v766 = vld [vmem:[%s5 + $0x210] sm:$0xff]
    %v767 = vld [vmem:[%s5 + $0x218] sm:$0xff]
    %v768 = vld [vmem:[%s5 + $0x220] sm:$0xff]
    %v769 = vld [vmem:[%s5 + $0x228] sm:$0xff]
    %v770 = vld [vmem:[%s5 + $0x230] sm:$0xff]
    %v771 = vld [vmem:[%s5 + $0x238] sm:$0xff]
    %v772 = vld [vmem:[%s5 + $0x240] sm:$0xff]
    %v773 = vld [vmem:[%s5 + $0x248] sm:$0xff]
    %v774 = vld [vmem:[%s5 + $0x250] sm:$0xff]
    %v775 = vld [vmem:[%s5 + $0x258] sm:$0xff]
    %v776 = vld [vmem:[%s5 + $0x260] sm:$0xff]
    %v777 = vld [vmem:[%s5 + $0x268] sm:$0xff]
    %v778 = vld [vmem:[%s5 + $0x270] sm:$0xff]
    %v779 = vld [vmem:[%s5 + $0x278] sm:$0xff]
    %v780 = vld [vmem:[%s5 + $0x280] sm:$0xff]
    %v781 = vld [vmem:[%s5 + $0x288] sm:$0xff]
    %v782 = vld [vmem:[%s5 + $0x290] sm:$0xf]
    %v783 = vld [vmem:[%s5 + $0x294] sm:$0xff]
    %v784 = vld [vmem:[%s5 + $0x29c] sm:$0xff]
    %v785 = vld [vmem:[%s5 + $0x2a4] sm:$0xff]
    %v786 = vld [vmem:[%s5 + $0x2ac] sm:$0xff]
    %v787 = vld [vmem:[%s5 + $0x2b4] sm:$0xff]
    %v788 = vld [vmem:[%s5 + $0x2bc] sm:$0xff]
    %v789 = vld [vmem:[%s5 + $0x2c4] sm:$0xff]
    %v790 = vld [vmem:[%s5 + $0x2cc] sm:$0xff]
    %v791 = vld [vmem:[%s5 + $0x2d4] sm:$0xff]
    %v792 = vld [vmem:[%s5 + $0x2dc] sm:$0xff]
    %v793 = vld [vmem:[%s5 + $0x2e4] sm:$0xff]
    %v794 = vld [vmem:[%s5 + $0x2ec] sm:$0xff]
    %v795 = vld [vmem:[%s5 + $0x2f4] sm:$0xff]
    %v796 = vld [vmem:[%s5 + $0x2fc] sm:$0xff]
    %v797 = vld [vmem:[%s5 + $0x304] sm:$0xff]
    %v798 = vld [vmem:[%s5 + $0x30c] sm:$0xff]
    %v799 = vld [vmem:[%s5 + $0x314] sm:$0xf]
    %v800 = vld [vmem:[%s5 + $0x318] sm:$0xff]
    %v801 = vld [vmem:[%s5 + $0x320] sm:$0xff]
    %v802 = vld [vmem:[%s5 + $0x328] sm:$0xff]
    %v803 = vld [vmem:[%s5 + $0x330] sm:$0xff]
    %v804 = vld [vmem:[%s5 + $0x338] sm:$0xff]
    %v805 = vld [vmem:[%s5 + $0x340] sm:$0xff]
    %v806 = vld [vmem:[%s5 + $0x348] sm:$0xff]
    %v807 = vld [vmem:[%s5 + $0x350] sm:$0xff]
    %v808 = vld [vmem:[%s5 + $0x358] sm:$0xff]
    %v809 = vld [vmem:[%s5 + $0x360] sm:$0xff]
    %v810 = vld [vmem:[%s5 + $0x368] sm:$0xff]
    %v811 = vld [vmem:[%s5 + $0x370] sm:$0xff]
    %v812 = vld [vmem:[%s5 + $0x378] sm:$0xff]
    %v813 = vld [vmem:[%s5 + $0x380] sm:$0xff]
    %v814 = vld [vmem:[%s5 + $0x388] sm:$0xff]
    %v815 = vld [vmem:[%s5 + $0x390] sm:$0xff]
    %v816 = vld [vmem:[%s5 + $0x398] sm:$0xf]
    %v817 = vld [vmem:[%s5 + $0x39c] sm:$0xff]
    %v818 = vld [vmem:[%s5 + $0x3a4] sm:$0xff]
    %v819 = vld [vmem:[%s5 + $0x3ac] sm:$0xff]
    %v820 = vld [vmem:[%s5 + $0x3b4] sm:$0xff]
    %v821 = vld [vmem:[%s5 + $0x3bc] sm:$0xff]
    %v822 = vld [vmem:[%s5 + $0x3c4] sm:$0xff]
    %v823 = vld [vmem:[%s5 + $0x3cc] sm:$0xff]
    %v824 = vld [vmem:[%s5 + $0x3d4] sm:$0xff]
    %v825 = vld [vmem:[%s5 + $0x3dc] sm:$0xff]
    %v826 = vld [vmem:[%s5 + $0x3e4] sm:$0xff]
    %v827 = vld [vmem:[%s5 + $0x3ec] sm:$0xff]
    %v828 = vld [vmem:[%s5 + $0x3f4] sm:$0xff]
    %v829 = vld [vmem:[%s5 + $0x3fc] sm:$0xff]
    %v830 = vld [vmem:[%s5 + $0x404] sm:$0xff]
    %v831 = vld [vmem:[%s5 + $0x40c] sm:$0xff]
    %v832 = vld [vmem:[%s5 + $0x414] sm:$0xff]
    %v833 = vld [vmem:[%s5 + $0x41c] sm:$0xf]
    %v834 = vld [vmem:[%s5 + $0x420] sm:$0xff]
    %v835 = vld [vmem:[%s5 + $0x428] sm:$0xff]
    %v836 = vld [vmem:[%s5 + $0x430] sm:$0xff]
    %v837 = vld [vmem:[%s5 + $0x438] sm:$0xff]
    %v838 = vld [vmem:[%s5 + $0x440] sm:$0xff]
    %v839 = vld [vmem:[%s5 + $0x448] sm:$0xff]
    %v840 = vld [vmem:[%s5 + $0x450] sm:$0xff]
    %v841 = vld [vmem:[%s5 + $0x458] sm:$0xff]
    %v842 = vld [vmem:[%s5 + $0x460] sm:$0xff]
    %v843 = vld [vmem:[%s5 + $0x468] sm:$0xff]
    %v844 = vld [vmem:[%s5 + $0x470] sm:$0xff]
    %v845 = vld [vmem:[%s5 + $0x478] sm:$0xff]
    %v846 = vld [vmem:[%s5 + $0x480] sm:$0xff]
    %v847 = vld [vmem:[%s5 + $0x488] sm:$0xff]
    %v848 = vld [vmem:[%s5 + $0x490] sm:$0xff]
    %v849 = vld [vmem:[%s5 + $0x498] sm:$0xff]
    %v850 = vld [vmem:[%s5 + $0x4a0] sm:$0xf]
    %v851 = vld [vmem:[%s5 + $0x4a4] sm:$0xff]
    %v852 = vld [vmem:[%s5 + $0x4ac] sm:$0xff]
    %v853 = vld [vmem:[%s5 + $0x4b4] sm:$0xff]
    %v854 = vld [vmem:[%s5 + $0x4bc] sm:$0xff]
    %v855 = vld [vmem:[%s5 + $0x4c4] sm:$0xff]
    %v856 = vld [vmem:[%s5 + $0x4cc] sm:$0xff]
    %v857 = vld [vmem:[%s5 + $0x4d4] sm:$0xff]
    %v858 = vld [vmem:[%s5 + $0x4dc] sm:$0xff]
    %v859 = vld [vmem:[%s5 + $0x4e4] sm:$0xff]
    %v860 = vld [vmem:[%s5 + $0x4ec] sm:$0xff]
    %v861 = vld [vmem:[%s5 + $0x4f4] sm:$0xff]
    %v862 = vld [vmem:[%s5 + $0x4fc] sm:$0xff]
    %v863 = vld [vmem:[%s5 + $0x504] sm:$0xff]
    %v864 = vld [vmem:[%s5 + $0x50c] sm:$0xff]
    %v865 = vld [vmem:[%s5 + $0x514] sm:$0xff]
    %v866 = vld [vmem:[%s5 + $0x51c] sm:$0xff]
    %v867 = vld [vmem:[%s5 + $0x524] sm:$0xf]
    %v868 = vld [vmem:[%s5 + $0x528] sm:$0xff]
    %v869 = vld [vmem:[%s5 + $0x530] sm:$0xff]
    %v870 = vld [vmem:[%s5 + $0x538] sm:$0xff]
    %v871 = vld [vmem:[%s5 + $0x540] sm:$0xff]
    %v872 = vld [vmem:[%s5 + $0x548] sm:$0xff]
    %v873 = vld [vmem:[%s5 + $0x550] sm:$0xff]
    %v874 = vld [vmem:[%s5 + $0x558] sm:$0xff]
    %v875 = vld [vmem:[%s5 + $0x560] sm:$0xff]
    %v876 = vld [vmem:[%s5 + $0x568] sm:$0xff]
    %v877 = vld [vmem:[%s5 + $0x570] sm:$0xff]
    %v878 = vld [vmem:[%s5 + $0x578] sm:$0xff]
    %v879 = vld [vmem:[%s5 + $0x580] sm:$0xff]
    %v880 = vld [vmem:[%s5 + $0x588] sm:$0xff]
    %v881 = vld [vmem:[%s5 + $0x590] sm:$0xff]
    %v882 = vld [vmem:[%s5 + $0x598] sm:$0xff]
    %v883 = vld [vmem:[%s5 + $0x5a0] sm:$0xff]
    %v884 = vld [vmem:[%s5 + $0x5a8] sm:$0xf]
    %v885 = vld [vmem:[%s5 + $0x5ac] sm:$0xff]
    %v886 = vld [vmem:[%s5 + $0x5b4] sm:$0xff]
    %v887 = vld [vmem:[%s5 + $0x5bc] sm:$0xff]
    %v888 = vld [vmem:[%s5 + $0x5c4] sm:$0xff]
    %v889 = vld [vmem:[%s5 + $0x5cc] sm:$0xff]
    %v890 = vld [vmem:[%s5 + $0x5d4] sm:$0xff]
    %v891 = vld [vmem:[%s5 + $0x5dc] sm:$0xff]
    %v892 = vld [vmem:[%s5 + $0x5e4] sm:$0xff]
    %v893 = vld [vmem:[%s5 + $0x5ec] sm:$0xff]
    %v894 = vld [vmem:[%s5 + $0x5f4] sm:$0xff]
    %v895 = vld [vmem:[%s5 + $0x5fc] sm:$0xff]
    %v896 = vld [vmem:[%s5 + $0x604] sm:$0xff]
    %v897 = vld [vmem:[%s5 + $0x60c] sm:$0xff]
    %v898 = vld [vmem:[%s5 + $0x614] sm:$0xff]
    %v899 = vld [vmem:[%s5 + $0x61c] sm:$0xff]
    %v900 = vld [vmem:[%s5 + $0x624] sm:$0xff]
    %v901 = vld [vmem:[%s5 + $0x62c] sm:$0xf]
    %v902 = vld [vmem:[%s5 + $0x630] sm:$0xff]
    %v903 = vld [vmem:[%s5 + $0x638] sm:$0xff]
    %v904 = vld [vmem:[%s5 + $0x640] sm:$0xff]
    %v905 = vld [vmem:[%s5 + $0x648] sm:$0xff]
    %v906 = vld [vmem:[%s5 + $0x650] sm:$0xff]
    %v907 = vld [vmem:[%s5 + $0x658] sm:$0xff]
    %v908 = vld [vmem:[%s5 + $0x660] sm:$0xff]
    %v909 = vld [vmem:[%s5 + $0x668] sm:$0xff]
    %v910 = vld [vmem:[%s5 + $0x670] sm:$0xff]
    %v911 = vld [vmem:[%s5 + $0x678] sm:$0xff]
    %v912 = vld [vmem:[%s5 + $0x680] sm:$0xff]
    %v913 = vld [vmem:[%s5 + $0x688] sm:$0xff]
    %v914 = vld [vmem:[%s5 + $0x690] sm:$0xff]
    %v915 = vld [vmem:[%s5 + $0x698] sm:$0xff]
    %v916 = vld [vmem:[%s5 + $0x6a0] sm:$0xff]
    %v917 = vld [vmem:[%s5 + $0x6a8] sm:$0xff]
    %v918 = vld [vmem:[%s5 + $0x6b0] sm:$0xf]
    %v919 = vld [vmem:[%s5 + $0x6b4] sm:$0xff]
    %v920 = vld [vmem:[%s5 + $0x6bc] sm:$0xff]
    %v921 = vld [vmem:[%s5 + $0x6c4] sm:$0xff]
    %v922 = vld [vmem:[%s5 + $0x6cc] sm:$0xff]
    %v923 = vld [vmem:[%s5 + $0x6d4] sm:$0xff]
    %v924 = vld [vmem:[%s5 + $0x6dc] sm:$0xff]
    %v925 = vld [vmem:[%s5 + $0x6e4] sm:$0xff]
    %v926 = vld [vmem:[%s5 + $0x6ec] sm:$0xff]
    %v927 = vld [vmem:[%s5 + $0x6f4] sm:$0xff]
    %v928 = vld [vmem:[%s5 + $0x6fc] sm:$0xff]
    %v929 = vld [vmem:[%s5 + $0x704] sm:$0xff]
    %v930 = vld [vmem:[%s5 + $0x70c] sm:$0xff]
    %v931 = vld [vmem:[%s5 + $0x714] sm:$0xff]
    %v932 = vld [vmem:[%s5 + $0x71c] sm:$0xff]
    %v933 = vld [vmem:[%s5 + $0x724] sm:$0xff]
    %v934 = vld [vmem:[%s5 + $0x72c] sm:$0xff]
    %v935 = vld [vmem:[%s5 + $0x734] sm:$0xf]
    %v936 = vld [vmem:[%s5 + $0x738] sm:$0xff]
    %v937 = vld [vmem:[%s5 + $0x740] sm:$0xff]
    %v938 = vld [vmem:[%s5 + $0x748] sm:$0xff]
    %v939 = vld [vmem:[%s5 + $0x750] sm:$0xff]
    %v940 = vld [vmem:[%s5 + $0x758] sm:$0xff]
    %v941 = vld [vmem:[%s5 + $0x760] sm:$0xff]
    %v942 = vld [vmem:[%s5 + $0x768] sm:$0xff]
    %v943 = vld [vmem:[%s5 + $0x770] sm:$0xff]
    %v944 = vld [vmem:[%s5 + $0x778] sm:$0xff]
    %v945 = vld [vmem:[%s5 + $0x780] sm:$0xff]
    %v946 = vld [vmem:[%s5 + $0x788] sm:$0xff]
    %v947 = vld [vmem:[%s5 + $0x790] sm:$0xff]
    %v948 = vld [vmem:[%s5 + $0x798] sm:$0xff]
    %v949 = vld [vmem:[%s5 + $0x7a0] sm:$0xff]
    %v950 = vld [vmem:[%s5 + $0x7a8] sm:$0xff]
    %v951 = vld [vmem:[%s5 + $0x7b0] sm:$0xff]
    %v952 = vld [vmem:[%s5 + $0x7b8] sm:$0xf]
    %v953 = vld [vmem:[%s5 + $0x7bc] sm:$0xff]
    %v954 = vld [vmem:[%s5 + $0x7c4] sm:$0xff]
    %v955 = vld [vmem:[%s5 + $0x7cc] sm:$0xff]
    %v956 = vld [vmem:[%s5 + $0x7d4] sm:$0xff]
    %v957 = vld [vmem:[%s5 + $0x7dc] sm:$0xff]
    %v958 = vld [vmem:[%s5 + $0x7e4] sm:$0xff]
    %v959 = vld [vmem:[%s5 + $0x7ec] sm:$0xff]
    %v960 = vld [vmem:[%s5 + $0x7f4] sm:$0xff]
    %v961 = vld [vmem:[%s5 + $0x7fc] sm:$0xff]
    %v962 = vld [vmem:[%s5 + $0x804] sm:$0xff]
    %v963 = vld [vmem:[%s5 + $0x80c] sm:$0xff]
    %v964 = vld [vmem:[%s5 + $0x814] sm:$0xff]
    %v965 = vld [vmem:[%s5 + $0x81c] sm:$0xff]
    %v966 = vld [vmem:[%s5 + $0x824] sm:$0xff]
    %v967 = vld [vmem:[%s5 + $0x82c] sm:$0xff]
    %v968 = vld [vmem:[%s5 + $0x834] sm:$0xff]
    %v969 = vld [vmem:[%s5 + $0x83c] sm:$0xf]
    %v970 = vld [vmem:[%s6] sm:$0xff]
    %v971 = vld [vmem:[%s6 + $0x8] sm:$0xff]
    %v972 = vld [vmem:[%s6 + $0x10] sm:$0xff]
    %v973 = vld [vmem:[%s6 + $0x18] sm:$0xff]
    %v974 = vld [vmem:[%s6 + $0x20] sm:$0x1]
    %v980 = vperm.slane %v970, 0
    %v981 = vperm.slane %v970, 1
    %v982 = vperm.slane %v970, 2
    %v983 = vperm.slane %v970, 3
    %v984 = vperm.slane %v970, 4
    %v985 = vperm.slane %v970, 5
    %v986 = vperm.slane %v970, 6
    %v987 = vperm.slane %v970, 7
    %v988 = vperm.slane %v971, 0
    %v989 = vperm.slane %v971, 1
    %v990 = vperm.slane %v971, 2
    %v991 = vperm.slane %v971, 3
    %v992 = vperm.slane %v971, 4
    %v993 = vperm.slane %v971, 5
    %v994 = vperm.slane %v971, 6
    %v995 = vperm.slane %v971, 7
    %v996 = vperm.slane %v972, 0
    %v997 = vperm.slane %v972, 1
    %v998 = vperm.slane %v972, 2
    %v999 = vperm.slane %v972, 3
    %v1000 = vperm.slane %v972, 4
    %v1001 = vperm.slane %v972, 5
    %v1002 = vperm.slane %v972, 6
    %v1003 = vperm.slane %v972, 7
    %v1004 = vperm.slane %v973, 0
    %v1005 = vperm.slane %v973, 1
    %v1006 = vperm.slane %v973, 2
    %v1007 = vperm.slane %v973, 3
    %v1008 = vperm.slane %v973, 4
    %v1009 = vperm.slane %v973, 5
    %v1010 = vperm.slane %v973, 6
    %v1011 = vperm.slane %v973, 7
    %v1012 = vperm.slane %v974, 0
    %v1318 = vunpack.c.l.b16 %v698
    %v1319 = vunpack.c.h.b16 %v698
    %v1320 = vunpack.c.l.b16 %v699
    %v1321 = vunpack.c.h.b16 %v699
    %v1322 = vunpack.c.l.b16 %v700
    %v1323 = vunpack.c.h.b16 %v700
    %v1324 = vunpack.c.l.b16 %v701
    %v1325 = vunpack.c.h.b16 %v701
    %v1326 = vunpack.c.l.b16 %v702
    %v1327 = vunpack.c.h.b16 %v702
    %v1328 = vunpack.c.l.b16 %v703
    %v1329 = vunpack.c.h.b16 %v703
    %v1330 = vunpack.c.l.b16 %v704
    %v1331 = vunpack.c.h.b16 %v704
    %v1332 = vunpack.c.l.b16 %v705
    %v1333 = vunpack.c.h.b16 %v705
    %v1334 = vunpack.c.l.b16 %v706
    %v1335 = vunpack.c.h.b16 %v706
    %v1336 = vunpack.c.l.b16 %v707
    %v1337 = vunpack.c.h.b16 %v707
    %v1338 = vunpack.c.l.b16 %v708
    %v1339 = vunpack.c.h.b16 %v708
    %v1340 = vunpack.c.l.b16 %v709
    %v1341 = vunpack.c.h.b16 %v709
    %v1342 = vunpack.c.l.b16 %v710
    %v1343 = vunpack.c.h.b16 %v710
    %v1344 = vunpack.c.l.b16 %v711
    %v1345 = vunpack.c.h.b16 %v711
    %v1346 = vunpack.c.l.b16 %v712
    %v1347 = vunpack.c.h.b16 %v712
    %v1348 = vunpack.c.l.b16 %v713
    %v1349 = vunpack.c.h.b16 %v713
    %v1350 = vunpack.c.l.b16 %v714
    %v1351 = vunpack.c.l.b16 %v715
    %v1352 = vunpack.c.h.b16 %v715
    %v1353 = vunpack.c.l.b16 %v716
    %v1354 = vunpack.c.h.b16 %v716
    %v1355 = vunpack.c.l.b16 %v717
    %v1356 = vunpack.c.h.b16 %v717
    %v1357 = vunpack.c.l.b16 %v718
    %v1358 = vunpack.c.h.b16 %v718
    %v1359 = vunpack.c.l.b16 %v719
    %v1360 = vunpack.c.h.b16 %v719
    %v1361 = vunpack.c.l.b16 %v720
    %v1362 = vunpack.c.h.b16 %v720
    %v1363 = vunpack.c.l.b16 %v721
    %v1364 = vunpack.c.h.b16 %v721
    %v1365 = vunpack.c.l.b16 %v722
    %v1366 = vunpack.c.h.b16 %v722
    %v1367 = vunpack.c.l.b16 %v723
    %v1368 = vunpack.c.h.b16 %v723
    %v1369 = vunpack.c.l.b16 %v724
    %v1370 = vunpack.c.h.b16 %v724
    %v1371 = vunpack.c.l.b16 %v725
    %v1372 = vunpack.c.h.b16 %v725
    %v1373 = vunpack.c.l.b16 %v726
    %v1374 = vunpack.c.h.b16 %v726
    %v1375 = vunpack.c.l.b16 %v727
    %v1376 = vunpack.c.h.b16 %v727
    %v1377 = vunpack.c.l.b16 %v728
    %v1378 = vunpack.c.h.b16 %v728
    %v1379 = vunpack.c.l.b16 %v729
    %v1380 = vunpack.c.h.b16 %v729
    %v1381 = vunpack.c.l.b16 %v730
    %v1382 = vunpack.c.h.b16 %v730
    %v1383 = vunpack.c.l.b16 %v731
    %v1384 = vunpack.c.l.b16 %v732
    %v1385 = vunpack.c.h.b16 %v732
    %v1386 = vunpack.c.l.b16 %v733
    %v1387 = vunpack.c.h.b16 %v733
    %v1388 = vunpack.c.l.b16 %v734
    %v1389 = vunpack.c.h.b16 %v734
    %v1390 = vunpack.c.l.b16 %v735
    %v1391 = vunpack.c.h.b16 %v735
    %v1392 = vunpack.c.l.b16 %v736
    %v1393 = vunpack.c.h.b16 %v736
    %v1394 = vunpack.c.l.b16 %v737
    %v1395 = vunpack.c.h.b16 %v737
    %v1396 = vunpack.c.l.b16 %v738
    %v1397 = vunpack.c.h.b16 %v738
    %v1398 = vunpack.c.l.b16 %v739
    %v1399 = vunpack.c.h.b16 %v739
    %v1400 = vunpack.c.l.b16 %v740
    %v1401 = vunpack.c.h.b16 %v740
    %v1402 = vunpack.c.l.b16 %v741
    %v1403 = vunpack.c.h.b16 %v741
    %v1404 = vunpack.c.l.b16 %v742
    %v1405 = vunpack.c.h.b16 %v742
    %v1406 = vunpack.c.l.b16 %v743
    %v1407 = vunpack.c.h.b16 %v743
    %v1408 = vunpack.c.l.b16 %v744
    %v1409 = vunpack.c.h.b16 %v744
    %v1410 = vunpack.c.l.b16 %v745
    %v1411 = vunpack.c.h.b16 %v745
    %v1412 = vunpack.c.l.b16 %v746
    %v1413 = vunpack.c.h.b16 %v746
    %v1414 = vunpack.c.l.b16 %v747
    %v1415 = vunpack.c.h.b16 %v747
    %v1416 = vunpack.c.l.b16 %v748
    %v1417 = vunpack.c.l.b16 %v749
    %v1418 = vunpack.c.h.b16 %v749
    %v1419 = vunpack.c.l.b16 %v750
    %v1420 = vunpack.c.h.b16 %v750
    %v1421 = vunpack.c.l.b16 %v751
    %v1422 = vunpack.c.h.b16 %v751
    %v1423 = vunpack.c.l.b16 %v752
    %v1424 = vunpack.c.h.b16 %v752
    %v1425 = vunpack.c.l.b16 %v753
    %v1426 = vunpack.c.h.b16 %v753
    %v1427 = vunpack.c.l.b16 %v754
    %v1428 = vunpack.c.h.b16 %v754
    %v1429 = vunpack.c.l.b16 %v755
    %v1430 = vunpack.c.h.b16 %v755
    %v1431 = vunpack.c.l.b16 %v756
    %v1432 = vunpack.c.h.b16 %v756
    %v1433 = vunpack.c.l.b16 %v757
    %v1434 = vunpack.c.h.b16 %v757
    %v1435 = vunpack.c.l.b16 %v758
    %v1436 = vunpack.c.h.b16 %v758
    %v1437 = vunpack.c.l.b16 %v759
    %v1438 = vunpack.c.h.b16 %v759
    %v1439 = vunpack.c.l.b16 %v760
    %v1440 = vunpack.c.h.b16 %v760
    %v1441 = vunpack.c.l.b16 %v761
    %v1442 = vunpack.c.h.b16 %v761
    %v1443 = vunpack.c.l.b16 %v762
    %v1444 = vunpack.c.h.b16 %v762
    %v1445 = vunpack.c.l.b16 %v763
    %v1446 = vunpack.c.h.b16 %v763
    %v1447 = vunpack.c.l.b16 %v764
    %v1448 = vunpack.c.h.b16 %v764
    %v1449 = vunpack.c.l.b16 %v765
    %v1450 = vunpack.c.l.b16 %v766
    %v1451 = vunpack.c.h.b16 %v766
    %v1452 = vunpack.c.l.b16 %v767
    %v1453 = vunpack.c.h.b16 %v767
    %v1454 = vunpack.c.l.b16 %v768
    %v1455 = vunpack.c.h.b16 %v768
    %v1456 = vunpack.c.l.b16 %v769
    %v1457 = vunpack.c.h.b16 %v769
    %v1458 = vunpack.c.l.b16 %v770
    %v1459 = vunpack.c.h.b16 %v770
    %v1460 = vunpack.c.l.b16 %v771
    %v1461 = vunpack.c.h.b16 %v771
    %v1462 = vunpack.c.l.b16 %v772
    %v1463 = vunpack.c.h.b16 %v772
    %v1464 = vunpack.c.l.b16 %v773
    %v1465 = vunpack.c.h.b16 %v773
    %v1466 = vunpack.c.l.b16 %v774
    %v1467 = vunpack.c.h.b16 %v774
    %v1468 = vunpack.c.l.b16 %v775
    %v1469 = vunpack.c.h.b16 %v775
    %v1470 = vunpack.c.l.b16 %v776
    %v1471 = vunpack.c.h.b16 %v776
    %v1472 = vunpack.c.l.b16 %v777
    %v1473 = vunpack.c.h.b16 %v777
    %v1474 = vunpack.c.l.b16 %v778
    %v1475 = vunpack.c.h.b16 %v778
    %v1476 = vunpack.c.l.b16 %v779
    %v1477 = vunpack.c.h.b16 %v779
    %v1478 = vunpack.c.l.b16 %v780
    %v1479 = vunpack.c.h.b16 %v780
    %v1480 = vunpack.c.l.b16 %v781
    %v1481 = vunpack.c.h.b16 %v781
    %v1482 = vunpack.c.l.b16 %v782
    %v1483 = vunpack.c.l.b16 %v783
    %v1484 = vunpack.c.h.b16 %v783
    %v1485 = vunpack.c.l.b16 %v784
    %v1486 = vunpack.c.h.b16 %v784
    %v1487 = vunpack.c.l.b16 %v785
    %v1488 = vunpack.c.h.b16 %v785
    %v1489 = vunpack.c.l.b16 %v786
    %v1490 = vunpack.c.h.b16 %v786
    %v1491 = vunpack.c.l.b16 %v787
    %v1492 = vunpack.c.h.b16 %v787
    %v1493 = vunpack.c.l.b16 %v788
    %v1494 = vunpack.c.h.b16 %v788
    %v1495 = vunpack.c.l.b16 %v789
    %v1496 = vunpack.c.h.b16 %v789
    %v1497 = vunpack.c.l.b16 %v790
    %v1498 = vunpack.c.h.b16 %v790
    %v1499 = vunpack.c.l.b16 %v791
    %v1500 = vunpack.c.h.b16 %v791
    %v1501 = vunpack.c.l.b16 %v792
    %v1502 = vunpack.c.h.b16 %v792
    %v1503 = vunpack.c.l.b16 %v793
    %v1504 = vunpack.c.h.b16 %v793
    %v1505 = vunpack.c.l.b16 %v794
    %v1506 = vunpack.c.h.b16 %v794
    %v1507 = vunpack.c.l.b16 %v795
    %v1508 = vunpack.c.h.b16 %v795
    %v1509 = vunpack.c.l.b16 %v796
    %v1510 = vunpack.c.h.b16 %v796
    %v1511 = vunpack.c.l.b16 %v797
    %v1512 = vunpack.c.h.b16 %v797
    %v1513 = vunpack.c.l.b16 %v798
    %v1514 = vunpack.c.h.b16 %v798
    %v1515 = vunpack.c.l.b16 %v799
    %v1516 = vunpack.c.l.b16 %v800
    %v1517 = vunpack.c.h.b16 %v800
    %v1518 = vunpack.c.l.b16 %v801
    %v1519 = vunpack.c.h.b16 %v801
    %v1520 = vunpack.c.l.b16 %v802
    %v1521 = vunpack.c.h.b16 %v802
    %v1522 = vunpack.c.l.b16 %v803
    %v1523 = vunpack.c.h.b16 %v803
    %v1524 = vunpack.c.l.b16 %v804
    %v1525 = vunpack.c.h.b16 %v804
    %v1526 = vunpack.c.l.b16 %v805
    %v1527 = vunpack.c.h.b16 %v805
    %v1528 = vunpack.c.l.b16 %v806
    %v1529 = vunpack.c.h.b16 %v806
    %v1530 = vunpack.c.l.b16 %v807
    %v1531 = vunpack.c.h.b16 %v807
    %v1532 = vunpack.c.l.b16 %v808
    %v1533 = vunpack.c.h.b16 %v808
    %v1534 = vunpack.c.l.b16 %v809
    %v1535 = vunpack.c.h.b16 %v809
    %v1536 = vunpack.c.l.b16 %v810
    %v1537 = vunpack.c.h.b16 %v810
    %v1538 = vunpack.c.l.b16 %v811
    %v1539 = vunpack.c.h.b16 %v811
    %v1540 = vunpack.c.l.b16 %v812
    %v1541 = vunpack.c.h.b16 %v812
    %v1542 = vunpack.c.l.b16 %v813
    %v1543 = vunpack.c.h.b16 %v813
    %v1544 = vunpack.c.l.b16 %v814
    %v1545 = vunpack.c.h.b16 %v814
    %v1546 = vunpack.c.l.b16 %v815
    %v1547 = vunpack.c.h.b16 %v815
    %v1548 = vunpack.c.l.b16 %v816
    %v1549 = vunpack.c.l.b16 %v817
    %v1550 = vunpack.c.h.b16 %v817
    %v1551 = vunpack.c.l.b16 %v818
    %v1552 = vunpack.c.h.b16 %v818
    %v1553 = vunpack.c.l.b16 %v819
    %v1554 = vunpack.c.h.b16 %v819
    %v1555 = vunpack.c.l.b16 %v820
    %v1556 = vunpack.c.h.b16 %v820
    %v1557 = vunpack.c.l.b16 %v821
    %v1558 = vunpack.c.h.b16 %v821
    %v1559 = vunpack.c.l.b16 %v822
    %v1560 = vunpack.c.h.b16 %v822
    %v1561 = vunpack.c.l.b16 %v823
    %v1562 = vunpack.c.h.b16 %v823
    %v1563 = vunpack.c.l.b16 %v824
    %v1564 = vunpack.c.h.b16 %v824
    %v1565 = vunpack.c.l.b16 %v825
    %v1566 = vunpack.c.h.b16 %v825
    %v1567 = vunpack.c.l.b16 %v826
    %v1568 = vunpack.c.h.b16 %v826
    %v1569 = vunpack.c.l.b16 %v827
    %v1570 = vunpack.c.h.b16 %v827
    %v1571 = vunpack.c.l.b16 %v828
    %v1572 = vunpack.c.h.b16 %v828
    %v1573 = vunpack.c.l.b16 %v829
    %v1574 = vunpack.c.h.b16 %v829
    %v1575 = vunpack.c.l.b16 %v830
    %v1576 = vunpack.c.h.b16 %v830
    %v1577 = vunpack.c.l.b16 %v831
    %v1578 = vunpack.c.h.b16 %v831
    %v1579 = vunpack.c.l.b16 %v832
    %v1580 = vunpack.c.h.b16 %v832
    %v1581 = vunpack.c.l.b16 %v833
    %v1582 = vunpack.c.l.b16 %v834
    %v1583 = vunpack.c.h.b16 %v834
    %v1584 = vunpack.c.l.b16 %v835
    %v1585 = vunpack.c.h.b16 %v835
    %v1586 = vunpack.c.l.b16 %v836
    %v1587 = vunpack.c.h.b16 %v836
    %v1588 = vunpack.c.l.b16 %v837
    %v1589 = vunpack.c.h.b16 %v837
    %v1590 = vunpack.c.l.b16 %v838
    %v1591 = vunpack.c.h.b16 %v838
    %v1592 = vunpack.c.l.b16 %v839
    %v1593 = vunpack.c.h.b16 %v839
    %v1594 = vunpack.c.l.b16 %v840
    %v1595 = vunpack.c.h.b16 %v840
    %v1596 = vunpack.c.l.b16 %v841
    %v1597 = vunpack.c.h.b16 %v841
    %v1598 = vunpack.c.l.b16 %v842
    %v1599 = vunpack.c.h.b16 %v842
    %v1600 = vunpack.c.l.b16 %v843
    %v1601 = vunpack.c.h.b16 %v843
    %v1602 = vunpack.c.l.b16 %v844
    %v1603 = vunpack.c.h.b16 %v844
    %v1604 = vunpack.c.l.b16 %v845
    %v1605 = vunpack.c.h.b16 %v845
    %v1606 = vunpack.c.l.b16 %v846
    %v1607 = vunpack.c.h.b16 %v846
    %v1608 = vunpack.c.l.b16 %v847
    %v1609 = vunpack.c.h.b16 %v847
    %v1610 = vunpack.c.l.b16 %v848
    %v1611 = vunpack.c.h.b16 %v848
    %v1612 = vunpack.c.l.b16 %v849
    %v1613 = vunpack.c.h.b16 %v849
    %v1614 = vunpack.c.l.b16 %v850
    %v1615 = vunpack.c.l.b16 %v851
    %v1616 = vunpack.c.h.b16 %v851
    %v1617 = vunpack.c.l.b16 %v852
    %v1618 = vunpack.c.h.b16 %v852
    %v1619 = vunpack.c.l.b16 %v853
    %v1620 = vunpack.c.h.b16 %v853
    %v1621 = vunpack.c.l.b16 %v854
    %v1622 = vunpack.c.h.b16 %v854
    %v1623 = vunpack.c.l.b16 %v855
    %v1624 = vunpack.c.h.b16 %v855
    %v1625 = vunpack.c.l.b16 %v856
    %v1626 = vunpack.c.h.b16 %v856
    %v1627 = vunpack.c.l.b16 %v857
    %v1628 = vunpack.c.h.b16 %v857
    %v1629 = vunpack.c.l.b16 %v858
    %v1630 = vunpack.c.h.b16 %v858
    %v1631 = vunpack.c.l.b16 %v859
    %v1632 = vunpack.c.h.b16 %v859
    %v1633 = vunpack.c.l.b16 %v860
    %v1634 = vunpack.c.h.b16 %v860
    %v1635 = vunpack.c.l.b16 %v861
    %v1636 = vunpack.c.h.b16 %v861
    %v1637 = vunpack.c.l.b16 %v862
    %v1638 = vunpack.c.h.b16 %v862
    %v1639 = vunpack.c.l.b16 %v863
    %v1640 = vunpack.c.h.b16 %v863
    %v1641 = vunpack.c.l.b16 %v864
    %v1642 = vunpack.c.h.b16 %v864
    %v1643 = vunpack.c.l.b16 %v865
    %v1644 = vunpack.c.h.b16 %v865
    %v1645 = vunpack.c.l.b16 %v866
    %v1646 = vunpack.c.h.b16 %v866
    %v1647 = vunpack.c.l.b16 %v867
    %v1648 = vunpack.c.l.b16 %v868
    %v1649 = vunpack.c.h.b16 %v868
    %v1650 = vunpack.c.l.b16 %v869
    %v1651 = vunpack.c.h.b16 %v869
    %v1652 = vunpack.c.l.b16 %v870
    %v1653 = vunpack.c.h.b16 %v870
    %v1654 = vunpack.c.l.b16 %v871
    %v1655 = vunpack.c.h.b16 %v871
    %v1656 = vunpack.c.l.b16 %v872
    %v1657 = vunpack.c.h.b16 %v872
    %v1658 = vunpack.c.l.b16 %v873
    %v1659 = vunpack.c.h.b16 %v873
    %v1660 = vunpack.c.l.b16 %v874
    %v1661 = vunpack.c.h.b16 %v874
    %v1662 = vunpack.c.l.b16 %v875
    %v1663 = vunpack.c.h.b16 %v875
    %v1664 = vunpack.c.l.b16 %v876
    %v1665 = vunpack.c.h.b16 %v876
    %v1666 = vunpack.c.l.b16 %v877
    %v1667 = vunpack.c.h.b16 %v877
    %v1668 = vunpack.c.l.b16 %v878
    %v1669 = vunpack.c.h.b16 %v878
    %v1670 = vunpack.c.l.b16 %v879
    %v1671 = vunpack.c.h.b16 %v879
    %v1672 = vunpack.c.l.b16 %v880
    %v1673 = vunpack.c.h.b16 %v880
    %v1674 = vunpack.c.l.b16 %v881
    %v1675 = vunpack.c.h.b16 %v881
    %v1676 = vunpack.c.l.b16 %v882
    %v1677 = vunpack.c.h.b16 %v882
    %v1678 = vunpack.c.l.b16 %v883
    %v1679 = vunpack.c.h.b16 %v883
    %v1680 = vunpack.c.l.b16 %v884
    %v1681 = vunpack.c.l.b16 %v885
    %v1682 = vunpack.c.h.b16 %v885
    %v1683 = vunpack.c.l.b16 %v886
    %v1684 = vunpack.c.h.b16 %v886
    %v1685 = vunpack.c.l.b16 %v887
    %v1686 = vunpack.c.h.b16 %v887
    %v1687 = vunpack.c.l.b16 %v888
    %v1688 = vunpack.c.h.b16 %v888
    %v1689 = vunpack.c.l.b16 %v889
    %v1690 = vunpack.c.h.b16 %v889
    %v1691 = vunpack.c.l.b16 %v890
    %v1692 = vunpack.c.h.b16 %v890
    %v1693 = vunpack.c.l.b16 %v891
    %v1694 = vunpack.c.h.b16 %v891
    %v1695 = vunpack.c.l.b16 %v892
    %v1696 = vunpack.c.h.b16 %v892
    %v1697 = vunpack.c.l.b16 %v893
    %v1698 = vunpack.c.h.b16 %v893
    %v1699 = vunpack.c.l.b16 %v894
    %v1700 = vunpack.c.h.b16 %v894
    %v1701 = vunpack.c.l.b16 %v895
    %v1702 = vunpack.c.h.b16 %v895
    %v1703 = vunpack.c.l.b16 %v896
    %v1704 = vunpack.c.h.b16 %v896
    %v1705 = vunpack.c.l.b16 %v897
    %v1706 = vunpack.c.h.b16 %v897
    %v1707 = vunpack.c.l.b16 %v898
    %v1708 = vunpack.c.h.b16 %v898
    %v1709 = vunpack.c.l.b16 %v899
    %v1710 = vunpack.c.h.b16 %v899
    %v1711 = vunpack.c.l.b16 %v900
    %v1712 = vunpack.c.h.b16 %v900
    %v1713 = vunpack.c.l.b16 %v901
    %v1714 = vunpack.c.l.b16 %v902
    %v1715 = vunpack.c.h.b16 %v902
    %v1716 = vunpack.c.l.b16 %v903
    %v1717 = vunpack.c.h.b16 %v903
    %v1718 = vunpack.c.l.b16 %v904
    %v1719 = vunpack.c.h.b16 %v904
    %v1720 = vunpack.c.l.b16 %v905
    %v1721 = vunpack.c.h.b16 %v905
    %v1722 = vunpack.c.l.b16 %v906
    %v1723 = vunpack.c.h.b16 %v906
    %v1724 = vunpack.c.l.b16 %v907
    %v1725 = vunpack.c.h.b16 %v907
    %v1726 = vunpack.c.l.b16 %v908
    %v1727 = vunpack.c.h.b16 %v908
    %v1728 = vunpack.c.l.b16 %v909
    %v1729 = vunpack.c.h.b16 %v909
    %v1730 = vunpack.c.l.b16 %v910
    %v1731 = vunpack.c.h.b16 %v910
    %v1732 = vunpack.c.l.b16 %v911
    %v1733 = vunpack.c.h.b16 %v911
    %v1734 = vunpack.c.l.b16 %v912
    %v1735 = vunpack.c.h.b16 %v912
    %v1736 = vunpack.c.l.b16 %v913
    %v1737 = vunpack.c.h.b16 %v913
    %v1738 = vunpack.c.l.b16 %v914
    %v1739 = vunpack.c.h.b16 %v914
    %v1740 = vunpack.c.l.b16 %v915
    %v1741 = vunpack.c.h.b16 %v915
    %v1742 = vunpack.c.l.b16 %v916
    %v1743 = vunpack.c.h.b16 %v916
    %v1744 = vunpack.c.l.b16 %v917
    %v1745 = vunpack.c.h.b16 %v917
    %v1746 = vunpack.c.l.b16 %v918
    %v1747 = vunpack.c.l.b16 %v919
    %v1748 = vunpack.c.h.b16 %v919
    %v1749 = vunpack.c.l.b16 %v920
    %v1750 = vunpack.c.h.b16 %v920
    %v1751 = vunpack.c.l.b16 %v921
    %v1752 = vunpack.c.h.b16 %v921
    %v1753 = vunpack.c.l.b16 %v922
    %v1754 = vunpack.c.h.b16 %v922
    %v1755 = vunpack.c.l.b16 %v923
    %v1756 = vunpack.c.h.b16 %v923
    %v1757 = vunpack.c.l.b16 %v924
    %v1758 = vunpack.c.h.b16 %v924
    %v1759 = vunpack.c.l.b16 %v925
    %v1760 = vunpack.c.h.b16 %v925
    %v1761 = vunpack.c.l.b16 %v926
    %v1762 = vunpack.c.h.b16 %v926
    %v1763 = vunpack.c.l.b16 %v927
    %v1764 = vunpack.c.h.b16 %v927
    %v1765 = vunpack.c.l.b16 %v928
    %v1766 = vunpack.c.h.b16 %v928
    %v1767 = vunpack.c.l.b16 %v929
    %v1768 = vunpack.c.h.b16 %v929
    %v1769 = vunpack.c.l.b16 %v930
    %v1770 = vunpack.c.h.b16 %v930
    %v1771 = vunpack.c.l.b16 %v931
    %v1772 = vunpack.c.h.b16 %v931
    %v1773 = vunpack.c.l.b16 %v932
    %v1774 = vunpack.c.h.b16 %v932
    %v1775 = vunpack.c.l.b16 %v933
    %v1776 = vunpack.c.h.b16 %v933
    %v1777 = vunpack.c.l.b16 %v934
    %v1778 = vunpack.c.h.b16 %v934
    %v1779 = vunpack.c.l.b16 %v935
    %v1780 = vunpack.c.l.b16 %v936
    %v1781 = vunpack.c.h.b16 %v936
    %v1782 = vunpack.c.l.b16 %v937
    %v1783 = vunpack.c.h.b16 %v937
    %v1784 = vunpack.c.l.b16 %v938
    %v1785 = vunpack.c.h.b16 %v938
    %v1786 = vunpack.c.l.b16 %v939
    %v1787 = vunpack.c.h.b16 %v939
    %v1788 = vunpack.c.l.b16 %v940
    %v1789 = vunpack.c.h.b16 %v940
    %v1790 = vunpack.c.l.b16 %v941
    %v1791 = vunpack.c.h.b16 %v941
    %v1792 = vunpack.c.l.b16 %v942
    %v1793 = vunpack.c.h.b16 %v942
    %v1794 = vunpack.c.l.b16 %v943
    %v1795 = vunpack.c.h.b16 %v943
    %v1796 = vunpack.c.l.b16 %v944
    %v1797 = vunpack.c.h.b16 %v944
    %v1798 = vunpack.c.l.b16 %v945
    %v1799 = vunpack.c.h.b16 %v945
    %v1800 = vunpack.c.l.b16 %v946
    %v1801 = vunpack.c.h.b16 %v946
    %v1802 = vunpack.c.l.b16 %v947
    %v1803 = vunpack.c.h.b16 %v947
    %v1804 = vunpack.c.l.b16 %v948
    %v1805 = vunpack.c.h.b16 %v948
    %v1806 = vunpack.c.l.b16 %v949
    %v1807 = vunpack.c.h.b16 %v949
    %v1808 = vunpack.c.l.b16 %v950
    %v1809 = vunpack.c.h.b16 %v950
    %v1810 = vunpack.c.l.b16 %v951
    %v1811 = vunpack.c.h.b16 %v951
    %v1812 = vunpack.c.l.b16 %v952
    %v1813 = vunpack.c.l.b16 %v953
    %v1814 = vunpack.c.h.b16 %v953
    %v1815 = vunpack.c.l.b16 %v954
    %v1816 = vunpack.c.h.b16 %v954
    %v1817 = vunpack.c.l.b16 %v955
    %v1818 = vunpack.c.h.b16 %v955
    %v1819 = vunpack.c.l.b16 %v956
    %v1820 = vunpack.c.h.b16 %v956
    %v1821 = vunpack.c.l.b16 %v957
    %v1822 = vunpack.c.h.b16 %v957
    %v1823 = vunpack.c.l.b16 %v958
    %v1824 = vunpack.c.h.b16 %v958
    %v1825 = vunpack.c.l.b16 %v959
    %v1826 = vunpack.c.h.b16 %v959
    %v1827 = vunpack.c.l.b16 %v960
    %v1828 = vunpack.c.h.b16 %v960
    %v1829 = vunpack.c.l.b16 %v961
    %v1830 = vunpack.c.h.b16 %v961
    %v1831 = vunpack.c.l.b16 %v962
    %v1832 = vunpack.c.h.b16 %v962
    %v1833 = vunpack.c.l.b16 %v963
    %v1834 = vunpack.c.h.b16 %v963
    %v1835 = vunpack.c.l.b16 %v964
    %v1836 = vunpack.c.h.b16 %v964
    %v1837 = vunpack.c.l.b16 %v965
    %v1838 = vunpack.c.h.b16 %v965
    %v1839 = vunpack.c.l.b16 %v966
    %v1840 = vunpack.c.h.b16 %v966
    %v1841 = vunpack.c.l.b16 %v967
    %v1842 = vunpack.c.h.b16 %v967
    %v1843 = vunpack.c.l.b16 %v968
    %v1844 = vunpack.c.h.b16 %v968
    %v1845 = vunpack.c.l.b16 %v969
    %v1846 = vpack.c.b16 %v1351, %v1318
    %v1847 = vpack.c.b16 %v1352, %v1319
    %v1848 = vpack.c.b16 %v1353, %v1320
    %v1849 = vpack.c.b16 %v1354, %v1321
    %v1850 = vpack.c.b16 %v1355, %v1322
    %v1851 = vpack.c.b16 %v1356, %v1323
    %v1852 = vpack.c.b16 %v1357, %v1324
    %v1853 = vpack.c.b16 %v1358, %v1325
    %v1854 = vpack.c.b16 %v1359, %v1326
    %v1855 = vpack.c.b16 %v1360, %v1327
    %v1856 = vpack.c.b16 %v1361, %v1328
    %v1857 = vpack.c.b16 %v1362, %v1329
    %v1858 = vpack.c.b16 %v1363, %v1330
    %v1859 = vpack.c.b16 %v1364, %v1331
    %v1860 = vpack.c.b16 %v1365, %v1332
    %v1861 = vpack.c.b16 %v1366, %v1333
    %v1862 = vpack.c.b16 %v1367, %v1334
    %v1863 = vpack.c.b16 %v1368, %v1335
    %v1864 = vpack.c.b16 %v1369, %v1336
    %v1865 = vpack.c.b16 %v1370, %v1337
    %v1866 = vpack.c.b16 %v1371, %v1338
    %v1867 = vpack.c.b16 %v1372, %v1339
    %v1868 = vpack.c.b16 %v1373, %v1340
    %v1869 = vpack.c.b16 %v1374, %v1341
    %v1870 = vpack.c.b16 %v1375, %v1342
    %v1871 = vpack.c.b16 %v1376, %v1343
    %v1872 = vpack.c.b16 %v1377, %v1344
    %v1873 = vpack.c.b16 %v1378, %v1345
    %v1874 = vpack.c.b16 %v1379, %v1346
    %v1875 = vpack.c.b16 %v1380, %v1347
    %v1876 = vpack.c.b16 %v1381, %v1348
    %v1877 = vpack.c.b16 %v1382, %v1349
    %v1878 = vpack.c.b16 %v1383, %v1350
    %v1879 = vpack.c.b16 %v1417, %v1384
    %v1880 = vpack.c.b16 %v1418, %v1385
    %v1881 = vpack.c.b16 %v1419, %v1386
    %v1882 = vpack.c.b16 %v1420, %v1387
    %v1883 = vpack.c.b16 %v1421, %v1388
    %v1884 = vpack.c.b16 %v1422, %v1389
    %v1885 = vpack.c.b16 %v1423, %v1390
    %v1886 = vpack.c.b16 %v1424, %v1391
    %v1887 = vpack.c.b16 %v1425, %v1392
    %v1888 = vpack.c.b16 %v1426, %v1393
    %v1889 = vpack.c.b16 %v1427, %v1394
    %v1890 = vpack.c.b16 %v1428, %v1395
    %v1891 = vpack.c.b16 %v1429, %v1396
    %v1892 = vpack.c.b16 %v1430, %v1397
    %v1893 = vpack.c.b16 %v1431, %v1398
    %v1894 = vpack.c.b16 %v1432, %v1399
    %v1895 = vpack.c.b16 %v1433, %v1400
    %v1896 = vpack.c.b16 %v1434, %v1401
    %v1897 = vpack.c.b16 %v1435, %v1402
    %v1898 = vpack.c.b16 %v1436, %v1403
    %v1899 = vpack.c.b16 %v1437, %v1404
    %v1900 = vpack.c.b16 %v1438, %v1405
    %v1901 = vpack.c.b16 %v1439, %v1406
    %v1902 = vpack.c.b16 %v1440, %v1407
    %v1903 = vpack.c.b16 %v1441, %v1408
    %v1904 = vpack.c.b16 %v1442, %v1409
    %v1905 = vpack.c.b16 %v1443, %v1410
    %v1906 = vpack.c.b16 %v1444, %v1411
    %v1907 = vpack.c.b16 %v1445, %v1412
    %v1908 = vpack.c.b16 %v1446, %v1413
    %v1909 = vpack.c.b16 %v1447, %v1414
    %v1910 = vpack.c.b16 %v1448, %v1415
    %v1911 = vpack.c.b16 %v1449, %v1416
    %v1912 = vpack.c.b16 %v1483, %v1450
    %v1913 = vpack.c.b16 %v1484, %v1451
    %v1914 = vpack.c.b16 %v1485, %v1452
    %v1915 = vpack.c.b16 %v1486, %v1453
    %v1916 = vpack.c.b16 %v1487, %v1454
    %v1917 = vpack.c.b16 %v1488, %v1455
    %v1918 = vpack.c.b16 %v1489, %v1456
    %v1919 = vpack.c.b16 %v1490, %v1457
    %v1920 = vpack.c.b16 %v1491, %v1458
    %v1921 = vpack.c.b16 %v1492, %v1459
    %v1922 = vpack.c.b16 %v1493, %v1460
    %v1923 = vpack.c.b16 %v1494, %v1461
    %v1924 = vpack.c.b16 %v1495, %v1462
    %v1925 = vpack.c.b16 %v1496, %v1463
    %v1926 = vpack.c.b16 %v1497, %v1464
    %v1927 = vpack.c.b16 %v1498, %v1465
    %v1928 = vpack.c.b16 %v1499, %v1466
    %v1929 = vpack.c.b16 %v1500, %v1467
    %v1930 = vpack.c.b16 %v1501, %v1468
    %v1931 = vpack.c.b16 %v1502, %v1469
    %v1932 = vpack.c.b16 %v1503, %v1470
    %v1933 = vpack.c.b16 %v1504, %v1471
    %v1934 = vpack.c.b16 %v1505, %v1472
    %v1935 = vpack.c.b16 %v1506, %v1473
    %v1936 = vpack.c.b16 %v1507, %v1474
    %v1937 = vpack.c.b16 %v1508, %v1475
    %v1938 = vpack.c.b16 %v1509, %v1476
    %v1939 = vpack.c.b16 %v1510, %v1477
    %v1940 = vpack.c.b16 %v1511, %v1478
    %v1941 = vpack.c.b16 %v1512, %v1479
    %v1942 = vpack.c.b16 %v1513, %v1480
    %v1943 = vpack.c.b16 %v1514, %v1481
    %v1944 = vpack.c.b16 %v1515, %v1482
    %v1945 = vpack.c.b16 %v1549, %v1516
    %v1946 = vpack.c.b16 %v1550, %v1517
    %v1947 = vpack.c.b16 %v1551, %v1518
    %v1948 = vpack.c.b16 %v1552, %v1519
    %v1949 = vpack.c.b16 %v1553, %v1520
    %v1950 = vpack.c.b16 %v1554, %v1521
    %v1951 = vpack.c.b16 %v1555, %v1522
    %v1952 = vpack.c.b16 %v1556, %v1523
    %v1953 = vpack.c.b16 %v1557, %v1524
    %v1954 = vpack.c.b16 %v1558, %v1525
    %v1955 = vpack.c.b16 %v1559, %v1526
    %v1956 = vpack.c.b16 %v1560, %v1527
    %v1957 = vpack.c.b16 %v1561, %v1528
    %v1958 = vpack.c.b16 %v1562, %v1529
    %v1959 = vpack.c.b16 %v1563, %v1530
    %v1960 = vpack.c.b16 %v1564, %v1531
    %v1961 = vpack.c.b16 %v1565, %v1532
    %v1962 = vpack.c.b16 %v1566, %v1533
    %v1963 = vpack.c.b16 %v1567, %v1534
    %v1964 = vpack.c.b16 %v1568, %v1535
    %v1965 = vpack.c.b16 %v1569, %v1536
    %v1966 = vpack.c.b16 %v1570, %v1537
    %v1967 = vpack.c.b16 %v1571, %v1538
    %v1968 = vpack.c.b16 %v1572, %v1539
    %v1969 = vpack.c.b16 %v1573, %v1540
    %v1970 = vpack.c.b16 %v1574, %v1541
    %v1971 = vpack.c.b16 %v1575, %v1542
    %v1972 = vpack.c.b16 %v1576, %v1543
    %v1973 = vpack.c.b16 %v1577, %v1544
    %v1974 = vpack.c.b16 %v1578, %v1545
    %v1975 = vpack.c.b16 %v1579, %v1546
    %v1976 = vpack.c.b16 %v1580, %v1547
    %v1977 = vpack.c.b16 %v1581, %v1548
    %v1978 = vpack.c.b16 %v1615, %v1582
    %v1979 = vpack.c.b16 %v1616, %v1583
    %v1980 = vpack.c.b16 %v1617, %v1584
    %v1981 = vpack.c.b16 %v1618, %v1585
    %v1982 = vpack.c.b16 %v1619, %v1586
    %v1983 = vpack.c.b16 %v1620, %v1587
    %v1984 = vpack.c.b16 %v1621, %v1588
    %v1985 = vpack.c.b16 %v1622, %v1589
    %v1986 = vpack.c.b16 %v1623, %v1590
    %v1987 = vpack.c.b16 %v1624, %v1591
    %v1988 = vpack.c.b16 %v1625, %v1592
    %v1989 = vpack.c.b16 %v1626, %v1593
    %v1990 = vpack.c.b16 %v1627, %v1594
    %v1991 = vpack.c.b16 %v1628, %v1595
    %v1992 = vpack.c.b16 %v1629, %v1596
    %v1993 = vpack.c.b16 %v1630, %v1597
    %v1994 = vpack.c.b16 %v1631, %v1598
    %v1995 = vpack.c.b16 %v1632, %v1599
    %v1996 = vpack.c.b16 %v1633, %v1600
    %v1997 = vpack.c.b16 %v1634, %v1601
    %v1998 = vpack.c.b16 %v1635, %v1602
    %v1999 = vpack.c.b16 %v1636, %v1603
    %v2000 = vpack.c.b16 %v1637, %v1604
    %v2001 = vpack.c.b16 %v1638, %v1605
    %v2002 = vpack.c.b16 %v1639, %v1606
    %v2003 = vpack.c.b16 %v1640, %v1607
    %v2004 = vpack.c.b16 %v1641, %v1608
    %v2005 = vpack.c.b16 %v1642, %v1609
    %v2006 = vpack.c.b16 %v1643, %v1610
    %v2007 = vpack.c.b16 %v1644, %v1611
    %v2008 = vpack.c.b16 %v1645, %v1612
    %v2009 = vpack.c.b16 %v1646, %v1613
    %v2010 = vpack.c.b16 %v1647, %v1614
    %v2011 = vpack.c.b16 %v1681, %v1648
    %v2012 = vpack.c.b16 %v1682, %v1649
    %v2013 = vpack.c.b16 %v1683, %v1650
    %v2014 = vpack.c.b16 %v1684, %v1651
    %v2015 = vpack.c.b16 %v1685, %v1652
    %v2016 = vpack.c.b16 %v1686, %v1653
    %v2017 = vpack.c.b16 %v1687, %v1654
    %v2018 = vpack.c.b16 %v1688, %v1655
    %v2019 = vpack.c.b16 %v1689, %v1656
    %v2020 = vpack.c.b16 %v1690, %v1657
    %v2021 = vpack.c.b16 %v1691, %v1658
    %v2022 = vpack.c.b16 %v1692, %v1659
    %v2023 = vpack.c.b16 %v1693, %v1660
    %v2024 = vpack.c.b16 %v1694, %v1661
    %v2025 = vpack.c.b16 %v1695, %v1662
    %v2026 = vpack.c.b16 %v1696, %v1663
    %v2027 = vpack.c.b16 %v1697, %v1664
    %v2028 = vpack.c.b16 %v1698, %v1665
    %v2029 = vpack.c.b16 %v1699, %v1666
    %v2030 = vpack.c.b16 %v1700, %v1667
    %v2031 = vpack.c.b16 %v1701, %v1668
    %v2032 = vpack.c.b16 %v1702, %v1669
    %v2033 = vpack.c.b16 %v1703, %v1670
    %v2034 = vpack.c.b16 %v1704, %v1671
    %v2035 = vpack.c.b16 %v1705, %v1672
    %v2036 = vpack.c.b16 %v1706, %v1673
    %v2037 = vpack.c.b16 %v1707, %v1674
    %v2038 = vpack.c.b16 %v1708, %v1675
    %v2039 = vpack.c.b16 %v1709, %v1676
    %v2040 = vpack.c.b16 %v1710, %v1677
    %v2041 = vpack.c.b16 %v1711, %v1678
    %v2042 = vpack.c.b16 %v1712, %v1679
    %v2043 = vpack.c.b16 %v1713, %v1680
    %v2044 = vpack.c.b16 %v1747, %v1714
    %v2045 = vpack.c.b16 %v1748, %v1715
    %v2046 = vpack.c.b16 %v1749, %v1716
    %v2047 = vpack.c.b16 %v1750, %v1717
    %v2048 = vpack.c.b16 %v1751, %v1718
    %v2049 = vpack.c.b16 %v1752, %v1719
    %v2050 = vpack.c.b16 %v1753, %v1720
    %v2051 = vpack.c.b16 %v1754, %v1721
    %v2052 = vpack.c.b16 %v1755, %v1722
    %v2053 = vpack.c.b16 %v1756, %v1723
    %v2054 = vpack.c.b16 %v1757, %v1724
    %v2055 = vpack.c.b16 %v1758, %v1725
    %v2056 = vpack.c.b16 %v1759, %v1726
    %v2057 = vpack.c.b16 %v1760, %v1727
    %v2058 = vpack.c.b16 %v1761, %v1728
    %v2059 = vpack.c.b16 %v1762, %v1729
    %v2060 = vpack.c.b16 %v1763, %v1730
    %v2061 = vpack.c.b16 %v1764, %v1731
    %v2062 = vpack.c.b16 %v1765, %v1732
    %v2063 = vpack.c.b16 %v1766, %v1733
    %v2064 = vpack.c.b16 %v1767, %v1734
    %v2065 = vpack.c.b16 %v1768, %v1735
    %v2066 = vpack.c.b16 %v1769, %v1736
    %v2067 = vpack.c.b16 %v1770, %v1737
    %v2068 = vpack.c.b16 %v1771, %v1738
    %v2069 = vpack.c.b16 %v1772, %v1739
    %v2070 = vpack.c.b16 %v1773, %v1740
    %v2071 = vpack.c.b16 %v1774, %v1741
    %v2072 = vpack.c.b16 %v1775, %v1742
    %v2073 = vpack.c.b16 %v1776, %v1743
    %v2074 = vpack.c.b16 %v1777, %v1744
    %v2075 = vpack.c.b16 %v1778, %v1745
    %v2076 = vpack.c.b16 %v1779, %v1746
    %v2077 = vpack.c.b16 %v1813, %v1780
    %v2078 = vpack.c.b16 %v1814, %v1781
    %v2079 = vpack.c.b16 %v1815, %v1782
    %v2080 = vpack.c.b16 %v1816, %v1783
    %v2081 = vpack.c.b16 %v1817, %v1784
    %v2082 = vpack.c.b16 %v1818, %v1785
    %v2083 = vpack.c.b16 %v1819, %v1786
    %v2084 = vpack.c.b16 %v1820, %v1787
    %v2085 = vpack.c.b16 %v1821, %v1788
    %v2086 = vpack.c.b16 %v1822, %v1789
    %v2087 = vpack.c.b16 %v1823, %v1790
    %v2088 = vpack.c.b16 %v1824, %v1791
    %v2089 = vpack.c.b16 %v1825, %v1792
    %v2090 = vpack.c.b16 %v1826, %v1793
    %v2091 = vpack.c.b16 %v1827, %v1794
    %v2092 = vpack.c.b16 %v1828, %v1795
    %v2093 = vpack.c.b16 %v1829, %v1796
    %v2094 = vpack.c.b16 %v1830, %v1797
    %v2095 = vpack.c.b16 %v1831, %v1798
    %v2096 = vpack.c.b16 %v1832, %v1799
    %v2097 = vpack.c.b16 %v1833, %v1800
    %v2098 = vpack.c.b16 %v1834, %v1801
    %v2099 = vpack.c.b16 %v1835, %v1802
    %v2100 = vpack.c.b16 %v1836, %v1803
    %v2101 = vpack.c.b16 %v1837, %v1804
    %v2102 = vpack.c.b16 %v1838, %v1805
    %v2103 = vpack.c.b16 %v1839, %v1806
    %v2104 = vpack.c.b16 %v1840, %v1807
    %v2105 = vpack.c.b16 %v1841, %v1808
    %v2106 = vpack.c.b16 %v1842, %v1809
    %v2107 = vpack.c.b16 %v1843, %v1810
    %v2108 = vpack.c.b16 %v1844, %v1811
    %v2109 = vpack.c.b16 %v1845, %v1812
    %2374 = vmatpush.bf16.msra.mxu0 %v2077
    %2375 = vmatpush.bf16.msra.mxu0 %v2044
    %2376 = vmatpush.bf16.msra.mxu0 %v2011
    %2377 = vmatpush.bf16.msra.mxu0 %v1978
    %2378 = vmatpush.bf16.msra.mxu0 %v1945
    %2379 = vmatpush.bf16.msra.mxu0 %v1912
    %2380 = vmatpush.bf16.msra.mxu0 %v1879
    %2381 = vmatpush.bf16.msra.mxu0 %v1846
    %2382 = vmatmul.bf16.gmra.mxu0 %v697
    %v2383 = vpop.f32.mrf.mxu0
    %v2384 = vadd.f32 %v980, %v2383
    %v2385 = vpop.f32.mrf.mxu0
    %2386 = vdwg.mxu0
    %2387 = vmatpush.bf16.msra.mxu0 %v2078
    %2388 = vmatpush.bf16.msra.mxu0 %v2045
    %2389 = vmatpush.bf16.msra.mxu0 %v2012
    %2390 = vmatpush.bf16.msra.mxu0 %v1979
    %2391 = vmatpush.bf16.msra.mxu0 %v1946
    %2392 = vmatpush.bf16.msra.mxu0 %v1913
    %2393 = vmatpush.bf16.msra.mxu0 %v1880
    %2394 = vmatpush.bf16.msra.mxu0 %v1847
    %2395 = vmatmul.bf16.gmra.mxu0 %v697
    %v2396 = vpop.f32.mrf.mxu0
    %v2397 = vadd.f32 %v981, %v2396
    %v2398 = vpop.f32.mrf.mxu0
    %2399 = vdwg.mxu0
    %2400 = vmatpush.bf16.msra.mxu0 %v2079
    %2401 = vmatpush.bf16.msra.mxu0 %v2046
    %2402 = vmatpush.bf16.msra.mxu0 %v2013
    %2403 = vmatpush.bf16.msra.mxu0 %v1980
    %2404 = vmatpush.bf16.msra.mxu0 %v1947
    %2405 = vmatpush.bf16.msra.mxu0 %v1914
    %2406 = vmatpush.bf16.msra.mxu0 %v1881
    %2407 = vmatpush.bf16.msra.mxu0 %v1848
    %2408 = vmatmul.bf16.gmra.mxu0 %v697
    %v2409 = vpop.f32.mrf.mxu0
    %v2410 = vadd.f32 %v982, %v2409
    %v2411 = vpop.f32.mrf.mxu0
    %2412 = vdwg.mxu0
    %2413 = vmatpush.bf16.msra.mxu0 %v2080
    %2414 = vmatpush.bf16.msra.mxu0 %v2047
    %2415 = vmatpush.bf16.msra.mxu0 %v2014
    %2416 = vmatpush.bf16.msra.mxu0 %v1981
    %2417 = vmatpush.bf16.msra.mxu0 %v1948
    %2418 = vmatpush.bf16.msra.mxu0 %v1915
    %2419 = vmatpush.bf16.msra.mxu0 %v1882
    %2420 = vmatpush.bf16.msra.mxu0 %v1849
    %2421 = vmatmul.bf16.gmra.mxu0 %v697
    %v2422 = vpop.f32.mrf.mxu0
    %v2423 = vadd.f32 %v983, %v2422
    %v2424 = vpop.f32.mrf.mxu0
    %2425 = vdwg.mxu0
    %2426 = vmatpush.bf16.msra.mxu0 %v2081
    %2427 = vmatpush.bf16.msra.mxu0 %v2048
    %2428 = vmatpush.bf16.msra.mxu0 %v2015
    %2429 = vmatpush.bf16.msra.mxu0 %v1982
    %2430 = vmatpush.bf16.msra.mxu0 %v1949
    %2431 = vmatpush.bf16.msra.mxu0 %v1916
    %2432 = vmatpush.bf16.msra.mxu0 %v1883
    %2433 = vmatpush.bf16.msra.mxu0 %v1850
    %2434 = vmatmul.bf16.gmra.mxu0 %v697
    %v2435 = vpop.f32.mrf.mxu0
    %v2436 = vadd.f32 %v984, %v2435
    %v2437 = vpop.f32.mrf.mxu0
    %2438 = vdwg.mxu0
    %2439 = vmatpush.bf16.msra.mxu0 %v2082
    %2440 = vmatpush.bf16.msra.mxu0 %v2049
    %2441 = vmatpush.bf16.msra.mxu0 %v2016
    %2442 = vmatpush.bf16.msra.mxu0 %v1983
    %2443 = vmatpush.bf16.msra.mxu0 %v1950
    %2444 = vmatpush.bf16.msra.mxu0 %v1917
    %2445 = vmatpush.bf16.msra.mxu0 %v1884
    %2446 = vmatpush.bf16.msra.mxu0 %v1851
    %2447 = vmatmul.bf16.gmra.mxu0 %v697
    %v2448 = vpop.f32.mrf.mxu0
    %v2449 = vadd.f32 %v985, %v2448
    %v2450 = vpop.f32.mrf.mxu0
    %2451 = vdwg.mxu0
    %2452 = vmatpush.bf16.msra.mxu0 %v2083
    %2453 = vmatpush.bf16.msra.mxu0 %v2050
    %2454 = vmatpush.bf16.msra.mxu0 %v2017
    %2455 = vmatpush.bf16.msra.mxu0 %v1984
    %2456 = vmatpush.bf16.msra.mxu0 %v1951
    %2457 = vmatpush.bf16.msra.mxu0 %v1918
    %2458 = vmatpush.bf16.msra.mxu0 %v1885
    %2459 = vmatpush.bf16.msra.mxu0 %v1852
    %2460 = vmatmul.bf16.gmra.mxu0 %v697
    %v2461 = vpop.f32.mrf.mxu0
    %v2462 = vadd.f32 %v986, %v2461
    %v2463 = vpop.f32.mrf.mxu0
    %2464 = vdwg.mxu0
    %2465 = vmatpush.bf16.msra.mxu0 %v2084
    %2466 = vmatpush.bf16.msra.mxu0 %v2051
    %2467 = vmatpush.bf16.msra.mxu0 %v2018
    %2468 = vmatpush.bf16.msra.mxu0 %v1985
    %2469 = vmatpush.bf16.msra.mxu0 %v1952
    %2470 = vmatpush.bf16.msra.mxu0 %v1919
    %2471 = vmatpush.bf16.msra.mxu0 %v1886
    %2472 = vmatpush.bf16.msra.mxu0 %v1853
    %2473 = vmatmul.bf16.gmra.mxu0 %v697
    %v2474 = vpop.f32.mrf.mxu0
    %v2475 = vadd.f32 %v987, %v2474
    %v2476 = vpop.f32.mrf.mxu0
    %2477 = vdwg.mxu0
    %2478 = vmatpush.bf16.msra.mxu0 %v2085
    %2479 = vmatpush.bf16.msra.mxu0 %v2052
    %2480 = vmatpush.bf16.msra.mxu0 %v2019
    %2481 = vmatpush.bf16.msra.mxu0 %v1986
    %2482 = vmatpush.bf16.msra.mxu0 %v1953
    %2483 = vmatpush.bf16.msra.mxu0 %v1920
    %2484 = vmatpush.bf16.msra.mxu0 %v1887
    %2485 = vmatpush.bf16.msra.mxu0 %v1854
    %2486 = vmatmul.bf16.gmra.mxu0 %v697
    %v2487 = vpop.f32.mrf.mxu0
    %v2488 = vadd.f32 %v988, %v2487
    %v2489 = vpop.f32.mrf.mxu0
    %2490 = vdwg.mxu0
    %2491 = vmatpush.bf16.msra.mxu0 %v2086
    %2492 = vmatpush.bf16.msra.mxu0 %v2053
    %2493 = vmatpush.bf16.msra.mxu0 %v2020
    %2494 = vmatpush.bf16.msra.mxu0 %v1987
    %2495 = vmatpush.bf16.msra.mxu0 %v1954
    %2496 = vmatpush.bf16.msra.mxu0 %v1921
    %2497 = vmatpush.bf16.msra.mxu0 %v1888
    %2498 = vmatpush.bf16.msra.mxu0 %v1855
    %2499 = vmatmul.bf16.gmra.mxu0 %v697
    %v2500 = vpop.f32.mrf.mxu0
    %v2501 = vadd.f32 %v989, %v2500
    %v2502 = vpop.f32.mrf.mxu0
    %2503 = vdwg.mxu0
    %2504 = vmatpush.bf16.msra.mxu0 %v2087
    %2505 = vmatpush.bf16.msra.mxu0 %v2054
    %2506 = vmatpush.bf16.msra.mxu0 %v2021
    %2507 = vmatpush.bf16.msra.mxu0 %v1988
    %2508 = vmatpush.bf16.msra.mxu0 %v1955
    %2509 = vmatpush.bf16.msra.mxu0 %v1922
    %2510 = vmatpush.bf16.msra.mxu0 %v1889
    %2511 = vmatpush.bf16.msra.mxu0 %v1856
    %2512 = vmatmul.bf16.gmra.mxu0 %v697
    %v2513 = vpop.f32.mrf.mxu0
    %v2514 = vadd.f32 %v990, %v2513
    %v2515 = vpop.f32.mrf.mxu0
    %2516 = vdwg.mxu0
    %2517 = vmatpush.bf16.msra.mxu0 %v2088
    %2518 = vmatpush.bf16.msra.mxu0 %v2055
    %2519 = vmatpush.bf16.msra.mxu0 %v2022
    %2520 = vmatpush.bf16.msra.mxu0 %v1989
    %2521 = vmatpush.bf16.msra.mxu0 %v1956
    %2522 = vmatpush.bf16.msra.mxu0 %v1923
    %2523 = vmatpush.bf16.msra.mxu0 %v1890
    %2524 = vmatpush.bf16.msra.mxu0 %v1857
    %2525 = vmatmul.bf16.gmra.mxu0 %v697
    %v2526 = vpop.f32.mrf.mxu0
    %v2527 = vadd.f32 %v991, %v2526
    %v2528 = vpop.f32.mrf.mxu0
    %2529 = vdwg.mxu0
    %2530 = vmatpush.bf16.msra.mxu0 %v2089
    %2531 = vmatpush.bf16.msra.mxu0 %v2056
    %2532 = vmatpush.bf16.msra.mxu0 %v2023
    %2533 = vmatpush.bf16.msra.mxu0 %v1990
    %2534 = vmatpush.bf16.msra.mxu0 %v1957
    %2535 = vmatpush.bf16.msra.mxu0 %v1924
    %2536 = vmatpush.bf16.msra.mxu0 %v1891
    %2537 = vmatpush.bf16.msra.mxu0 %v1858
    %2538 = vmatmul.bf16.gmra.mxu0 %v697
    %v2539 = vpop.f32.mrf.mxu0
    %v2540 = vadd.f32 %v992, %v2539
    %v2541 = vpop.f32.mrf.mxu0
    %2542 = vdwg.mxu0
    %2543 = vmatpush.bf16.msra.mxu0 %v2090
    %2544 = vmatpush.bf16.msra.mxu0 %v2057
    %2545 = vmatpush.bf16.msra.mxu0 %v2024
    %2546 = vmatpush.bf16.msra.mxu0 %v1991
    %2547 = vmatpush.bf16.msra.mxu0 %v1958
    %2548 = vmatpush.bf16.msra.mxu0 %v1925
    %2549 = vmatpush.bf16.msra.mxu0 %v1892
    %2550 = vmatpush.bf16.msra.mxu0 %v1859
    %2551 = vmatmul.bf16.gmra.mxu0 %v697
    %v2552 = vpop.f32.mrf.mxu0
    %v2553 = vadd.f32 %v993, %v2552
    %v2554 = vpop.f32.mrf.mxu0
    %2555 = vdwg.mxu0
    %2556 = vmatpush.bf16.msra.mxu0 %v2091
    %2557 = vmatpush.bf16.msra.mxu0 %v2058
    %2558 = vmatpush.bf16.msra.mxu0 %v2025
    %2559 = vmatpush.bf16.msra.mxu0 %v1992
    %2560 = vmatpush.bf16.msra.mxu0 %v1959
    %2561 = vmatpush.bf16.msra.mxu0 %v1926
    %2562 = vmatpush.bf16.msra.mxu0 %v1893
    %2563 = vmatpush.bf16.msra.mxu0 %v1860
    %2564 = vmatmul.bf16.gmra.mxu0 %v697
    %v2565 = vpop.f32.mrf.mxu0
    %v2566 = vadd.f32 %v994, %v2565
    %v2567 = vpop.f32.mrf.mxu0
    %2568 = vdwg.mxu0
    %2569 = vmatpush.bf16.msra.mxu0 %v2092
    %2570 = vmatpush.bf16.msra.mxu0 %v2059
    %2571 = vmatpush.bf16.msra.mxu0 %v2026
    %2572 = vmatpush.bf16.msra.mxu0 %v1993
    %2573 = vmatpush.bf16.msra.mxu0 %v1960
    %2574 = vmatpush.bf16.msra.mxu0 %v1927
    %2575 = vmatpush.bf16.msra.mxu0 %v1894
    %2576 = vmatpush.bf16.msra.mxu0 %v1861
    %2577 = vmatmul.bf16.gmra.mxu0 %v697
    %v2578 = vpop.f32.mrf.mxu0
    %v2579 = vadd.f32 %v995, %v2578
    %v2580 = vpop.f32.mrf.mxu0
    %2581 = vdwg.mxu0
    %2582 = vmatpush.bf16.msra.mxu0 %v2093
    %2583 = vmatpush.bf16.msra.mxu0 %v2060
    %2584 = vmatpush.bf16.msra.mxu0 %v2027
    %2585 = vmatpush.bf16.msra.mxu0 %v1994
    %2586 = vmatpush.bf16.msra.mxu0 %v1961
    %2587 = vmatpush.bf16.msra.mxu0 %v1928
    %2588 = vmatpush.bf16.msra.mxu0 %v1895
    %2589 = vmatpush.bf16.msra.mxu0 %v1862
    %2590 = vmatmul.bf16.gmra.mxu0 %v697
    %v2591 = vpop.f32.mrf.mxu0
    %v2592 = vadd.f32 %v996, %v2591
    %v2593 = vpop.f32.mrf.mxu0
    %2594 = vdwg.mxu0
    %2595 = vmatpush.bf16.msra.mxu0 %v2094
    %2596 = vmatpush.bf16.msra.mxu0 %v2061
    %2597 = vmatpush.bf16.msra.mxu0 %v2028
    %2598 = vmatpush.bf16.msra.mxu0 %v1995
    %2599 = vmatpush.bf16.msra.mxu0 %v1962
    %2600 = vmatpush.bf16.msra.mxu0 %v1929
    %2601 = vmatpush.bf16.msra.mxu0 %v1896
    %2602 = vmatpush.bf16.msra.mxu0 %v1863
    %2603 = vmatmul.bf16.gmra.mxu0 %v697
    %v2604 = vpop.f32.mrf.mxu0
    %v2605 = vadd.f32 %v997, %v2604
    %v2606 = vpop.f32.mrf.mxu0
    %2607 = vdwg.mxu0
    %2608 = vmatpush.bf16.msra.mxu0 %v2095
    %2609 = vmatpush.bf16.msra.mxu0 %v2062
    %2610 = vmatpush.bf16.msra.mxu0 %v2029
    %2611 = vmatpush.bf16.msra.mxu0 %v1996
    %2612 = vmatpush.bf16.msra.mxu0 %v1963
    %2613 = vmatpush.bf16.msra.mxu0 %v1930
    %2614 = vmatpush.bf16.msra.mxu0 %v1897
    %2615 = vmatpush.bf16.msra.mxu0 %v1864
    %2616 = vmatmul.bf16.gmra.mxu0 %v697
    %v2617 = vpop.f32.mrf.mxu0
    %v2618 = vadd.f32 %v998, %v2617
    %v2619 = vpop.f32.mrf.mxu0
    %2620 = vdwg.mxu0
    %2621 = vmatpush.bf16.msra.mxu0 %v2096
    %2622 = vmatpush.bf16.msra.mxu0 %v2063
    %2623 = vmatpush.bf16.msra.mxu0 %v2030
    %2624 = vmatpush.bf16.msra.mxu0 %v1997
    %2625 = vmatpush.bf16.msra.mxu0 %v1964
    %2626 = vmatpush.bf16.msra.mxu0 %v1931
    %2627 = vmatpush.bf16.msra.mxu0 %v1898
    %2628 = vmatpush.bf16.msra.mxu0 %v1865
    %2629 = vmatmul.bf16.gmra.mxu0 %v697
    %v2630 = vpop.f32.mrf.mxu0
    %v2631 = vadd.f32 %v999, %v2630
    %v2632 = vpop.f32.mrf.mxu0
    %2633 = vdwg.mxu0
    %2634 = vmatpush.bf16.msra.mxu0 %v2097
    %2635 = vmatpush.bf16.msra.mxu0 %v2064
    %2636 = vmatpush.bf16.msra.mxu0 %v2031
    %2637 = vmatpush.bf16.msra.mxu0 %v1998
    %2638 = vmatpush.bf16.msra.mxu0 %v1965
    %2639 = vmatpush.bf16.msra.mxu0 %v1932
    %2640 = vmatpush.bf16.msra.mxu0 %v1899
    %2641 = vmatpush.bf16.msra.mxu0 %v1866
    %2642 = vmatmul.bf16.gmra.mxu0 %v697
    %v2643 = vpop.f32.mrf.mxu0
    %v2644 = vadd.f32 %v1000, %v2643
    %v2645 = vpop.f32.mrf.mxu0
    %2646 = vdwg.mxu0
    %2647 = vmatpush.bf16.msra.mxu0 %v2098
    %2648 = vmatpush.bf16.msra.mxu0 %v2065
    %2649 = vmatpush.bf16.msra.mxu0 %v2032
    %2650 = vmatpush.bf16.msra.mxu0 %v1999
    %2651 = vmatpush.bf16.msra.mxu0 %v1966
    %2652 = vmatpush.bf16.msra.mxu0 %v1933
    %2653 = vmatpush.bf16.msra.mxu0 %v1900
    %2654 = vmatpush.bf16.msra.mxu0 %v1867
    %2655 = vmatmul.bf16.gmra.mxu0 %v697
    %v2656 = vpop.f32.mrf.mxu0
    %v2657 = vadd.f32 %v1001, %v2656
    %v2658 = vpop.f32.mrf.mxu0
    %2659 = vdwg.mxu0
    %2660 = vmatpush.bf16.msra.mxu0 %v2099
    %2661 = vmatpush.bf16.msra.mxu0 %v2066
    %2662 = vmatpush.bf16.msra.mxu0 %v2033
    %2663 = vmatpush.bf16.msra.mxu0 %v2000
    %2664 = vmatpush.bf16.msra.mxu0 %v1967
    %2665 = vmatpush.bf16.msra.mxu0 %v1934
    %2666 = vmatpush.bf16.msra.mxu0 %v1901
    %2667 = vmatpush.bf16.msra.mxu0 %v1868
    %2668 = vmatmul.bf16.gmra.mxu0 %v697
    %v2669 = vpop.f32.mrf.mxu0
    %v2670 = vadd.f32 %v1002, %v2669
    %v2671 = vpop.f32.mrf.mxu0
    %2672 = vdwg.mxu0
    %2673 = vmatpush.bf16.msra.mxu0 %v2100
    %2674 = vmatpush.bf16.msra.mxu0 %v2067
    %2675 = vmatpush.bf16.msra.mxu0 %v2034
    %2676 = vmatpush.bf16.msra.mxu0 %v2001
    %2677 = vmatpush.bf16.msra.mxu0 %v1968
    %2678 = vmatpush.bf16.msra.mxu0 %v1935
    %2679 = vmatpush.bf16.msra.mxu0 %v1902
    %2680 = vmatpush.bf16.msra.mxu0 %v1869
    %2681 = vmatmul.bf16.gmra.mxu0 %v697
    %v2682 = vpop.f32.mrf.mxu0
    %v2683 = vadd.f32 %v1003, %v2682
    %v2684 = vpop.f32.mrf.mxu0
    %2685 = vdwg.mxu0
    %2686 = vmatpush.bf16.msra.mxu0 %v2101
    %2687 = vmatpush.bf16.msra.mxu0 %v2068
    %2688 = vmatpush.bf16.msra.mxu0 %v2035
    %2689 = vmatpush.bf16.msra.mxu0 %v2002
    %2690 = vmatpush.bf16.msra.mxu0 %v1969
    %2691 = vmatpush.bf16.msra.mxu0 %v1936
    %2692 = vmatpush.bf16.msra.mxu0 %v1903
    %2693 = vmatpush.bf16.msra.mxu0 %v1870
    %2694 = vmatmul.bf16.gmra.mxu0 %v697
    %v2695 = vpop.f32.mrf.mxu0
    %v2696 = vadd.f32 %v1004, %v2695
    %v2697 = vpop.f32.mrf.mxu0
    %2698 = vdwg.mxu0
    %2699 = vmatpush.bf16.msra.mxu0 %v2102
    %2700 = vmatpush.bf16.msra.mxu0 %v2069
    %2701 = vmatpush.bf16.msra.mxu0 %v2036
    %2702 = vmatpush.bf16.msra.mxu0 %v2003
    %2703 = vmatpush.bf16.msra.mxu0 %v1970
    %2704 = vmatpush.bf16.msra.mxu0 %v1937
    %2705 = vmatpush.bf16.msra.mxu0 %v1904
    %2706 = vmatpush.bf16.msra.mxu0 %v1871
    %2707 = vmatmul.bf16.gmra.mxu0 %v697
    %v2708 = vpop.f32.mrf.mxu0
    %v2709 = vadd.f32 %v1005, %v2708
    %v2710 = vpop.f32.mrf.mxu0
    %2711 = vdwg.mxu0
    %2712 = vmatpush.bf16.msra.mxu0 %v2103
    %2713 = vmatpush.bf16.msra.mxu0 %v2070
    %2714 = vmatpush.bf16.msra.mxu0 %v2037
    %2715 = vmatpush.bf16.msra.mxu0 %v2004
    %2716 = vmatpush.bf16.msra.mxu0 %v1971
    %2717 = vmatpush.bf16.msra.mxu0 %v1938
    %2718 = vmatpush.bf16.msra.mxu0 %v1905
    %2719 = vmatpush.bf16.msra.mxu0 %v1872
    %2720 = vmatmul.bf16.gmra.mxu0 %v697
    %v2721 = vpop.f32.mrf.mxu0
    %v2722 = vadd.f32 %v1006, %v2721
    %v2723 = vpop.f32.mrf.mxu0
    %2724 = vdwg.mxu0
    %2725 = vmatpush.bf16.msra.mxu0 %v2104
    %2726 = vmatpush.bf16.msra.mxu0 %v2071
    %2727 = vmatpush.bf16.msra.mxu0 %v2038
    %2728 = vmatpush.bf16.msra.mxu0 %v2005
    %2729 = vmatpush.bf16.msra.mxu0 %v1972
    %2730 = vmatpush.bf16.msra.mxu0 %v1939
    %2731 = vmatpush.bf16.msra.mxu0 %v1906
    %2732 = vmatpush.bf16.msra.mxu0 %v1873
    %2733 = vmatmul.bf16.gmra.mxu0 %v697
    %v2734 = vpop.f32.mrf.mxu0
    %v2735 = vadd.f32 %v1007, %v2734
    %v2736 = vpop.f32.mrf.mxu0
    %2737 = vdwg.mxu0
    %2738 = vmatpush.bf16.msra.mxu0 %v2105
    %2739 = vmatpush.bf16.msra.mxu0 %v2072
    %2740 = vmatpush.bf16.msra.mxu0 %v2039
    %2741 = vmatpush.bf16.msra.mxu0 %v2006
    %2742 = vmatpush.bf16.msra.mxu0 %v1973
    %2743 = vmatpush.bf16.msra.mxu0 %v1940
    %2744 = vmatpush.bf16.msra.mxu0 %v1907
    %2745 = vmatpush.bf16.msra.mxu0 %v1874
    %2746 = vmatmul.bf16.gmra.mxu0 %v697
    %v2747 = vpop.f32.mrf.mxu0
    %v2748 = vadd.f32 %v1008, %v2747
    %v2749 = vpop.f32.mrf.mxu0
    %2750 = vdwg.mxu0
    %2751 = vmatpush.bf16.msra.mxu0 %v2106
    %2752 = vmatpush.bf16.msra.mxu0 %v2073
    %2753 = vmatpush.bf16.msra.mxu0 %v2040
    %2754 = vmatpush.bf16.msra.mxu0 %v2007
    %2755 = vmatpush.bf16.msra.mxu0 %v1974
    %2756 = vmatpush.bf16.msra.mxu0 %v1941
    %2757 = vmatpush.bf16.msra.mxu0 %v1908
    %2758 = vmatpush.bf16.msra.mxu0 %v1875
    %2759 = vmatmul.bf16.gmra.mxu0 %v697
    %v2760 = vpop.f32.mrf.mxu0
    %v2761 = vadd.f32 %v1009, %v2760
    %v2762 = vpop.f32.mrf.mxu0
    %2763 = vdwg.mxu0
    %2764 = vmatpush.bf16.msra.mxu0 %v2107
    %2765 = vmatpush.bf16.msra.mxu0 %v2074
    %2766 = vmatpush.bf16.msra.mxu0 %v2041
    %2767 = vmatpush.bf16.msra.mxu0 %v2008
    %2768 = vmatpush.bf16.msra.mxu0 %v1975
    %2769 = vmatpush.bf16.msra.mxu0 %v1942
    %2770 = vmatpush.bf16.msra.mxu0 %v1909
    %2771 = vmatpush.bf16.msra.mxu0 %v1876
    %2772 = vmatmul.bf16.gmra.mxu0 %v697
    %v2773 = vpop.f32.mrf.mxu0
    %v2774 = vadd.f32 %v1010, %v2773
    %v2775 = vpop.f32.mrf.mxu0
    %2776 = vdwg.mxu0
    %2777 = vmatpush.bf16.msra.mxu0 %v2108
    %2778 = vmatpush.bf16.msra.mxu0 %v2075
    %2779 = vmatpush.bf16.msra.mxu0 %v2042
    %2780 = vmatpush.bf16.msra.mxu0 %v2009
    %2781 = vmatpush.bf16.msra.mxu0 %v1976
    %2782 = vmatpush.bf16.msra.mxu0 %v1943
    %2783 = vmatpush.bf16.msra.mxu0 %v1910
    %2784 = vmatpush.bf16.msra.mxu0 %v1877
    %2785 = vmatmul.bf16.gmra.mxu0 %v697
    %v2786 = vpop.f32.mrf.mxu0
    %v2787 = vadd.f32 %v1011, %v2786
    %v2788 = vpop.f32.mrf.mxu0
    %2789 = vdwg.mxu0
    %2790 = vmatpush.bf16.msra.mxu0 %v2109
    %2791 = vmatpush.bf16.msra.mxu0 %v2076
    %2792 = vmatpush.bf16.msra.mxu0 %v2043
    %2793 = vmatpush.bf16.msra.mxu0 %v2010
    %2794 = vmatpush.bf16.msra.mxu0 %v1977
    %2795 = vmatpush.bf16.msra.mxu0 %v1944
    %2796 = vmatpush.bf16.msra.mxu0 %v1911
    %2797 = vmatpush.bf16.msra.mxu0 %v1878
    %2798 = vmatmul.bf16.gmra.mxu0 %v697
    %v2799 = vpop.f32.mrf.mxu0
    %v2800 = vadd.f32 %v1012, %v2799
    %v2801 = vpop.f32.mrf.mxu0
    %2802 = vdwg.mxu0
    %2803 = vst [vmem:[#allocation2] sm:$0xff] %v2384
    %2804 = vst [vmem:[#allocation2 + $0x8] sm:$0xff] %v2397
    %2805 = vst [vmem:[#allocation2 + $0x10] sm:$0xff] %v2410
    %2806 = vst [vmem:[#allocation2 + $0x18] sm:$0xff] %v2423
    %2807 = vst [vmem:[#allocation2 + $0x20] sm:$0xff] %v2436
    %2808 = vst [vmem:[#allocation2 + $0x28] sm:$0xff] %v2449
    %2809 = vst [vmem:[#allocation2 + $0x30] sm:$0xff] %v2462
    %2810 = vst [vmem:[#allocation2 + $0x38] sm:$0xff] %v2475
    %2811 = vst [vmem:[#allocation2 + $0x40] sm:$0xff] %v2488
    %2812 = vst [vmem:[#allocation2 + $0x48] sm:$0xff] %v2501
    %2813 = vst [vmem:[#allocation2 + $0x50] sm:$0xff] %v2514
    %2814 = vst [vmem:[#allocation2 + $0x58] sm:$0xff] %v2527
    %2815 = vst [vmem:[#allocation2 + $0x60] sm:$0xff] %v2540
    %2816 = vst [vmem:[#allocation2 + $0x68] sm:$0xff] %v2553
    %2817 = vst [vmem:[#allocation2 + $0x70] sm:$0xff] %v2566
    %2818 = vst [vmem:[#allocation2 + $0x78] sm:$0xff] %v2579
    %2819 = vst [vmem:[#allocation2 + $0x80] sm:$0xff] %v2592
    %2820 = vst [vmem:[#allocation2 + $0x88] sm:$0xff] %v2605
    %2821 = vst [vmem:[#allocation2 + $0x90] sm:$0xff] %v2618
    %2822 = vst [vmem:[#allocation2 + $0x98] sm:$0xff] %v2631
    %2823 = vst [vmem:[#allocation2 + $0xa0] sm:$0xff] %v2644
    %2824 = vst [vmem:[#allocation2 + $0xa8] sm:$0xff] %v2657
    %2825 = vst [vmem:[#allocation2 + $0xb0] sm:$0xff] %v2670
    %2826 = vst [vmem:[#allocation2 + $0xb8] sm:$0xff] %v2683
    %2827 = vst [vmem:[#allocation2 + $0xc0] sm:$0xff] %v2696
    %2828 = vst [vmem:[#allocation2 + $0xc8] sm:$0xff] %v2709
    %2829 = vst [vmem:[#allocation2 + $0xd0] sm:$0xff] %v2722
    %2830 = vst [vmem:[#allocation2 + $0xd8] sm:$0xff] %v2735
    %2831 = vst [vmem:[#allocation2 + $0xe0] sm:$0xff] %v2748
    %2832 = vst [vmem:[#allocation2 + $0xe8] sm:$0xff] %v2761
    %2833 = vst [vmem:[#allocation2 + $0xf0] sm:$0xff] %v2774
    %2834 = vst [vmem:[#allocation2 + $0xf8] sm:$0xff] %v2787
    %vm2835 = vcmask 113664
    %2836 = vst.msk [vmem:[#allocation2 + $0x100] sm:$0xff] %vm2835, %v2800
    // Predicated region
    $region30: #{tpu_custom_call.1} parent=1 // pred_check
      _
    $region31: #{tpu_custom_call.1} parent=1 // pred_check_branch
      %2838 = sbr.rel (0) target = $region33
    $region32: #{tpu_custom_call.1} parent=1 // pred_region
      %2840 = vsyncadd [#allocation3], 0
      %s2842 = sshll.u32 [#allocation2], 4
      %s2843 = int_to_ptr.vmem [resolvable:$true] %s2842
      %s2844 = sshll.u32 %s7, 4
      %s2845 = int_to_ptr.hbm [resolvable:$true] %s2844
      %2847 = dma.vmem_to_hbm [thread:$0]  %s2843, 4224, %s2845, [#allocation3]
    $region33: #{tpu_custom_call.1} parent=1 // pred_fallthru
      _
    // Predicated region
    $region34: #{tpu_custom_call.1} parent=1 // pred_check
      _
    $region35: #{tpu_custom_call.1} parent=1 // pred_check_branch
      %2849 = sbr.rel (0) target = $region37
    $region36: #{tpu_custom_call.1} parent=1 // pred_region
      %2851 = dma.done [#allocation3], 4224
    $region37: #{tpu_custom_call.1} parent=1 // pred_fallthru
      _
    %2852 = vsyncpa [#allocation3], 1

</llo_original>
